<compile_context>
chip_gen: v5e
topology: v5e:2x2
jax: 0.10.0
libtpu: 0.0.40
codegen_flags: <defaults>
</compile_context>

<pallas_src>
import jax
import jax.numpy as jnp
from jax import lax
from jax.experimental import pallas as pl
from jax.experimental.pallas import tpu as pltpu


def textencoder_kernel(
    x_ref,      # (T, B)       int32 token ids
    emb_ref,    # (T, B, E)    bf16 embedded tokens (gathered in wrapper)
    wcat_ref,   # (E, 6H)      bf16 fused input weights [fwd r|z|n | bwd r|z|n]
    bcat_ref,   # (1, 6H)      f32  fused input-side biases (b_ih + b_hh for r,z; b_ih for n)
    wbd_ref,    # (2H, 6H)     bf16 block-diag hidden weights (fwd top-left, bwd bottom-right)
    bhn_ref,    # (1, 2H)      f32  b_hh of the n gate [fwd | bwd]
    hs_ref,     # OUT (T, B, 2H) f32  [fwd | bwd]
    mask_ref,   # OUT (T, B)     f32
    xc_ref,     # scratch (T, B, 6H) f32  hoisted input projections, both directions
):
    T, B = x_ref.shape
    E = emb_ref.shape[-1]
    H2 = wbd_ref.shape[0]
    H = H2 // 2
    G = 3 * H
    G2 = 6 * H

    # mask = (x != 0).float()
    mask_ref[...] = (x_ref[...] != 0).astype(jnp.float32)

    # ---- hoisted fused input projection: ONE big MXU matmul for both directions ----
    emb2d = emb_ref[...].reshape(T * B, E)                         # bf16, layout no-op (B % 8 == 0)
    xc_ref[...] = (
        jnp.dot(emb2d, wcat_ref[...], preferred_element_type=jnp.float32)
        + bcat_ref[...]
    ).reshape(T, B, G2)

    # Hoisted loads (used every step).
    wbd = wbd_ref[...]                  # (2H, 6H) bf16
    bhn = bhn_ref[...]                  # (1, 2H)  f32
    bhn_f = bhn[:, 0:H]
    bhn_b = bhn[:, H:H2]

    # ---- merged fwd/bwd masked recurrence (independent chains interleave) ----
    def body(i, carry):
        h_f, h_b = carry                                # (B, H) f32 each
        tb = T - 1 - i

        m_f = mask_ref[i][:, None]                      # (B, 1)
        m_b = mask_ref[tb][:, None]

        x_f = xc_ref[i, :, 0:G]                         # (B, 3H) f32, fwd gates at t = i
        x_b = xc_ref[tb, :, G:G2]                       # (B, 3H) f32, bwd gates at t = tb

        # One block-diagonal hidden matmul for both directions: 1 MXU push / step.
        h_cat = jnp.concatenate([h_f, h_b], axis=-1).astype(jnp.bfloat16)     # (B, 2H)
        hp = jnp.dot(h_cat, wbd, preferred_element_type=jnp.float32)          # (B, 6H) f32

        # Fused r|z sigmoid per direction (contiguous lanes), tanh for n.
        g_f = jax.nn.sigmoid(x_f[:, 0:2 * H] + hp[:, 0:2 * H])
        g_b = jax.nn.sigmoid(x_b[:, 0:2 * H] + hp[:, G:G + 2 * H])
        r_f, z_f = g_f[:, 0:H], g_f[:, H:2 * H]
        r_b, z_b = g_b[:, 0:H], g_b[:, H:2 * H]
        n_f = jnp.tanh(x_f[:, 2 * H:G] + r_f * (hp[:, 2 * H:G] + bhn_f))
        n_b = jnp.tanh(x_b[:, 2 * H:G] + r_b * (hp[:, G + 2 * H:G2] + bhn_b))

        hf_new = (1.0 - z_f) * n_f + z_f * h_f
        hb_new = (1.0 - z_b) * n_b + z_b * h_b

        # Direct per-step output stores: no state scratch, no final concat pass.
        hs_ref[i, :, 0:H] = hf_new * m_f                # padded steps -> 0
        hs_ref[tb, :, H:H2] = hb_new * m_b

        # Freeze carried state on padded steps.
        h_f = m_f * hf_new + (1.0 - m_f) * h_f
        h_b = m_b * hb_new + (1.0 - m_b) * h_b
        return (h_f, h_b)

    h0 = jnp.zeros((B, H), jnp.float32)
    unroll = T if T <= 32 else 8                        # bounded unroll for realistic T
    lax.fori_loop(0, T, body, (h0, h0), unroll=unroll)


def text_encoder_forward(x, params):
    """Pallas implementation of TextEncoder.forward (GRU, 1 layer, bidirectional).

    x: (T, B) int32 token ids (0 = pad, trailing padding per sample).
    Returns (hs, mask): hs (T, B, 2*H) f32, mask (T, B) f32.
    """
    T, B = x.shape
    E = params["emb_table"].shape[-1]
    H = params["w_hh_fwd"].shape[-1]

    # Pad batch to a multiple of 8 (sublane-dense (T*B, E) reshape & per-step vregs).
    B_pad = ((B + 7) // 8) * 8
    if B_pad != B:
        x = jnp.pad(x, ((0, 0), (0, B_pad - B)))        # pad id 0 -> mask 0, hs 0

    # Embedding gather stays in the wrapper (vocab table never enters VMEM).
    # bf16 MXU inputs; accumulation stays f32 inside the kernel.
    emb = jnp.take(params["emb_table"], x, axis=0).astype(jnp.bfloat16)   # (T, B_pad, E)

    def fuse(wi, wh, bi, bh):
        # PyTorch GRU gate order: r, z, n.
        w_ih = jnp.concatenate([wi[0], wi[1], wi[2]], axis=-1)                   # (E, 3H)
        w_hh = jnp.concatenate([wh[0], wh[1], wh[2]], axis=-1)                   # (H, 3H)
        b_x = jnp.concatenate([bi[0] + bh[0], bi[1] + bh[1], bi[2]], axis=-1)    # (1, 3H)
        return w_ih, w_hh, b_x, bh[2]                                            # bh_n: (1, H)

    wif, whf, bxf, bhnf = fuse(params["w_ih_fwd"], params["w_hh_fwd"],
                               params["b_ih_fwd"], params["b_hh_fwd"])
    wib, whb, bxb, bhnb = fuse(params["w_ih_bwd"], params["w_hh_bwd"],
                               params["b_ih_bwd"], params["b_hh_bwd"])

    # Fused input weights / biases for both directions.
    w_cat = jnp.concatenate([wif, wib], axis=-1).astype(jnp.bfloat16)      # (E, 6H)
    b_cat = jnp.concatenate([bxf, bxb], axis=-1).astype(jnp.float32)       # (1, 6H)
    bhn_cat = jnp.concatenate([bhnf, bhnb], axis=-1).astype(jnp.float32)   # (1, 2H)

    # Block-diagonal hidden weights: fwd top-left, bwd bottom-right.
    w_bd = jnp.zeros((2 * H, 6 * H), jnp.float32)
    w_bd = w_bd.at[:H, :3 * H].set(whf).at[H:, 3 * H:].set(whb)
    w_bd = w_bd.astype(jnp.bfloat16)

    # Explicit scoped-VMEM limit (everything is resident at these shapes).
    vmem_bytes = (
        T * B_pad * E * 2                   # emb (bf16)
        + T * B_pad * 6 * H * 4             # xc scratch (f32)
        + T * B_pad * 2 * H * 4             # hs (f32)
        + T * B_pad * (4 + 4)               # x ids + mask
        + (E * 6 * H + 2 * H * 6 * H) * 2   # fused weights (bf16)
        + 8 * H * 4                         # biases
    )
    vmem_limit = int(min(64 << 20, max(32 << 20, 2 * vmem_bytes)))

    vmem = pl.BlockSpec(memory_space=pltpu.MemorySpace.VMEM)
    hs, mask = pl.pallas_call(
        textencoder_kernel,
        out_shape=(
            jax.ShapeDtypeStruct((T, B_pad, 2 * H), jnp.float32),
            jax.ShapeDtypeStruct((T, B_pad), jnp.float32),
        ),
        in_specs=[vmem] * 6,
        out_specs=(vmem, vmem),
        scratch_shapes=[
            pltpu.VMEM((T, B_pad, 6 * H), jnp.float32),   # fused input projection
        ],
        compiler_params=pltpu.CompilerParams(vmem_limit_bytes=vmem_limit),
    )(x, emb, w_cat, b_cat, w_bd, bhn_cat)

    if B_pad != B:
        hs = hs[:, :B]
        mask = mask[:, :B]
    return hs, mask


# ---------------------------- pure-JAX reference ----------------------------
def _ref_forward(x, params):
    T, B = x.shape
    H = params["w_hh_fwd"].shape[-1]
    mask = (x != 0).astype(jnp.float32)
    emb = params["emb_table"][x]  # (T, B, E)

    def cell(x_t, h, wi, wh, bi, bh):
        r = jax.nn.sigmoid(x_t @ wi[0] + bi[0] + h @ wh[0] + bh[0])
        z = jax.nn.sigmoid(x_t @ wi[1] + bi[1] + h @ wh[1] + bh[1])
        n = jnp.tanh(x_t @ wi[2] + bi[2] + r * (h @ wh[2] + bh[2]))
        return (1.0 - z) * n + z * h

    hsf = []
    h = jnp.zeros((B, H), jnp.float32)
    for t in range(T):
        m = mask[t][:, None]
        hn = cell(emb[t], h, params["w_ih_fwd"], params["w_hh_fwd"],
                  params["b_ih_fwd"], params["b_hh_fwd"])
        hsf.append(hn * m)
        h = m * hn + (1.0 - m) * h

    hsb = [None] * T
    h = jnp.zeros((B, H), jnp.float32)
    for t in range(T - 1, -1, -1):
        m = mask[t][:, None]
        hn = cell(emb[t], h, params["w_ih_bwd"], params["w_hh_bwd"],
                  params["b_ih_bwd"], params["b_hh_bwd"])
        hsb[t] = hn * m
        h = m * hn + (1.0 - m) * h

    hs = jnp.concatenate([jnp.stack(hsf), jnp.stack(hsb)], axis=-1)
    return hs, mask


if __name__ == "__main__":
    # Small config consistent with the module: T=12 timesteps, B=8 samples,
    # n_vocab=32, input_size(E)=32, hidden_size(H)=32, bidirectional GRU.
    T, B, V, E, H = 12, 8, 32, 32, 32

    key = jax.random.PRNGKey(0)
    keys = jax.random.split(key, 12)

    # Token batch with trailing padding (as required by pack_padded_sequence).
    lens = jax.random.randint(keys[0], (B,), 3, T + 1)
    toks = jax.random.randint(keys[1], (T, B), 1, V)
    x = jnp.where(jnp.arange(T)[:, None] < lens[None, :], toks, 0).astype(jnp.int32)

    scale = 1.0 / jnp.sqrt(jnp.float32(H))
    emb_table = (0.1 * jax.random.normal(keys[2], (V, E), jnp.float32)).at[0].set(0.0)

    def uni(k, shape):
        return jax.random.uniform(k, shape, jnp.float32, -scale, scale)

    params = {
        "emb_table": emb_table,
        "w_ih_fwd": uni(keys[3], (3, E, H)),
        "w_hh_fwd": uni(keys[4], (3, H, H)),
        "b_ih_fwd": uni(keys[5], (3, 1, H)),
        "b_hh_fwd": uni(keys[6], (3, 1, H)),
        "w_ih_bwd": uni(keys[7], (3, E, H)),
        "w_hh_bwd": uni(keys[8], (3, H, H)),
        "b_ih_bwd": uni(keys[9], (3, 1, H)),
        "b_hh_bwd": uni(keys[10], (3, 1, H)),
    }

    hs, mask = jax.jit(text_encoder_forward)(x, params)
    jax.block_until_ready((hs, mask))

    hs_ref, mask_ref = _ref_forward(x, params)
    assert hs.shape == (T, B, 2 * H) and mask.shape == (T, B)
    assert jnp.allclose(mask, mask_ref)
    # bf16 MXU inputs (f32 accumulation) -> loosened parity tolerance vs f32 reference.
    assert jnp.allclose(hs, hs_ref, atol=2e-2, rtol=2e-2)

    print("KERNEL_OK")
</pallas_src>

<mosaic_0001>
module attributes {stable_mosaic.version = 11 : i64} {
  func.func @textencoder_kernel(%arg0: memref<12x8xi32, #tpu.memory_space<vmem>>, %arg1: memref<12x8x32xbf16, #tpu.memory_space<vmem>>, %arg2: memref<32x192xbf16, #tpu.memory_space<vmem>>, %arg3: memref<1x192xf32, #tpu.memory_space<vmem>>, %arg4: memref<64x192xbf16, #tpu.memory_space<vmem>>, %arg5: memref<1x64xf32, #tpu.memory_space<vmem>>, %arg6: memref<12x8x64xf32, #tpu.memory_space<vmem>>, %arg7: memref<12x8xf32, #tpu.memory_space<vmem>>, %arg8: memref<12x8x192xf32, #tpu.memory_space<vmem>>) attributes {dimension_semantics = [], scalar_prefetch = 0 : i64, scratch_operands = 1 : i64, tpu.core_type = #tpu.core_type<tc>} {
    %c0 = arith.constant 0 : index
    %c0_0 = arith.constant 0 : index
    %0 = vector.load %arg0[%c0, %c0_0] : memref<12x8xi32, #tpu.memory_space<vmem>>, vector<12x8xi32>
    %c0_i32 = arith.constant 0 : i32
    %1 = vector.broadcast %c0_i32 : i32 to vector<12x8xi32>
    %2 = arith.cmpi ne, %0, %1 : vector<12x8xi32>
    %3 = arith.extui %2 : vector<12x8xi1> to vector<12x8xi32>
    %4 = arith.sitofp %3 : vector<12x8xi32> to vector<12x8xf32>
    %c0_1 = arith.constant 0 : index
    %c0_2 = arith.constant 0 : index
    %5 = vector.load %arg7[%c0_1, %c0_2] : memref<12x8xf32, #tpu.memory_space<vmem>>, vector<12x8xf32>
    tpu.vector_store %arg7[%c0_1, %c0_2], %4 {strides = array<i32>} : memref<12x8xf32, #tpu.memory_space<vmem>>, vector<12x8xf32>,
    %c0_3 = arith.constant 0 : index
    %c0_4 = arith.constant 0 : index
    %c0_5 = arith.constant 0 : index
    %6 = vector.load %arg1[%c0_3, %c0_4, %c0_5] : memref<12x8x32xbf16, #tpu.memory_space<vmem>>, vector<12x8x32xbf16>
    %7 = vector.shape_cast %6 : vector<12x8x32xbf16> to vector<96x32xbf16>
    %c0_6 = arith.constant 0 : index
    %c0_7 = arith.constant 0 : index
    %8 = vector.load %arg2[%c0_6, %c0_7] : memref<32x192xbf16, #tpu.memory_space<vmem>>, vector<32x192xbf16>
    %cst = arith.constant dense<0.000000e+00> : vector<96x192xf32>
    %9 = tpu.matmul %7, %8, %cst {dimension_numbers = #tpu.dot_dimension_numbers<[1], [0], [0], [1], [0, 0, 1, 1], [], []>} : vector<96x32xbf16>, vector<32x192xbf16>, vector<96x192xf32> -> vector<96x192xf32>
    %c0_8 = arith.constant 0 : index
    %c0_9 = arith.constant 0 : index
    %10 = vector.load %arg3[%c0_8, %c0_9] : memref<1x192xf32, #tpu.memory_space<vmem>>, vector<1x192xf32>
    %11 = vector.broadcast %10 : vector<1x192xf32> to vector<96x192xf32>
    %12 = arith.addf %9, %11 : vector<96x192xf32>
    %13 = vector.shape_cast %12 : vector<96x192xf32> to vector<12x8x192xf32>
    %c0_10 = arith.constant 0 : index
    %c0_11 = arith.constant 0 : index
    %c0_12 = arith.constant 0 : index
    %14 = vector.load %arg8[%c0_10, %c0_11, %c0_12] : memref<12x8x192xf32, #tpu.memory_space<vmem>>, vector<12x8x192xf32>
    tpu.vector_store %arg8[%c0_10, %c0_11, %c0_12], %13 {strides = array<i32>} : memref<12x8x192xf32, #tpu.memory_space<vmem>>, vector<12x8x192xf32>,
    %c0_13 = arith.constant 0 : index
    %c0_14 = arith.constant 0 : index
    %15 = vector.load %arg4[%c0_13, %c0_14] : memref<64x192xbf16, #tpu.memory_space<vmem>>, vector<64x192xbf16>
    %c0_15 = arith.constant 0 : index
    %c0_16 = arith.constant 0 : index
    %16 = vector.load %arg5[%c0_15, %c0_16] : memref<1x64xf32, #tpu.memory_space<vmem>>, vector<1x64xf32>
    %17 = vector.extract_strided_slice %16 {offsets = [0, 0], sizes = [1, 32], strides = [1, 1]} : vector<1x64xf32> to vector<1x32xf32>
    %18 = vector.extract_strided_slice %16 {offsets = [0, 32], sizes = [1, 32], strides = [1, 1]} : vector<1x64xf32> to vector<1x32xf32>
    %cst_17 = arith.constant 0.000000e+00 : f32
    %19 = vector.broadcast %cst_17 : f32 to vector<8x32xf32>
    %c0_i32_18 = arith.constant 0 : i32
    %c11_i32 = arith.constant 11 : i32
    %20 = arith.subi %c11_i32, %c0_i32_18 : i32
    %21 = arith.index_cast %c0_i32_18 : i32 to index
    %c0_19 = arith.constant 0 : index
    %22 = vector.load %arg7[%21, %c0_19] : memref<12x8xf32, #tpu.memory_space<vmem>>, vector<1x8xf32>
    %23 = vector.shape_cast %22 : vector<1x8xf32> to vector<8xf32>
    %24 = vector.shape_cast %23 : vector<8xf32> to vector<8x1xf32>
    %25 = arith.index_cast %20 : i32 to index
    %c0_20 = arith.constant 0 : index
    %26 = vector.load %arg7[%25, %c0_20] : memref<12x8xf32, #tpu.memory_space<vmem>>, vector<1x8xf32>
    %27 = vector.shape_cast %26 : vector<1x8xf32> to vector<8xf32>
    %28 = vector.shape_cast %27 : vector<8xf32> to vector<8x1xf32>
    %29 = arith.index_cast %c0_i32_18 : i32 to index
    %c0_21 = arith.constant 0 : index
    %c0_22 = arith.constant 0 : index
    %30 = vector.load %arg8[%29, %c0_21, %c0_22] : memref<12x8x192xf32, #tpu.memory_space<vmem>>, vector<1x8x96xf32>
    %31 = vector.shape_cast %30 : vector<1x8x96xf32> to vector<8x96xf32>
    %32 = arith.index_cast %20 : i32 to index
    %c0_23 = arith.constant 0 : index
    %c96 = arith.constant 96 : index
    %33 = vector.load %arg8[%32, %c0_23, %c96] : memref<12x8x192xf32, #tpu.memory_space<vmem>>, vector<1x8x96xf32>
    %34 = vector.shape_cast %33 : vector<1x8x96xf32> to vector<8x96xf32>
    %35 = tpu.concatenate %19, %19 in 1 : vector<8x32xf32>, vector<8x32xf32> -> vector<8x64xf32>
    %36 = arith.truncf %35 : vector<8x64xf32> to vector<8x64xbf16>
    %cst_24 = arith.constant dense<0.000000e+00> : vector<8x192xf32>
    %37 = tpu.matmul %36, %15, %cst_24 {dimension_numbers = #tpu.dot_dimension_numbers<[1], [0], [0], [1], [0, 0, 1, 1], [], []>} : vector<8x64xbf16>, vector<64x192xbf16>, vector<8x192xf32> -> vector<8x192xf32>
    %38 = vector.extract_strided_slice %31 {offsets = [0, 0], sizes = [8, 64], strides = [1, 1]} : vector<8x96xf32> to vector<8x64xf32>
    %39 = vector.extract_strided_slice %37 {offsets = [0, 0], sizes = [8, 64], strides = [1, 1]} : vector<8x192xf32> to vector<8x64xf32>
    %40 = arith.addf %38, %39 : vector<8x64xf32>
    %41 = arith.negf %40 : vector<8x64xf32>
    %42 = math.exp %41 : vector<8x64xf32>
    %cst_25 = arith.constant 1.000000e+00 : f32
    %43 = vector.broadcast %cst_25 : f32 to vector<8x64xf32>
    %44 = arith.addf %43, %42 : vector<8x64xf32>
    %45 = arith.divf %43, %44 : vector<8x64xf32>
    %46 = vector.extract_strided_slice %34 {offsets = [0, 0], sizes = [8, 64], strides = [1, 1]} : vector<8x96xf32> to vector<8x64xf32>
    %47 = vector.extract_strided_slice %37 {offsets = [0, 96], sizes = [8, 64], strides = [1, 1]} : vector<8x192xf32> to vector<8x64xf32>
    %48 = arith.addf %46, %47 : vector<8x64xf32>
    %49 = arith.negf %48 : vector<8x64xf32>
    %50 = math.exp %49 : vector<8x64xf32>
    %cst_26 = arith.constant 1.000000e+00 : f32
    %51 = vector.broadcast %cst_26 : f32 to vector<8x64xf32>
    %52 = arith.addf %51, %50 : vector<8x64xf32>
    %53 = arith.divf %51, %52 : vector<8x64xf32>
    %54 = vector.extract_strided_slice %45 {offsets = [0, 0], sizes = [8, 32], strides = [1, 1]} : vector<8x64xf32> to vector<8x32xf32>
    %55 = vector.extract_strided_slice %45 {offsets = [0, 32], sizes = [8, 32], strides = [1, 1]} : vector<8x64xf32> to vector<8x32xf32>
    %56 = vector.extract_strided_slice %53 {offsets = [0, 0], sizes = [8, 32], strides = [1, 1]} : vector<8x64xf32> to vector<8x32xf32>
    %57 = vector.extract_strided_slice %53 {offsets = [0, 32], sizes = [8, 32], strides = [1, 1]} : vector<8x64xf32> to vector<8x32xf32>
    %58 = vector.extract_strided_slice %31 {offsets = [0, 64], sizes = [8, 32], strides = [1, 1]} : vector<8x96xf32> to vector<8x32xf32>
    %59 = vector.extract_strided_slice %37 {offsets = [0, 64], sizes = [8, 32], strides = [1, 1]} : vector<8x192xf32> to vector<8x32xf32>
    %60 = vector.broadcast %17 : vector<1x32xf32> to vector<8x32xf32>
    %61 = arith.addf %59, %60 : vector<8x32xf32>
    %62 = arith.mulf %54, %61 : vector<8x32xf32>
    %63 = arith.addf %58, %62 : vector<8x32xf32>
    %64 = math.tanh %63 : vector<8x32xf32>
    %65 = vector.extract_strided_slice %34 {offsets = [0, 64], sizes = [8, 32], strides = [1, 1]} : vector<8x96xf32> to vector<8x32xf32>
    %66 = vector.extract_strided_slice %37 {offsets = [0, 160], sizes = [8, 32], strides = [1, 1]} : vector<8x192xf32> to vector<8x32xf32>
    %67 = vector.broadcast %18 : vector<1x32xf32> to vector<8x32xf32>
    %68 = arith.addf %66, %67 : vector<8x32xf32>
    %69 = arith.mulf %56, %68 : vector<8x32xf32>
    %70 = arith.addf %65, %69 : vector<8x32xf32>
    %71 = math.tanh %70 : vector<8x32xf32>
    %cst_27 = arith.constant 1.000000e+00 : f32
    %72 = vector.broadcast %cst_27 : f32 to vector<8x32xf32>
    %73 = arith.subf %72, %55 : vector<8x32xf32>
    %74 = arith.mulf %73, %64 : vector<8x32xf32>
    %75 = arith.mulf %55, %19 : vector<8x32xf32>
    %76 = arith.addf %74, %75 : vector<8x32xf32>
    %cst_28 = arith.constant 1.000000e+00 : f32
    %77 = vector.broadcast %cst_28 : f32 to vector<8x32xf32>
    %78 = arith.subf %77, %57 : vector<8x32xf32>
    %79 = arith.mulf %78, %71 : vector<8x32xf32>
    %80 = arith.mulf %57, %19 : vector<8x32xf32>
    %81 = arith.addf %79, %80 : vector<8x32xf32>
    %82 = vector.broadcast %24 : vector<8x1xf32> to vector<8x32xf32>
    %83 = arith.mulf %76, %82 : vector<8x32xf32>
    %84 = arith.index_cast %c0_i32_18 : i32 to index
    %c0_29 = arith.constant 0 : index
    %c0_30 = arith.constant 0 : index
    %85 = vector.load %arg6[%84, %c0_29, %c0_30] : memref<12x8x64xf32, #tpu.memory_space<vmem>>, vector<1x8x32xf32>
    %86 = vector.shape_cast %85 : vector<1x8x32xf32> to vector<8x32xf32>
    %87 = vector.shape_cast %83 : vector<8x32xf32> to vector<1x8x32xf32>
    tpu.vector_store %arg6[%84, %c0_29, %c0_30], %87 {strides = array<i32>} : memref<12x8x64xf32, #tpu.memory_space<vmem>>, vector<1x8x32xf32>,
    %88 = vector.broadcast %28 : vector<8x1xf32> to vector<8x32xf32>
    %89 = arith.mulf %81, %88 : vector<8x32xf32>
    %90 = arith.index_cast %20 : i32 to index
    %c0_31 = arith.constant 0 : index
    %c32 = arith.constant 32 : index
    %91 = vector.load %arg6[%90, %c0_31, %c32] : memref<12x8x64xf32, #tpu.memory_space<vmem>>, vector<1x8x32xf32>
    %92 = vector.shape_cast %91 : vector<1x8x32xf32> to vector<8x32xf32>
    %93 = vector.shape_cast %89 : vector<8x32xf32> to vector<1x8x32xf32>
    tpu.vector_store %arg6[%90, %c0_31, %c32], %93 {strides = array<i32>} : memref<12x8x64xf32, #tpu.memory_space<vmem>>, vector<1x8x32xf32>,
    %94 = vector.broadcast %24 : vector<8x1xf32> to vector<8x32xf32>
    %95 = arith.mulf %94, %76 : vector<8x32xf32>
    %cst_32 = arith.constant 1.000000e+00 : f32
    %96 = vector.broadcast %cst_32 : f32 to vector<8x1xf32>
    %97 = arith.subf %96, %24 : vector<8x1xf32>
    %98 = vector.broadcast %97 : vector<8x1xf32> to vector<8x32xf32>
    %99 = arith.mulf %98, %19 : vector<8x32xf32>
    %100 = arith.addf %95, %99 : vector<8x32xf32>
    %101 = vector.broadcast %28 : vector<8x1xf32> to vector<8x32xf32>
    %102 = arith.mulf %101, %81 : vector<8x32xf32>
    %cst_33 = arith.constant 1.000000e+00 : f32
    %103 = vector.broadcast %cst_33 : f32 to vector<8x1xf32>
    %104 = arith.subf %103, %28 : vector<8x1xf32>
    %105 = vector.broadcast %104 : vector<8x1xf32> to vector<8x32xf32>
    %106 = arith.mulf %105, %19 : vector<8x32xf32>
    %107 = arith.addf %102, %106 : vector<8x32xf32>
    %c1_i32 = arith.constant 1 : i32
    %c11_i32_34 = arith.constant 11 : i32
    %108 = arith.subi %c11_i32_34, %c1_i32 : i32
    %109 = arith.index_cast %c1_i32 : i32 to index
    %c0_35 = arith.constant 0 : index
    %110 = vector.load %arg7[%109, %c0_35] : memref<12x8xf32, #tpu.memory_space<vmem>>, vector<1x8xf32>
    %111 = vector.shape_cast %110 : vector<1x8xf32> to vector<8xf32>
    %112 = vector.shape_cast %111 : vector<8xf32> to vector<8x1xf32>
    %113 = arith.index_cast %108 : i32 to index
    %c0_36 = arith.constant 0 : index
    %114 = vector.load %arg7[%113, %c0_36] : memref<12x8xf32, #tpu.memory_space<vmem>>, vector<1x8xf32>
    %115 = vector.shape_cast %114 : vector<1x8xf32> to vector<8xf32>
    %116 = vector.shape_cast %115 : vector<8xf32> to vector<8x1xf32>
    %117 = arith.index_cast %c1_i32 : i32 to index
    %c0_37 = arith.constant 0 : index
    %c0_38 = arith.constant 0 : index
    %118 = vector.load %arg8[%117, %c0_37, %c0_38] : memref<12x8x192xf32, #tpu.memory_space<vmem>>, vector<1x8x96xf32>
    %119 = vector.shape_cast %118 : vector<1x8x96xf32> to vector<8x96xf32>
    %120 = arith.index_cast %108 : i32 to index
    %c0_39 = arith.constant 0 : index
    %c96_40 = arith.constant 96 : index
    %121 = vector.load %arg8[%120, %c0_39, %c96_40] : memref<12x8x192xf32, #tpu.memory_space<vmem>>, vector<1x8x96xf32>
    %122 = vector.shape_cast %121 : vector<1x8x96xf32> to vector<8x96xf32>
    %123 = tpu.concatenate %100, %107 in 1 : vector<8x32xf32>, vector<8x32xf32> -> vector<8x64xf32>
    %124 = arith.truncf %123 : vector<8x64xf32> to vector<8x64xbf16>
    %cst_41 = arith.constant dense<0.000000e+00> : vector<8x192xf32>
    %125 = tpu.matmul %124, %15, %cst_41 {dimension_numbers = #tpu.dot_dimension_numbers<[1], [0], [0], [1], [0, 0, 1, 1], [], []>} : vector<8x64xbf16>, vector<64x192xbf16>, vector<8x192xf32> -> vector<8x192xf32>
    %126 = vector.extract_strided_slice %119 {offsets = [0, 0], sizes = [8, 64], strides = [1, 1]} : vector<8x96xf32> to vector<8x64xf32>
    %127 = vector.extract_strided_slice %125 {offsets = [0, 0], sizes = [8, 64], strides = [1, 1]} : vector<8x192xf32> to vector<8x64xf32>
    %128 = arith.addf %126, %127 : vector<8x64xf32>
    %129 = arith.negf %128 : vector<8x64xf32>
    %130 = math.exp %129 : vector<8x64xf32>
    %cst_42 = arith.constant 1.000000e+00 : f32
    %131 = vector.broadcast %cst_42 : f32 to vector<8x64xf32>
    %132 = arith.addf %131, %130 : vector<8x64xf32>
    %133 = arith.divf %131, %132 : vector<8x64xf32>
    %134 = vector.extract_strided_slice %122 {offsets = [0, 0], sizes = [8, 64], strides = [1, 1]} : vector<8x96xf32> to vector<8x64xf32>
    %135 = vector.extract_strided_slice %125 {offsets = [0, 96], sizes = [8, 64], strides = [1, 1]} : vector<8x192xf32> to vector<8x64xf32>
    %136 = arith.addf %134, %135 : vector<8x64xf32>
    %137 = arith.negf %136 : vector<8x64xf32>
    %138 = math.exp %137 : vector<8x64xf32>
    %cst_43 = arith.constant 1.000000e+00 : f32
    %139 = vector.broadcast %cst_43 : f32 to vector<8x64xf32>
    %140 = arith.addf %139, %138 : vector<8x64xf32>
    %141 = arith.divf %139, %140 : vector<8x64xf32>
    %142 = vector.extract_strided_slice %133 {offsets = [0, 0], sizes = [8, 32], strides = [1, 1]} : vector<8x64xf32> to vector<8x32xf32>
    %143 = vector.extract_strided_slice %133 {offsets = [0, 32], sizes = [8, 32], strides = [1, 1]} : vector<8x64xf32> to vector<8x32xf32>
    %144 = vector.extract_strided_slice %141 {offsets = [0, 0], sizes = [8, 32], strides = [1, 1]} : vector<8x64xf32> to vector<8x32xf32>
    %145 = vector.extract_strided_slice %141 {offsets = [0, 32], sizes = [8, 32], strides = [1, 1]} : vector<8x64xf32> to vector<8x32xf32>
    %146 = vector.extract_strided_slice %119 {offsets = [0, 64], sizes = [8, 32], strides = [1, 1]} : vector<8x96xf32> to vector<8x32xf32>
    %147 = vector.extract_strided_slice %125 {offsets = [0, 64], sizes = [8, 32], strides = [1, 1]} : vector<8x192xf32> to vector<8x32xf32>
    %148 = vector.broadcast %17 : vector<1x32xf32> to vector<8x32xf32>
    %149 = arith.addf %147, %148 : vector<8x32xf32>
    %150 = arith.mulf %142, %149 : vector<8x32xf32>
    %151 = arith.addf %146, %150 : vector<8x32xf32>
    %152 = math.tanh %151 : vector<8x32xf32>
    %153 = vector.extract_strided_slice %122 {offsets = [0, 64], sizes = [8, 32], strides = [1, 1]} : vector<8x96xf32> to vector<8x32xf32>
    %154 = vector.extract_strided_slice %125 {offsets = [0, 160], sizes = [8, 32], strides = [1, 1]} : vector<8x192xf32> to vector<8x32xf32>
    %155 = vector.broadcast %18 : vector<1x32xf32> to vector<8x32xf32>
    %156 = arith.addf %154, %155 : vector<8x32xf32>
    %157 = arith.mulf %144, %156 : vector<8x32xf32>
    %158 = arith.addf %153, %157 : vector<8x32xf32>
    %159 = math.tanh %158 : vector<8x32xf32>
    %cst_44 = arith.constant 1.000000e+00 : f32
    %160 = vector.broadcast %cst_44 : f32 to vector<8x32xf32>
    %161 = arith.subf %160, %143 : vector<8x32xf32>
    %162 = arith.mulf %161, %152 : vector<8x32xf32>
    %163 = arith.mulf %143, %100 : vector<8x32xf32>
    %164 = arith.addf %162, %163 : vector<8x32xf32>
    %cst_45 = arith.constant 1.000000e+00 : f32
    %165 = vector.broadcast %cst_45 : f32 to vector<8x32xf32>
    %166 = arith.subf %165, %145 : vector<8x32xf32>
    %167 = arith.mulf %166, %159 : vector<8x32xf32>
    %168 = arith.mulf %145, %107 : vector<8x32xf32>
    %169 = arith.addf %167, %168 : vector<8x32xf32>
    %170 = vector.broadcast %112 : vector<8x1xf32> to vector<8x32xf32>
    %171 = arith.mulf %164, %170 : vector<8x32xf32>
    %172 = arith.index_cast %c1_i32 : i32 to index
    %c0_46 = arith.constant 0 : index
    %c0_47 = arith.constant 0 : index
    %173 = vector.load %arg6[%172, %c0_46, %c0_47] : memref<12x8x64xf32, #tpu.memory_space<vmem>>, vector<1x8x32xf32>
    %174 = vector.shape_cast %173 : vector<1x8x32xf32> to vector<8x32xf32>
    %175 = vector.shape_cast %171 : vector<8x32xf32> to vector<1x8x32xf32>
    tpu.vector_store %arg6[%172, %c0_46, %c0_47], %175 {strides = array<i32>} : memref<12x8x64xf32, #tpu.memory_space<vmem>>, vector<1x8x32xf32>,
    %176 = vector.broadcast %116 : vector<8x1xf32> to vector<8x32xf32>
    %177 = arith.mulf %169, %176 : vector<8x32xf32>
    %178 = arith.index_cast %108 : i32 to index
    %c0_48 = arith.constant 0 : index
    %c32_49 = arith.constant 32 : index
    %179 = vector.load %arg6[%178, %c0_48, %c32_49] : memref<12x8x64xf32, #tpu.memory_space<vmem>>, vector<1x8x32xf32>
    %180 = vector.shape_cast %179 : vector<1x8x32xf32> to vector<8x32xf32>
    %181 = vector.shape_cast %177 : vector<8x32xf32> to vector<1x8x32xf32>
    tpu.vector_store %arg6[%178, %c0_48, %c32_49], %181 {strides = array<i32>} : memref<12x8x64xf32, #tpu.memory_space<vmem>>, vector<1x8x32xf32>,
    %182 = vector.broadcast %112 : vector<8x1xf32> to vector<8x32xf32>
    %183 = arith.mulf %182, %164 : vector<8x32xf32>
    %cst_50 = arith.constant 1.000000e+00 : f32
    %184 = vector.broadcast %cst_50 : f32 to vector<8x1xf32>
    %185 = arith.subf %184, %112 : vector<8x1xf32>
    %186 = vector.broadcast %185 : vector<8x1xf32> to vector<8x32xf32>
    %187 = arith.mulf %186, %100 : vector<8x32xf32>
    %188 = arith.addf %183, %187 : vector<8x32xf32>
    %189 = vector.broadcast %116 : vector<8x1xf32> to vector<8x32xf32>
    %190 = arith.mulf %189, %169 : vector<8x32xf32>
    %cst_51 = arith.constant 1.000000e+00 : f32
    %191 = vector.broadcast %cst_51 : f32 to vector<8x1xf32>
    %192 = arith.subf %191, %116 : vector<8x1xf32>
    %193 = vector.broadcast %192 : vector<8x1xf32> to vector<8x32xf32>
    %194 = arith.mulf %193, %107 : vector<8x32xf32>
    %195 = arith.addf %190, %194 : vector<8x32xf32>
    %c2_i32 = arith.constant 2 : i32
    %c11_i32_52 = arith.constant 11 : i32
    %196 = arith.subi %c11_i32_52, %c2_i32 : i32
    %197 = arith.index_cast %c2_i32 : i32 to index
    %c0_53 = arith.constant 0 : index
    %198 = vector.load %arg7[%197, %c0_53] : memref<12x8xf32, #tpu.memory_space<vmem>>, vector<1x8xf32>
    %199 = vector.shape_cast %198 : vector<1x8xf32> to vector<8xf32>
    %200 = vector.shape_cast %199 : vector<8xf32> to vector<8x1xf32>
    %201 = arith.index_cast %196 : i32 to index
    %c0_54 = arith.constant 0 : index
    %202 = vector.load %arg7[%201, %c0_54] : memref<12x8xf32, #tpu.memory_space<vmem>>, vector<1x8xf32>
    %203 = vector.shape_cast %202 : vector<1x8xf32> to vector<8xf32>
    %204 = vector.shape_cast %203 : vector<8xf32> to vector<8x1xf32>
    %205 = arith.index_cast %c2_i32 : i32 to index
    %c0_55 = arith.constant 0 : index
    %c0_56 = arith.constant 0 : index
    %206 = vector.load %arg8[%205, %c0_55, %c0_56] : memref<12x8x192xf32, #tpu.memory_space<vmem>>, vector<1x8x96xf32>
    %207 = vector.shape_cast %206 : vector<1x8x96xf32> to vector<8x96xf32>
    %208 = arith.index_cast %196 : i32 to index
    %c0_57 = arith.constant 0 : index
    %c96_58 = arith.constant 96 : index
    %209 = vector.load %arg8[%208, %c0_57, %c96_58] : memref<12x8x192xf32, #tpu.memory_space<vmem>>, vector<1x8x96xf32>
    %210 = vector.shape_cast %209 : vector<1x8x96xf32> to vector<8x96xf32>
    %211 = tpu.concatenate %188, %195 in 1 : vector<8x32xf32>, vector<8x32xf32> -> vector<8x64xf32>
    %212 = arith.truncf %211 : vector<8x64xf32> to vector<8x64xbf16>
    %cst_59 = arith.constant dense<0.000000e+00> : vector<8x192xf32>
    %213 = tpu.matmul %212, %15, %cst_59 {dimension_numbers = #tpu.dot_dimension_numbers<[1], [0], [0], [1], [0, 0, 1, 1], [], []>} : vector<8x64xbf16>, vector<64x192xbf16>, vector<8x192xf32> -> vector<8x192xf32>
    %214 = vector.extract_strided_slice %207 {offsets = [0, 0], sizes = [8, 64], strides = [1, 1]} : vector<8x96xf32> to vector<8x64xf32>
    %215 = vector.extract_strided_slice %213 {offsets = [0, 0], sizes = [8, 64], strides = [1, 1]} : vector<8x192xf32> to vector<8x64xf32>
    %216 = arith.addf %214, %215 : vector<8x64xf32>
    %217 = arith.negf %216 : vector<8x64xf32>
    %218 = math.exp %217 : vector<8x64xf32>
    %cst_60 = arith.constant 1.000000e+00 : f32
    %219 = vector.broadcast %cst_60 : f32 to vector<8x64xf32>
    %220 = arith.addf %219, %218 : vector<8x64xf32>
    %221 = arith.divf %219, %220 : vector<8x64xf32>
    %222 = vector.extract_strided_slice %210 {offsets = [0, 0], sizes = [8, 64], strides = [1, 1]} : vector<8x96xf32> to vector<8x64xf32>
    %223 = vector.extract_strided_slice %213 {offsets = [0, 96], sizes = [8, 64], strides = [1, 1]} : vector<8x192xf32> to vector<8x64xf32>
    %224 = arith.addf %222, %223 : vector<8x64xf32>
    %225 = arith.negf %224 : vector<8x64xf32>
    %226 = math.exp %225 : vector<8x64xf32>
    %cst_61 = arith.constant 1.000000e+00 : f32
    %227 = vector.broadcast %cst_61 : f32 to vector<8x64xf32>
    %228 = arith.addf %227, %226 : vector<8x64xf32>
    %229 = arith.divf %227, %228 : vector<8x64xf32>
    %230 = vector.extract_strided_slice %221 {offsets = [0, 0], sizes = [8, 32], strides = [1, 1]} : vector<8x64xf32> to vector<8x32xf32>
    %231 = vector.extract_strided_slice %221 {offsets = [0, 32], sizes = [8, 32], strides = [1, 1]} : vector<8x64xf32> to vector<8x32xf32>
    %232 = vector.extract_strided_slice %229 {offsets = [0, 0], sizes = [8, 32], strides = [1, 1]} : vector<8x64xf32> to vector<8x32xf32>
    %233 = vector.extract_strided_slice %229 {offsets = [0, 32], sizes = [8, 32], strides = [1, 1]} : vector<8x64xf32> to vector<8x32xf32>
    %234 = vector.extract_strided_slice %207 {offsets = [0, 64], sizes = [8, 32], strides = [1, 1]} : vector<8x96xf32> to vector<8x32xf32>
    %235 = vector.extract_strided_slice %213 {offsets = [0, 64], sizes = [8, 32], strides = [1, 1]} : vector<8x192xf32> to vector<8x32xf32>
    %236 = vector.broadcast %17 : vector<1x32xf32> to vector<8x32xf32>
    %237 = arith.addf %235, %236 : vector<8x32xf32>
    %238 = arith.mulf %230, %237 : vector<8x32xf32>
    %239 = arith.addf %234, %238 : vector<8x32xf32>
    %240 = math.tanh %239 : vector<8x32xf32>
    %241 = vector.extract_strided_slice %210 {offsets = [0, 64], sizes = [8, 32], strides = [1, 1]} : vector<8x96xf32> to vector<8x32xf32>
    %242 = vector.extract_strided_slice %213 {offsets = [0, 160], sizes = [8, 32], strides = [1, 1]} : vector<8x192xf32> to vector<8x32xf32>
    %243 = vector.broadcast %18 : vector<1x32xf32> to vector<8x32xf32>
    %244 = arith.addf %242, %243 : vector<8x32xf32>
    %245 = arith.mulf %232, %244 : vector<8x32xf32>
    %246 = arith.addf %241, %245 : vector<8x32xf32>
    %247 = math.tanh %246 : vector<8x32xf32>
    %cst_62 = arith.constant 1.000000e+00 : f32
    %248 = vector.broadcast %cst_62 : f32 to vector<8x32xf32>
    %249 = arith.subf %248, %231 : vector<8x32xf32>
    %250 = arith.mulf %249, %240 : vector<8x32xf32>
    %251 = arith.mulf %231, %188 : vector<8x32xf32>
    %252 = arith.addf %250, %251 : vector<8x32xf32>
    %cst_63 = arith.constant 1.000000e+00 : f32
    %253 = vector.broadcast %cst_63 : f32 to vector<8x32xf32>
    %254 = arith.subf %253, %233 : vector<8x32xf32>
    %255 = arith.mulf %254, %247 : vector<8x32xf32>
    %256 = arith.mulf %233, %195 : vector<8x32xf32>
    %257 = arith.addf %255, %256 : vector<8x32xf32>
    %258 = vector.broadcast %200 : vector<8x1xf32> to vector<8x32xf32>
    %259 = arith.mulf %252, %258 : vector<8x32xf32>
    %260 = arith.index_cast %c2_i32 : i32 to index
    %c0_64 = arith.constant 0 : index
    %c0_65 = arith.constant 0 : index
    %261 = vector.load %arg6[%260, %c0_64, %c0_65] : memref<12x8x64xf32, #tpu.memory_space<vmem>>, vector<1x8x32xf32>
    %262 = vector.shape_cast %261 : vector<1x8x32xf32> to vector<8x32xf32>
    %263 = vector.shape_cast %259 : vector<8x32xf32> to vector<1x8x32xf32>
    tpu.vector_store %arg6[%260, %c0_64, %c0_65], %263 {strides = array<i32>} : memref<12x8x64xf32, #tpu.memory_space<vmem>>, vector<1x8x32xf32>,
    %264 = vector.broadcast %204 : vector<8x1xf32> to vector<8x32xf32>
    %265 = arith.mulf %257, %264 : vector<8x32xf32>
    %266 = arith.index_cast %196 : i32 to index
    %c0_66 = arith.constant 0 : index
    %c32_67 = arith.constant 32 : index
    %267 = vector.load %arg6[%266, %c0_66, %c32_67] : memref<12x8x64xf32, #tpu.memory_space<vmem>>, vector<1x8x32xf32>
    %268 = vector.shape_cast %267 : vector<1x8x32xf32> to vector<8x32xf32>
    %269 = vector.shape_cast %265 : vector<8x32xf32> to vector<1x8x32xf32>
    tpu.vector_store %arg6[%266, %c0_66, %c32_67], %269 {strides = array<i32>} : memref<12x8x64xf32, #tpu.memory_space<vmem>>, vector<1x8x32xf32>,
    %270 = vector.broadcast %200 : vector<8x1xf32> to vector<8x32xf32>
    %271 = arith.mulf %270, %252 : vector<8x32xf32>
    %cst_68 = arith.constant 1.000000e+00 : f32
    %272 = vector.broadcast %cst_68 : f32 to vector<8x1xf32>
    %273 = arith.subf %272, %200 : vector<8x1xf32>
    %274 = vector.broadcast %273 : vector<8x1xf32> to vector<8x32xf32>
    %275 = arith.mulf %274, %188 : vector<8x32xf32>
    %276 = arith.addf %271, %275 : vector<8x32xf32>
    %277 = vector.broadcast %204 : vector<8x1xf32> to vector<8x32xf32>
    %278 = arith.mulf %277, %257 : vector<8x32xf32>
    %cst_69 = arith.constant 1.000000e+00 : f32
    %279 = vector.broadcast %cst_69 : f32 to vector<8x1xf32>
    %280 = arith.subf %279, %204 : vector<8x1xf32>
    %281 = vector.broadcast %280 : vector<8x1xf32> to vector<8x32xf32>
    %282 = arith.mulf %281, %195 : vector<8x32xf32>
    %283 = arith.addf %278, %282 : vector<8x32xf32>
    %c3_i32 = arith.constant 3 : i32
    %c11_i32_70 = arith.constant 11 : i32
    %284 = arith.subi %c11_i32_70, %c3_i32 : i32
    %285 = arith.index_cast %c3_i32 : i32 to index
    %c0_71 = arith.constant 0 : index
    %286 = vector.load %arg7[%285, %c0_71] : memref<12x8xf32, #tpu.memory_space<vmem>>, vector<1x8xf32>
    %287 = vector.shape_cast %286 : vector<1x8xf32> to vector<8xf32>
    %288 = vector.shape_cast %287 : vector<8xf32> to vector<8x1xf32>
    %289 = arith.index_cast %284 : i32 to index
    %c0_72 = arith.constant 0 : index
    %290 = vector.load %arg7[%289, %c0_72] : memref<12x8xf32, #tpu.memory_space<vmem>>, vector<1x8xf32>
    %291 = vector.shape_cast %290 : vector<1x8xf32> to vector<8xf32>
    %292 = vector.shape_cast %291 : vector<8xf32> to vector<8x1xf32>
    %293 = arith.index_cast %c3_i32 : i32 to index
    %c0_73 = arith.constant 0 : index
    %c0_74 = arith.constant 0 : index
    %294 = vector.load %arg8[%293, %c0_73, %c0_74] : memref<12x8x192xf32, #tpu.memory_space<vmem>>, vector<1x8x96xf32>
    %295 = vector.shape_cast %294 : vector<1x8x96xf32> to vector<8x96xf32>
    %296 = arith.index_cast %284 : i32 to index
    %c0_75 = arith.constant 0 : index
    %c96_76 = arith.constant 96 : index
    %297 = vector.load %arg8[%296, %c0_75, %c96_76] : memref<12x8x192xf32, #tpu.memory_space<vmem>>, vector<1x8x96xf32>
    %298 = vector.shape_cast %297 : vector<1x8x96xf32> to vector<8x96xf32>
    %299 = tpu.concatenate %276, %283 in 1 : vector<8x32xf32>, vector<8x32xf32> -> vector<8x64xf32>
    %300 = arith.truncf %299 : vector<8x64xf32> to vector<8x64xbf16>
    %cst_77 = arith.constant dense<0.000000e+00> : vector<8x192xf32>
    %301 = tpu.matmul %300, %15, %cst_77 {dimension_numbers = #tpu.dot_dimension_numbers<[1], [0], [0], [1], [0, 0, 1, 1], [], []>} : vector<8x64xbf16>, vector<64x192xbf16>, vector<8x192xf32> -> vector<8x192xf32>
    %302 = vector.extract_strided_slice %295 {offsets = [0, 0], sizes = [8, 64], strides = [1, 1]} : vector<8x96xf32> to vector<8x64xf32>
    %303 = vector.extract_strided_slice %301 {offsets = [0, 0], sizes = [8, 64], strides = [1, 1]} : vector<8x192xf32> to vector<8x64xf32>
    %304 = arith.addf %302, %303 : vector<8x64xf32>
    %305 = arith.negf %304 : vector<8x64xf32>
    %306 = math.exp %305 : vector<8x64xf32>
    %cst_78 = arith.constant 1.000000e+00 : f32
    %307 = vector.broadcast %cst_78 : f32 to vector<8x64xf32>
    %308 = arith.addf %307, %306 : vector<8x64xf32>
    %309 = arith.divf %307, %308 : vector<8x64xf32>
    %310 = vector.extract_strided_slice %298 {offsets = [0, 0], sizes = [8, 64], strides = [1, 1]} : vector<8x96xf32> to vector<8x64xf32>
    %311 = vector.extract_strided_slice %301 {offsets = [0, 96], sizes = [8, 64], strides = [1, 1]} : vector<8x192xf32> to vector<8x64xf32>
    %312 = arith.addf %310, %311 : vector<8x64xf32>
    %313 = arith.negf %312 : vector<8x64xf32>
    %314 = math.exp %313 : vector<8x64xf32>
    %cst_79 = arith.constant 1.000000e+00 : f32
    %315 = vector.broadcast %cst_79 : f32 to vector<8x64xf32>
    %316 = arith.addf %315, %314 : vector<8x64xf32>
    %317 = arith.divf %315, %316 : vector<8x64xf32>
    %318 = vector.extract_strided_slice %309 {offsets = [0, 0], sizes = [8, 32], strides = [1, 1]} : vector<8x64xf32> to vector<8x32xf32>
    %319 = vector.extract_strided_slice %309 {offsets = [0, 32], sizes = [8, 32], strides = [1, 1]} : vector<8x64xf32> to vector<8x32xf32>
    %320 = vector.extract_strided_slice %317 {offsets = [0, 0], sizes = [8, 32], strides = [1, 1]} : vector<8x64xf32> to vector<8x32xf32>
    %321 = vector.extract_strided_slice %317 {offsets = [0, 32], sizes = [8, 32], strides = [1, 1]} : vector<8x64xf32> to vector<8x32xf32>
    %322 = vector.extract_strided_slice %295 {offsets = [0, 64], sizes = [8, 32], strides = [1, 1]} : vector<8x96xf32> to vector<8x32xf32>
    %323 = vector.extract_strided_slice %301 {offsets = [0, 64], sizes = [8, 32], strides = [1, 1]} : vector<8x192xf32> to vector<8x32xf32>
    %324 = vector.broadcast %17 : vector<1x32xf32> to vector<8x32xf32>
    %325 = arith.addf %323, %324 : vector<8x32xf32>
    %326 = arith.mulf %318, %325 : vector<8x32xf32>
    %327 = arith.addf %322, %326 : vector<8x32xf32>
    %328 = math.tanh %327 : vector<8x32xf32>
    %329 = vector.extract_strided_slice %298 {offsets = [0, 64], sizes = [8, 32], strides = [1, 1]} : vector<8x96xf32> to vector<8x32xf32>
    %330 = vector.extract_strided_slice %301 {offsets = [0, 160], sizes = [8, 32], strides = [1, 1]} : vector<8x192xf32> to vector<8x32xf32>
    %331 = vector.broadcast %18 : vector<1x32xf32> to vector<8x32xf32>
    %332 = arith.addf %330, %331 : vector<8x32xf32>
    %333 = arith.mulf %320, %332 : vector<8x32xf32>
    %334 = arith.addf %329, %333 : vector<8x32xf32>
    %335 = math.tanh %334 : vector<8x32xf32>
    %cst_80 = arith.constant 1.000000e+00 : f32
    %336 = vector.broadcast %cst_80 : f32 to vector<8x32xf32>
    %337 = arith.subf %336, %319 : vector<8x32xf32>
    %338 = arith.mulf %337, %328 : vector<8x32xf32>
    %339 = arith.mulf %319, %276 : vector<8x32xf32>
    %340 = arith.addf %338, %339 : vector<8x32xf32>
    %cst_81 = arith.constant 1.000000e+00 : f32
    %341 = vector.broadcast %cst_81 : f32 to vector<8x32xf32>
    %342 = arith.subf %341, %321 : vector<8x32xf32>
    %343 = arith.mulf %342, %335 : vector<8x32xf32>
    %344 = arith.mulf %321, %283 : vector<8x32xf32>
    %345 = arith.addf %343, %344 : vector<8x32xf32>
    %346 = vector.broadcast %288 : vector<8x1xf32> to vector<8x32xf32>
    %347 = arith.mulf %340, %346 : vector<8x32xf32>
    %348 = arith.index_cast %c3_i32 : i32 to index
    %c0_82 = arith.constant 0 : index
    %c0_83 = arith.constant 0 : index
    %349 = vector.load %arg6[%348, %c0_82, %c0_83] : memref<12x8x64xf32, #tpu.memory_space<vmem>>, vector<1x8x32xf32>
    %350 = vector.shape_cast %349 : vector<1x8x32xf32> to vector<8x32xf32>
    %351 = vector.shape_cast %347 : vector<8x32xf32> to vector<1x8x32xf32>
    tpu.vector_store %arg6[%348, %c0_82, %c0_83], %351 {strides = array<i32>} : memref<12x8x64xf32, #tpu.memory_space<vmem>>, vector<1x8x32xf32>,
    %352 = vector.broadcast %292 : vector<8x1xf32> to vector<8x32xf32>
    %353 = arith.mulf %345, %352 : vector<8x32xf32>
    %354 = arith.index_cast %284 : i32 to index
    %c0_84 = arith.constant 0 : index
    %c32_85 = arith.constant 32 : index
    %355 = vector.load %arg6[%354, %c0_84, %c32_85] : memref<12x8x64xf32, #tpu.memory_space<vmem>>, vector<1x8x32xf32>
    %356 = vector.shape_cast %355 : vector<1x8x32xf32> to vector<8x32xf32>
    %357 = vector.shape_cast %353 : vector<8x32xf32> to vector<1x8x32xf32>
    tpu.vector_store %arg6[%354, %c0_84, %c32_85], %357 {strides = array<i32>} : memref<12x8x64xf32, #tpu.memory_space<vmem>>, vector<1x8x32xf32>,
    %358 = vector.broadcast %288 : vector<8x1xf32> to vector<8x32xf32>
    %359 = arith.mulf %358, %340 : vector<8x32xf32>
    %cst_86 = arith.constant 1.000000e+00 : f32
    %360 = vector.broadcast %cst_86 : f32 to vector<8x1xf32>
    %361 = arith.subf %360, %288 : vector<8x1xf32>
    %362 = vector.broadcast %361 : vector<8x1xf32> to vector<8x32xf32>
    %363 = arith.mulf %362, %276 : vector<8x32xf32>
    %364 = arith.addf %359, %363 : vector<8x32xf32>
    %365 = vector.broadcast %292 : vector<8x1xf32> to vector<8x32xf32>
    %366 = arith.mulf %365, %345 : vector<8x32xf32>
    %cst_87 = arith.constant 1.000000e+00 : f32
    %367 = vector.broadcast %cst_87 : f32 to vector<8x1xf32>
    %368 = arith.subf %367, %292 : vector<8x1xf32>
    %369 = vector.broadcast %368 : vector<8x1xf32> to vector<8x32xf32>
    %370 = arith.mulf %369, %283 : vector<8x32xf32>
    %371 = arith.addf %366, %370 : vector<8x32xf32>
    %c4_i32 = arith.constant 4 : i32
    %c11_i32_88 = arith.constant 11 : i32
    %372 = arith.subi %c11_i32_88, %c4_i32 : i32
    %373 = arith.index_cast %c4_i32 : i32 to index
    %c0_89 = arith.constant 0 : index
    %374 = vector.load %arg7[%373, %c0_89] : memref<12x8xf32, #tpu.memory_space<vmem>>, vector<1x8xf32>
    %375 = vector.shape_cast %374 : vector<1x8xf32> to vector<8xf32>
    %376 = vector.shape_cast %375 : vector<8xf32> to vector<8x1xf32>
    %377 = arith.index_cast %372 : i32 to index
    %c0_90 = arith.constant 0 : index
    %378 = vector.load %arg7[%377, %c0_90] : memref<12x8xf32, #tpu.memory_space<vmem>>, vector<1x8xf32>
    %379 = vector.shape_cast %378 : vector<1x8xf32> to vector<8xf32>
    %380 = vector.shape_cast %379 : vector<8xf32> to vector<8x1xf32>
    %381 = arith.index_cast %c4_i32 : i32 to index
    %c0_91 = arith.constant 0 : index
    %c0_92 = arith.constant 0 : index
    %382 = vector.load %arg8[%381, %c0_91, %c0_92] : memref<12x8x192xf32, #tpu.memory_space<vmem>>, vector<1x8x96xf32>
    %383 = vector.shape_cast %382 : vector<1x8x96xf32> to vector<8x96xf32>
    %384 = arith.index_cast %372 : i32 to index
    %c0_93 = arith.constant 0 : index
    %c96_94 = arith.constant 96 : index
    %385 = vector.load %arg8[%384, %c0_93, %c96_94] : memref<12x8x192xf32, #tpu.memory_space<vmem>>, vector<1x8x96xf32>
    %386 = vector.shape_cast %385 : vector<1x8x96xf32> to vector<8x96xf32>
    %387 = tpu.concatenate %364, %371 in 1 : vector<8x32xf32>, vector<8x32xf32> -> vector<8x64xf32>
    %388 = arith.truncf %387 : vector<8x64xf32> to vector<8x64xbf16>
    %cst_95 = arith.constant dense<0.000000e+00> : vector<8x192xf32>
    %389 = tpu.matmul %388, %15, %cst_95 {dimension_numbers = #tpu.dot_dimension_numbers<[1], [0], [0], [1], [0, 0, 1, 1], [], []>} : vector<8x64xbf16>, vector<64x192xbf16>, vector<8x192xf32> -> vector<8x192xf32>
    %390 = vector.extract_strided_slice %383 {offsets = [0, 0], sizes = [8, 64], strides = [1, 1]} : vector<8x96xf32> to vector<8x64xf32>
    %391 = vector.extract_strided_slice %389 {offsets = [0, 0], sizes = [8, 64], strides = [1, 1]} : vector<8x192xf32> to vector<8x64xf32>
    %392 = arith.addf %390, %391 : vector<8x64xf32>
    %393 = arith.negf %392 : vector<8x64xf32>
    %394 = math.exp %393 : vector<8x64xf32>
    %cst_96 = arith.constant 1.000000e+00 : f32
    %395 = vector.broadcast %cst_96 : f32 to vector<8x64xf32>
    %396 = arith.addf %395, %394 : vector<8x64xf32>
    %397 = arith.divf %395, %396 : vector<8x64xf32>
    %398 = vector.extract_strided_slice %386 {offsets = [0, 0], sizes = [8, 64], strides = [1, 1]} : vector<8x96xf32> to vector<8x64xf32>
    %399 = vector.extract_strided_slice %389 {offsets = [0, 96], sizes = [8, 64], strides = [1, 1]} : vector<8x192xf32> to vector<8x64xf32>
    %400 = arith.addf %398, %399 : vector<8x64xf32>
    %401 = arith.negf %400 : vector<8x64xf32>
    %402 = math.exp %401 : vector<8x64xf32>
    %cst_97 = arith.constant 1.000000e+00 : f32
    %403 = vector.broadcast %cst_97 : f32 to vector<8x64xf32>
    %404 = arith.addf %403, %402 : vector<8x64xf32>
    %405 = arith.divf %403, %404 : vector<8x64xf32>
    %406 = vector.extract_strided_slice %397 {offsets = [0, 0], sizes = [8, 32], strides = [1, 1]} : vector<8x64xf32> to vector<8x32xf32>
    %407 = vector.extract_strided_slice %397 {offsets = [0, 32], sizes = [8, 32], strides = [1, 1]} : vector<8x64xf32> to vector<8x32xf32>
    %408 = vector.extract_strided_slice %405 {offsets = [0, 0], sizes = [8, 32], strides = [1, 1]} : vector<8x64xf32> to vector<8x32xf32>
    %409 = vector.extract_strided_slice %405 {offsets = [0, 32], sizes = [8, 32], strides = [1, 1]} : vector<8x64xf32> to vector<8x32xf32>
    %410 = vector.extract_strided_slice %383 {offsets = [0, 64], sizes = [8, 32], strides = [1, 1]} : vector<8x96xf32> to vector<8x32xf32>
    %411 = vector.extract_strided_slice %389 {offsets = [0, 64], sizes = [8, 32], strides = [1, 1]} : vector<8x192xf32> to vector<8x32xf32>
    %412 = vector.broadcast %17 : vector<1x32xf32> to vector<8x32xf32>
    %413 = arith.addf %411, %412 : vector<8x32xf32>
    %414 = arith.mulf %406, %413 : vector<8x32xf32>
    %415 = arith.addf %410, %414 : vector<8x32xf32>
    %416 = math.tanh %415 : vector<8x32xf32>
    %417 = vector.extract_strided_slice %386 {offsets = [0, 64], sizes = [8, 32], strides = [1, 1]} : vector<8x96xf32> to vector<8x32xf32>
    %418 = vector.extract_strided_slice %389 {offsets = [0, 160], sizes = [8, 32], strides = [1, 1]} : vector<8x192xf32> to vector<8x32xf32>
    %419 = vector.broadcast %18 : vector<1x32xf32> to vector<8x32xf32>
    %420 = arith.addf %418, %419 : vector<8x32xf32>
    %421 = arith.mulf %408, %420 : vector<8x32xf32>
    %422 = arith.addf %417, %421 : vector<8x32xf32>
    %423 = math.tanh %422 : vector<8x32xf32>
    %cst_98 = arith.constant 1.000000e+00 : f32
    %424 = vector.broadcast %cst_98 : f32 to vector<8x32xf32>
    %425 = arith.subf %424, %407 : vector<8x32xf32>
    %426 = arith.mulf %425, %416 : vector<8x32xf32>
    %427 = arith.mulf %407, %364 : vector<8x32xf32>
    %428 = arith.addf %426, %427 : vector<8x32xf32>
    %cst_99 = arith.constant 1.000000e+00 : f32
    %429 = vector.broadcast %cst_99 : f32 to vector<8x32xf32>
    %430 = arith.subf %429, %409 : vector<8x32xf32>
    %431 = arith.mulf %430, %423 : vector<8x32xf32>
    %432 = arith.mulf %409, %371 : vector<8x32xf32>
    %433 = arith.addf %431, %432 : vector<8x32xf32>
    %434 = vector.broadcast %376 : vector<8x1xf32> to vector<8x32xf32>
    %435 = arith.mulf %428, %434 : vector<8x32xf32>
    %436 = arith.index_cast %c4_i32 : i32 to index
    %c0_100 = arith.constant 0 : index
    %c0_101 = arith.constant 0 : index
    %437 = vector.load %arg6[%436, %c0_100, %c0_101] : memref<12x8x64xf32, #tpu.memory_space<vmem>>, vector<1x8x32xf32>
    %438 = vector.shape_cast %437 : vector<1x8x32xf32> to vector<8x32xf32>
    %439 = vector.shape_cast %435 : vector<8x32xf32> to vector<1x8x32xf32>
    tpu.vector_store %arg6[%436, %c0_100, %c0_101], %439 {strides = array<i32>} : memref<12x8x64xf32, #tpu.memory_space<vmem>>, vector<1x8x32xf32>,
    %440 = vector.broadcast %380 : vector<8x1xf32> to vector<8x32xf32>
    %441 = arith.mulf %433, %440 : vector<8x32xf32>
    %442 = arith.index_cast %372 : i32 to index
    %c0_102 = arith.constant 0 : index
    %c32_103 = arith.constant 32 : index
    %443 = vector.load %arg6[%442, %c0_102, %c32_103] : memref<12x8x64xf32, #tpu.memory_space<vmem>>, vector<1x8x32xf32>
    %444 = vector.shape_cast %443 : vector<1x8x32xf32> to vector<8x32xf32>
    %445 = vector.shape_cast %441 : vector<8x32xf32> to vector<1x8x32xf32>
    tpu.vector_store %arg6[%442, %c0_102, %c32_103], %445 {strides = array<i32>} : memref<12x8x64xf32, #tpu.memory_space<vmem>>, vector<1x8x32xf32>,
    %446 = vector.broadcast %376 : vector<8x1xf32> to vector<8x32xf32>
    %447 = arith.mulf %446, %428 : vector<8x32xf32>
    %cst_104 = arith.constant 1.000000e+00 : f32
    %448 = vector.broadcast %cst_104 : f32 to vector<8x1xf32>
    %449 = arith.subf %448, %376 : vector<8x1xf32>
    %450 = vector.broadcast %449 : vector<8x1xf32> to vector<8x32xf32>
    %451 = arith.mulf %450, %364 : vector<8x32xf32>
    %452 = arith.addf %447, %451 : vector<8x32xf32>
    %453 = vector.broadcast %380 : vector<8x1xf32> to vector<8x32xf32>
    %454 = arith.mulf %453, %433 : vector<8x32xf32>
    %cst_105 = arith.constant 1.000000e+00 : f32
    %455 = vector.broadcast %cst_105 : f32 to vector<8x1xf32>
    %456 = arith.subf %455, %380 : vector<8x1xf32>
    %457 = vector.broadcast %456 : vector<8x1xf32> to vector<8x32xf32>
    %458 = arith.mulf %457, %371 : vector<8x32xf32>
    %459 = arith.addf %454, %458 : vector<8x32xf32>
    %c5_i32 = arith.constant 5 : i32
    %c11_i32_106 = arith.constant 11 : i32
    %460 = arith.subi %c11_i32_106, %c5_i32 : i32
    %461 = arith.index_cast %c5_i32 : i32 to index
    %c0_107 = arith.constant 0 : index
    %462 = vector.load %arg7[%461, %c0_107] : memref<12x8xf32, #tpu.memory_space<vmem>>, vector<1x8xf32>
    %463 = vector.shape_cast %462 : vector<1x8xf32> to vector<8xf32>
    %464 = vector.shape_cast %463 : vector<8xf32> to vector<8x1xf32>
    %465 = arith.index_cast %460 : i32 to index
    %c0_108 = arith.constant 0 : index
    %466 = vector.load %arg7[%465, %c0_108] : memref<12x8xf32, #tpu.memory_space<vmem>>, vector<1x8xf32>
    %467 = vector.shape_cast %466 : vector<1x8xf32> to vector<8xf32>
    %468 = vector.shape_cast %467 : vector<8xf32> to vector<8x1xf32>
    %469 = arith.index_cast %c5_i32 : i32 to index
    %c0_109 = arith.constant 0 : index
    %c0_110 = arith.constant 0 : index
    %470 = vector.load %arg8[%469, %c0_109, %c0_110] : memref<12x8x192xf32, #tpu.memory_space<vmem>>, vector<1x8x96xf32>
    %471 = vector.shape_cast %470 : vector<1x8x96xf32> to vector<8x96xf32>
    %472 = arith.index_cast %460 : i32 to index
    %c0_111 = arith.constant 0 : index
    %c96_112 = arith.constant 96 : index
    %473 = vector.load %arg8[%472, %c0_111, %c96_112] : memref<12x8x192xf32, #tpu.memory_space<vmem>>, vector<1x8x96xf32>
    %474 = vector.shape_cast %473 : vector<1x8x96xf32> to vector<8x96xf32>
    %475 = tpu.concatenate %452, %459 in 1 : vector<8x32xf32>, vector<8x32xf32> -> vector<8x64xf32>
    %476 = arith.truncf %475 : vector<8x64xf32> to vector<8x64xbf16>
    %cst_113 = arith.constant dense<0.000000e+00> : vector<8x192xf32>
    %477 = tpu.matmul %476, %15, %cst_113 {dimension_numbers = #tpu.dot_dimension_numbers<[1], [0], [0], [1], [0, 0, 1, 1], [], []>} : vector<8x64xbf16>, vector<64x192xbf16>, vector<8x192xf32> -> vector<8x192xf32>
    %478 = vector.extract_strided_slice %471 {offsets = [0, 0], sizes = [8, 64], strides = [1, 1]} : vector<8x96xf32> to vector<8x64xf32>
    %479 = vector.extract_strided_slice %477 {offsets = [0, 0], sizes = [8, 64], strides = [1, 1]} : vector<8x192xf32> to vector<8x64xf32>
    %480 = arith.addf %478, %479 : vector<8x64xf32>
    %481 = arith.negf %480 : vector<8x64xf32>
    %482 = math.exp %481 : vector<8x64xf32>
    %cst_114 = arith.constant 1.000000e+00 : f32
    %483 = vector.broadcast %cst_114 : f32 to vector<8x64xf32>
    %484 = arith.addf %483, %482 : vector<8x64xf32>
    %485 = arith.divf %483, %484 : vector<8x64xf32>
    %486 = vector.extract_strided_slice %474 {offsets = [0, 0], sizes = [8, 64], strides = [1, 1]} : vector<8x96xf32> to vector<8x64xf32>
    %487 = vector.extract_strided_slice %477 {offsets = [0, 96], sizes = [8, 64], strides = [1, 1]} : vector<8x192xf32> to vector<8x64xf32>
    %488 = arith.addf %486, %487 : vector<8x64xf32>
    %489 = arith.negf %488 : vector<8x64xf32>
    %490 = math.exp %489 : vector<8x64xf32>
    %cst_115 = arith.constant 1.000000e+00 : f32
    %491 = vector.broadcast %cst_115 : f32 to vector<8x64xf32>
    %492 = arith.addf %491, %490 : vector<8x64xf32>
    %493 = arith.divf %491, %492 : vector<8x64xf32>
    %494 = vector.extract_strided_slice %485 {offsets = [0, 0], sizes = [8, 32], strides = [1, 1]} : vector<8x64xf32> to vector<8x32xf32>
    %495 = vector.extract_strided_slice %485 {offsets = [0, 32], sizes = [8, 32], strides = [1, 1]} : vector<8x64xf32> to vector<8x32xf32>
    %496 = vector.extract_strided_slice %493 {offsets = [0, 0], sizes = [8, 32], strides = [1, 1]} : vector<8x64xf32> to vector<8x32xf32>
    %497 = vector.extract_strided_slice %493 {offsets = [0, 32], sizes = [8, 32], strides = [1, 1]} : vector<8x64xf32> to vector<8x32xf32>
    %498 = vector.extract_strided_slice %471 {offsets = [0, 64], sizes = [8, 32], strides = [1, 1]} : vector<8x96xf32> to vector<8x32xf32>
    %499 = vector.extract_strided_slice %477 {offsets = [0, 64], sizes = [8, 32], strides = [1, 1]} : vector<8x192xf32> to vector<8x32xf32>
    %500 = vector.broadcast %17 : vector<1x32xf32> to vector<8x32xf32>
    %501 = arith.addf %499, %500 : vector<8x32xf32>
    %502 = arith.mulf %494, %501 : vector<8x32xf32>
    %503 = arith.addf %498, %502 : vector<8x32xf32>
    %504 = math.tanh %503 : vector<8x32xf32>
    %505 = vector.extract_strided_slice %474 {offsets = [0, 64], sizes = [8, 32], strides = [1, 1]} : vector<8x96xf32> to vector<8x32xf32>
    %506 = vector.extract_strided_slice %477 {offsets = [0, 160], sizes = [8, 32], strides = [1, 1]} : vector<8x192xf32> to vector<8x32xf32>
    %507 = vector.broadcast %18 : vector<1x32xf32> to vector<8x32xf32>
    %508 = arith.addf %506, %507 : vector<8x32xf32>
    %509 = arith.mulf %496, %508 : vector<8x32xf32>
    %510 = arith.addf %505, %509 : vector<8x32xf32>
    %511 = math.tanh %510 : vector<8x32xf32>
    %cst_116 = arith.constant 1.000000e+00 : f32
    %512 = vector.broadcast %cst_116 : f32 to vector<8x32xf32>
    %513 = arith.subf %512, %495 : vector<8x32xf32>
    %514 = arith.mulf %513, %504 : vector<8x32xf32>
    %515 = arith.mulf %495, %452 : vector<8x32xf32>
    %516 = arith.addf %514, %515 : vector<8x32xf32>
    %cst_117 = arith.constant 1.000000e+00 : f32
    %517 = vector.broadcast %cst_117 : f32 to vector<8x32xf32>
    %518 = arith.subf %517, %497 : vector<8x32xf32>
    %519 = arith.mulf %518, %511 : vector<8x32xf32>
    %520 = arith.mulf %497, %459 : vector<8x32xf32>
    %521 = arith.addf %519, %520 : vector<8x32xf32>
    %522 = vector.broadcast %464 : vector<8x1xf32> to vector<8x32xf32>
    %523 = arith.mulf %516, %522 : vector<8x32xf32>
    %524 = arith.index_cast %c5_i32 : i32 to index
    %c0_118 = arith.constant 0 : index
    %c0_119 = arith.constant 0 : index
    %525 = vector.load %arg6[%524, %c0_118, %c0_119] : memref<12x8x64xf32, #tpu.memory_space<vmem>>, vector<1x8x32xf32>
    %526 = vector.shape_cast %525 : vector<1x8x32xf32> to vector<8x32xf32>
    %527 = vector.shape_cast %523 : vector<8x32xf32> to vector<1x8x32xf32>
    tpu.vector_store %arg6[%524, %c0_118, %c0_119], %527 {strides = array<i32>} : memref<12x8x64xf32, #tpu.memory_space<vmem>>, vector<1x8x32xf32>,
    %528 = vector.broadcast %468 : vector<8x1xf32> to vector<8x32xf32>
    %529 = arith.mulf %521, %528 : vector<8x32xf32>
    %530 = arith.index_cast %460 : i32 to index
    %c0_120 = arith.constant 0 : index
    %c32_121 = arith.constant 32 : index
    %531 = vector.load %arg6[%530, %c0_120, %c32_121] : memref<12x8x64xf32, #tpu.memory_space<vmem>>, vector<1x8x32xf32>
    %532 = vector.shape_cast %531 : vector<1x8x32xf32> to vector<8x32xf32>
    %533 = vector.shape_cast %529 : vector<8x32xf32> to vector<1x8x32xf32>
    tpu.vector_store %arg6[%530, %c0_120, %c32_121], %533 {strides = array<i32>} : memref<12x8x64xf32, #tpu.memory_space<vmem>>, vector<1x8x32xf32>,
    %534 = vector.broadcast %464 : vector<8x1xf32> to vector<8x32xf32>
    %535 = arith.mulf %534, %516 : vector<8x32xf32>
    %cst_122 = arith.constant 1.000000e+00 : f32
    %536 = vector.broadcast %cst_122 : f32 to vector<8x1xf32>
    %537 = arith.subf %536, %464 : vector<8x1xf32>
    %538 = vector.broadcast %537 : vector<8x1xf32> to vector<8x32xf32>
    %539 = arith.mulf %538, %452 : vector<8x32xf32>
    %540 = arith.addf %535, %539 : vector<8x32xf32>
    %541 = vector.broadcast %468 : vector<8x1xf32> to vector<8x32xf32>
    %542 = arith.mulf %541, %521 : vector<8x32xf32>
    %cst_123 = arith.constant 1.000000e+00 : f32
    %543 = vector.broadcast %cst_123 : f32 to vector<8x1xf32>
    %544 = arith.subf %543, %468 : vector<8x1xf32>
    %545 = vector.broadcast %544 : vector<8x1xf32> to vector<8x32xf32>
    %546 = arith.mulf %545, %459 : vector<8x32xf32>
    %547 = arith.addf %542, %546 : vector<8x32xf32>
    %c6_i32 = arith.constant 6 : i32
    %c11_i32_124 = arith.constant 11 : i32
    %548 = arith.subi %c11_i32_124, %c6_i32 : i32
    %549 = arith.index_cast %c6_i32 : i32 to index
    %c0_125 = arith.constant 0 : index
    %550 = vector.load %arg7[%549, %c0_125] : memref<12x8xf32, #tpu.memory_space<vmem>>, vector<1x8xf32>
    %551 = vector.shape_cast %550 : vector<1x8xf32> to vector<8xf32>
    %552 = vector.shape_cast %551 : vector<8xf32> to vector<8x1xf32>
    %553 = arith.index_cast %548 : i32 to index
    %c0_126 = arith.constant 0 : index
    %554 = vector.load %arg7[%553, %c0_126] : memref<12x8xf32, #tpu.memory_space<vmem>>, vector<1x8xf32>
    %555 = vector.shape_cast %554 : vector<1x8xf32> to vector<8xf32>
    %556 = vector.shape_cast %555 : vector<8xf32> to vector<8x1xf32>
    %557 = arith.index_cast %c6_i32 : i32 to index
    %c0_127 = arith.constant 0 : index
    %c0_128 = arith.constant 0 : index
    %558 = vector.load %arg8[%557, %c0_127, %c0_128] : memref<12x8x192xf32, #tpu.memory_space<vmem>>, vector<1x8x96xf32>
    %559 = vector.shape_cast %558 : vector<1x8x96xf32> to vector<8x96xf32>
    %560 = arith.index_cast %548 : i32 to index
    %c0_129 = arith.constant 0 : index
    %c96_130 = arith.constant 96 : index
    %561 = vector.load %arg8[%560, %c0_129, %c96_130] : memref<12x8x192xf32, #tpu.memory_space<vmem>>, vector<1x8x96xf32>
    %562 = vector.shape_cast %561 : vector<1x8x96xf32> to vector<8x96xf32>
    %563 = tpu.concatenate %540, %547 in 1 : vector<8x32xf32>, vector<8x32xf32> -> vector<8x64xf32>
    %564 = arith.truncf %563 : vector<8x64xf32> to vector<8x64xbf16>
    %cst_131 = arith.constant dense<0.000000e+00> : vector<8x192xf32>
    %565 = tpu.matmul %564, %15, %cst_131 {dimension_numbers = #tpu.dot_dimension_numbers<[1], [0], [0], [1], [0, 0, 1, 1], [], []>} : vector<8x64xbf16>, vector<64x192xbf16>, vector<8x192xf32> -> vector<8x192xf32>
    %566 = vector.extract_strided_slice %559 {offsets = [0, 0], sizes = [8, 64], strides = [1, 1]} : vector<8x96xf32> to vector<8x64xf32>
    %567 = vector.extract_strided_slice %565 {offsets = [0, 0], sizes = [8, 64], strides = [1, 1]} : vector<8x192xf32> to vector<8x64xf32>
    %568 = arith.addf %566, %567 : vector<8x64xf32>
    %569 = arith.negf %568 : vector<8x64xf32>
    %570 = math.exp %569 : vector<8x64xf32>
    %cst_132 = arith.constant 1.000000e+00 : f32
    %571 = vector.broadcast %cst_132 : f32 to vector<8x64xf32>
    %572 = arith.addf %571, %570 : vector<8x64xf32>
    %573 = arith.divf %571, %572 : vector<8x64xf32>
    %574 = vector.extract_strided_slice %562 {offsets = [0, 0], sizes = [8, 64], strides = [1, 1]} : vector<8x96xf32> to vector<8x64xf32>
    %575 = vector.extract_strided_slice %565 {offsets = [0, 96], sizes = [8, 64], strides = [1, 1]} : vector<8x192xf32> to vector<8x64xf32>
    %576 = arith.addf %574, %575 : vector<8x64xf32>
    %577 = arith.negf %576 : vector<8x64xf32>
    %578 = math.exp %577 : vector<8x64xf32>
    %cst_133 = arith.constant 1.000000e+00 : f32
    %579 = vector.broadcast %cst_133 : f32 to vector<8x64xf32>
    %580 = arith.addf %579, %578 : vector<8x64xf32>
    %581 = arith.divf %579, %580 : vector<8x64xf32>
    %582 = vector.extract_strided_slice %573 {offsets = [0, 0], sizes = [8, 32], strides = [1, 1]} : vector<8x64xf32> to vector<8x32xf32>
    %583 = vector.extract_strided_slice %573 {offsets = [0, 32], sizes = [8, 32], strides = [1, 1]} : vector<8x64xf32> to vector<8x32xf32>
    %584 = vector.extract_strided_slice %581 {offsets = [0, 0], sizes = [8, 32], strides = [1, 1]} : vector<8x64xf32> to vector<8x32xf32>
    %585 = vector.extract_strided_slice %581 {offsets = [0, 32], sizes = [8, 32], strides = [1, 1]} : vector<8x64xf32> to vector<8x32xf32>
    %586 = vector.extract_strided_slice %559 {offsets = [0, 64], sizes = [8, 32], strides = [1, 1]} : vector<8x96xf32> to vector<8x32xf32>
    %587 = vector.extract_strided_slice %565 {offsets = [0, 64], sizes = [8, 32], strides = [1, 1]} : vector<8x192xf32> to vector<8x32xf32>
    %588 = vector.broadcast %17 : vector<1x32xf32> to vector<8x32xf32>
    %589 = arith.addf %587, %588 : vector<8x32xf32>
    %590 = arith.mulf %582, %589 : vector<8x32xf32>
    %591 = arith.addf %586, %590 : vector<8x32xf32>
    %592 = math.tanh %591 : vector<8x32xf32>
    %593 = vector.extract_strided_slice %562 {offsets = [0, 64], sizes = [8, 32], strides = [1, 1]} : vector<8x96xf32> to vector<8x32xf32>
    %594 = vector.extract_strided_slice %565 {offsets = [0, 160], sizes = [8, 32], strides = [1, 1]} : vector<8x192xf32> to vector<8x32xf32>
    %595 = vector.broadcast %18 : vector<1x32xf32> to vector<8x32xf32>
    %596 = arith.addf %594, %595 : vector<8x32xf32>
    %597 = arith.mulf %584, %596 : vector<8x32xf32>
    %598 = arith.addf %593, %597 : vector<8x32xf32>
    %599 = math.tanh %598 : vector<8x32xf32>
    %cst_134 = arith.constant 1.000000e+00 : f32
    %600 = vector.broadcast %cst_134 : f32 to vector<8x32xf32>
    %601 = arith.subf %600, %583 : vector<8x32xf32>
    %602 = arith.mulf %601, %592 : vector<8x32xf32>
    %603 = arith.mulf %583, %540 : vector<8x32xf32>
    %604 = arith.addf %602, %603 : vector<8x32xf32>
    %cst_135 = arith.constant 1.000000e+00 : f32
    %605 = vector.broadcast %cst_135 : f32 to vector<8x32xf32>
    %606 = arith.subf %605, %585 : vector<8x32xf32>
    %607 = arith.mulf %606, %599 : vector<8x32xf32>
    %608 = arith.mulf %585, %547 : vector<8x32xf32>
    %609 = arith.addf %607, %608 : vector<8x32xf32>
    %610 = vector.broadcast %552 : vector<8x1xf32> to vector<8x32xf32>
    %611 = arith.mulf %604, %610 : vector<8x32xf32>
    %612 = arith.index_cast %c6_i32 : i32 to index
    %c0_136 = arith.constant 0 : index
    %c0_137 = arith.constant 0 : index
    %613 = vector.load %arg6[%612, %c0_136, %c0_137] : memref<12x8x64xf32, #tpu.memory_space<vmem>>, vector<1x8x32xf32>
    %614 = vector.shape_cast %613 : vector<1x8x32xf32> to vector<8x32xf32>
    %615 = vector.shape_cast %611 : vector<8x32xf32> to vector<1x8x32xf32>
    tpu.vector_store %arg6[%612, %c0_136, %c0_137], %615 {strides = array<i32>} : memref<12x8x64xf32, #tpu.memory_space<vmem>>, vector<1x8x32xf32>,
    %616 = vector.broadcast %556 : vector<8x1xf32> to vector<8x32xf32>
    %617 = arith.mulf %609, %616 : vector<8x32xf32>
    %618 = arith.index_cast %548 : i32 to index
    %c0_138 = arith.constant 0 : index
    %c32_139 = arith.constant 32 : index
    %619 = vector.load %arg6[%618, %c0_138, %c32_139] : memref<12x8x64xf32, #tpu.memory_space<vmem>>, vector<1x8x32xf32>
    %620 = vector.shape_cast %619 : vector<1x8x32xf32> to vector<8x32xf32>
    %621 = vector.shape_cast %617 : vector<8x32xf32> to vector<1x8x32xf32>
    tpu.vector_store %arg6[%618, %c0_138, %c32_139], %621 {strides = array<i32>} : memref<12x8x64xf32, #tpu.memory_space<vmem>>, vector<1x8x32xf32>,
    %622 = vector.broadcast %552 : vector<8x1xf32> to vector<8x32xf32>
    %623 = arith.mulf %622, %604 : vector<8x32xf32>
    %cst_140 = arith.constant 1.000000e+00 : f32
    %624 = vector.broadcast %cst_140 : f32 to vector<8x1xf32>
    %625 = arith.subf %624, %552 : vector<8x1xf32>
    %626 = vector.broadcast %625 : vector<8x1xf32> to vector<8x32xf32>
    %627 = arith.mulf %626, %540 : vector<8x32xf32>
    %628 = arith.addf %623, %627 : vector<8x32xf32>
    %629 = vector.broadcast %556 : vector<8x1xf32> to vector<8x32xf32>
    %630 = arith.mulf %629, %609 : vector<8x32xf32>
    %cst_141 = arith.constant 1.000000e+00 : f32
    %631 = vector.broadcast %cst_141 : f32 to vector<8x1xf32>
    %632 = arith.subf %631, %556 : vector<8x1xf32>
    %633 = vector.broadcast %632 : vector<8x1xf32> to vector<8x32xf32>
    %634 = arith.mulf %633, %547 : vector<8x32xf32>
    %635 = arith.addf %630, %634 : vector<8x32xf32>
    %c7_i32 = arith.constant 7 : i32
    %c11_i32_142 = arith.constant 11 : i32
    %636 = arith.subi %c11_i32_142, %c7_i32 : i32
    %637 = arith.index_cast %c7_i32 : i32 to index
    %c0_143 = arith.constant 0 : index
    %638 = vector.load %arg7[%637, %c0_143] : memref<12x8xf32, #tpu.memory_space<vmem>>, vector<1x8xf32>
    %639 = vector.shape_cast %638 : vector<1x8xf32> to vector<8xf32>
    %640 = vector.shape_cast %639 : vector<8xf32> to vector<8x1xf32>
    %641 = arith.index_cast %636 : i32 to index
    %c0_144 = arith.constant 0 : index
    %642 = vector.load %arg7[%641, %c0_144] : memref<12x8xf32, #tpu.memory_space<vmem>>, vector<1x8xf32>
    %643 = vector.shape_cast %642 : vector<1x8xf32> to vector<8xf32>
    %644 = vector.shape_cast %643 : vector<8xf32> to vector<8x1xf32>
    %645 = arith.index_cast %c7_i32 : i32 to index
    %c0_145 = arith.constant 0 : index
    %c0_146 = arith.constant 0 : index
    %646 = vector.load %arg8[%645, %c0_145, %c0_146] : memref<12x8x192xf32, #tpu.memory_space<vmem>>, vector<1x8x96xf32>
    %647 = vector.shape_cast %646 : vector<1x8x96xf32> to vector<8x96xf32>
    %648 = arith.index_cast %636 : i32 to index
    %c0_147 = arith.constant 0 : index
    %c96_148 = arith.constant 96 : index
    %649 = vector.load %arg8[%648, %c0_147, %c96_148] : memref<12x8x192xf32, #tpu.memory_space<vmem>>, vector<1x8x96xf32>
    %650 = vector.shape_cast %649 : vector<1x8x96xf32> to vector<8x96xf32>
    %651 = tpu.concatenate %628, %635 in 1 : vector<8x32xf32>, vector<8x32xf32> -> vector<8x64xf32>
    %652 = arith.truncf %651 : vector<8x64xf32> to vector<8x64xbf16>
    %cst_149 = arith.constant dense<0.000000e+00> : vector<8x192xf32>
    %653 = tpu.matmul %652, %15, %cst_149 {dimension_numbers = #tpu.dot_dimension_numbers<[1], [0], [0], [1], [0, 0, 1, 1], [], []>} : vector<8x64xbf16>, vector<64x192xbf16>, vector<8x192xf32> -> vector<8x192xf32>
    %654 = vector.extract_strided_slice %647 {offsets = [0, 0], sizes = [8, 64], strides = [1, 1]} : vector<8x96xf32> to vector<8x64xf32>
    %655 = vector.extract_strided_slice %653 {offsets = [0, 0], sizes = [8, 64], strides = [1, 1]} : vector<8x192xf32> to vector<8x64xf32>
    %656 = arith.addf %654, %655 : vector<8x64xf32>
    %657 = arith.negf %656 : vector<8x64xf32>
    %658 = math.exp %657 : vector<8x64xf32>
    %cst_150 = arith.constant 1.000000e+00 : f32
    %659 = vector.broadcast %cst_150 : f32 to vector<8x64xf32>
    %660 = arith.addf %659, %658 : vector<8x64xf32>
    %661 = arith.divf %659, %660 : vector<8x64xf32>
    %662 = vector.extract_strided_slice %650 {offsets = [0, 0], sizes = [8, 64], strides = [1, 1]} : vector<8x96xf32> to vector<8x64xf32>
    %663 = vector.extract_strided_slice %653 {offsets = [0, 96], sizes = [8, 64], strides = [1, 1]} : vector<8x192xf32> to vector<8x64xf32>
    %664 = arith.addf %662, %663 : vector<8x64xf32>
    %665 = arith.negf %664 : vector<8x64xf32>
    %666 = math.exp %665 : vector<8x64xf32>
    %cst_151 = arith.constant 1.000000e+00 : f32
    %667 = vector.broadcast %cst_151 : f32 to vector<8x64xf32>
    %668 = arith.addf %667, %666 : vector<8x64xf32>
    %669 = arith.divf %667, %668 : vector<8x64xf32>
    %670 = vector.extract_strided_slice %661 {offsets = [0, 0], sizes = [8, 32], strides = [1, 1]} : vector<8x64xf32> to vector<8x32xf32>
    %671 = vector.extract_strided_slice %661 {offsets = [0, 32], sizes = [8, 32], strides = [1, 1]} : vector<8x64xf32> to vector<8x32xf32>
    %672 = vector.extract_strided_slice %669 {offsets = [0, 0], sizes = [8, 32], strides = [1, 1]} : vector<8x64xf32> to vector<8x32xf32>
    %673 = vector.extract_strided_slice %669 {offsets = [0, 32], sizes = [8, 32], strides = [1, 1]} : vector<8x64xf32> to vector<8x32xf32>
    %674 = vector.extract_strided_slice %647 {offsets = [0, 64], sizes = [8, 32], strides = [1, 1]} : vector<8x96xf32> to vector<8x32xf32>
    %675 = vector.extract_strided_slice %653 {offsets = [0, 64], sizes = [8, 32], strides = [1, 1]} : vector<8x192xf32> to vector<8x32xf32>
    %676 = vector.broadcast %17 : vector<1x32xf32> to vector<8x32xf32>
    %677 = arith.addf %675, %676 : vector<8x32xf32>
    %678 = arith.mulf %670, %677 : vector<8x32xf32>
    %679 = arith.addf %674, %678 : vector<8x32xf32>
    %680 = math.tanh %679 : vector<8x32xf32>
    %681 = vector.extract_strided_slice %650 {offsets = [0, 64], sizes = [8, 32], strides = [1, 1]} : vector<8x96xf32> to vector<8x32xf32>
    %682 = vector.extract_strided_slice %653 {offsets = [0, 160], sizes = [8, 32], strides = [1, 1]} : vector<8x192xf32> to vector<8x32xf32>
    %683 = vector.broadcast %18 : vector<1x32xf32> to vector<8x32xf32>
    %684 = arith.addf %682, %683 : vector<8x32xf32>
    %685 = arith.mulf %672, %684 : vector<8x32xf32>
    %686 = arith.addf %681, %685 : vector<8x32xf32>
    %687 = math.tanh %686 : vector<8x32xf32>
    %cst_152 = arith.constant 1.000000e+00 : f32
    %688 = vector.broadcast %cst_152 : f32 to vector<8x32xf32>
    %689 = arith.subf %688, %671 : vector<8x32xf32>
    %690 = arith.mulf %689, %680 : vector<8x32xf32>
    %691 = arith.mulf %671, %628 : vector<8x32xf32>
    %692 = arith.addf %690, %691 : vector<8x32xf32>
    %cst_153 = arith.constant 1.000000e+00 : f32
    %693 = vector.broadcast %cst_153 : f32 to vector<8x32xf32>
    %694 = arith.subf %693, %673 : vector<8x32xf32>
    %695 = arith.mulf %694, %687 : vector<8x32xf32>
    %696 = arith.mulf %673, %635 : vector<8x32xf32>
    %697 = arith.addf %695, %696 : vector<8x32xf32>
    %698 = vector.broadcast %640 : vector<8x1xf32> to vector<8x32xf32>
    %699 = arith.mulf %692, %698 : vector<8x32xf32>
    %700 = arith.index_cast %c7_i32 : i32 to index
    %c0_154 = arith.constant 0 : index
    %c0_155 = arith.constant 0 : index
    %701 = vector.load %arg6[%700, %c0_154, %c0_155] : memref<12x8x64xf32, #tpu.memory_space<vmem>>, vector<1x8x32xf32>
    %702 = vector.shape_cast %701 : vector<1x8x32xf32> to vector<8x32xf32>
    %703 = vector.shape_cast %699 : vector<8x32xf32> to vector<1x8x32xf32>
    tpu.vector_store %arg6[%700, %c0_154, %c0_155], %703 {strides = array<i32>} : memref<12x8x64xf32, #tpu.memory_space<vmem>>, vector<1x8x32xf32>,
    %704 = vector.broadcast %644 : vector<8x1xf32> to vector<8x32xf32>
    %705 = arith.mulf %697, %704 : vector<8x32xf32>
    %706 = arith.index_cast %636 : i32 to index
    %c0_156 = arith.constant 0 : index
    %c32_157 = arith.constant 32 : index
    %707 = vector.load %arg6[%706, %c0_156, %c32_157] : memref<12x8x64xf32, #tpu.memory_space<vmem>>, vector<1x8x32xf32>
    %708 = vector.shape_cast %707 : vector<1x8x32xf32> to vector<8x32xf32>
    %709 = vector.shape_cast %705 : vector<8x32xf32> to vector<1x8x32xf32>
    tpu.vector_store %arg6[%706, %c0_156, %c32_157], %709 {strides = array<i32>} : memref<12x8x64xf32, #tpu.memory_space<vmem>>, vector<1x8x32xf32>,
    %710 = vector.broadcast %640 : vector<8x1xf32> to vector<8x32xf32>
    %711 = arith.mulf %710, %692 : vector<8x32xf32>
    %cst_158 = arith.constant 1.000000e+00 : f32
    %712 = vector.broadcast %cst_158 : f32 to vector<8x1xf32>
    %713 = arith.subf %712, %640 : vector<8x1xf32>
    %714 = vector.broadcast %713 : vector<8x1xf32> to vector<8x32xf32>
    %715 = arith.mulf %714, %628 : vector<8x32xf32>
    %716 = arith.addf %711, %715 : vector<8x32xf32>
    %717 = vector.broadcast %644 : vector<8x1xf32> to vector<8x32xf32>
    %718 = arith.mulf %717, %697 : vector<8x32xf32>
    %cst_159 = arith.constant 1.000000e+00 : f32
    %719 = vector.broadcast %cst_159 : f32 to vector<8x1xf32>
    %720 = arith.subf %719, %644 : vector<8x1xf32>
    %721 = vector.broadcast %720 : vector<8x1xf32> to vector<8x32xf32>
    %722 = arith.mulf %721, %635 : vector<8x32xf32>
    %723 = arith.addf %718, %722 : vector<8x32xf32>
    %c8_i32 = arith.constant 8 : i32
    %c11_i32_160 = arith.constant 11 : i32
    %724 = arith.subi %c11_i32_160, %c8_i32 : i32
    %725 = arith.index_cast %c8_i32 : i32 to index
    %c0_161 = arith.constant 0 : index
    %726 = vector.load %arg7[%725, %c0_161] : memref<12x8xf32, #tpu.memory_space<vmem>>, vector<1x8xf32>
    %727 = vector.shape_cast %726 : vector<1x8xf32> to vector<8xf32>
    %728 = vector.shape_cast %727 : vector<8xf32> to vector<8x1xf32>
    %729 = arith.index_cast %724 : i32 to index
    %c0_162 = arith.constant 0 : index
    %730 = vector.load %arg7[%729, %c0_162] : memref<12x8xf32, #tpu.memory_space<vmem>>, vector<1x8xf32>
    %731 = vector.shape_cast %730 : vector<1x8xf32> to vector<8xf32>
    %732 = vector.shape_cast %731 : vector<8xf32> to vector<8x1xf32>
    %733 = arith.index_cast %c8_i32 : i32 to index
    %c0_163 = arith.constant 0 : index
    %c0_164 = arith.constant 0 : index
    %734 = vector.load %arg8[%733, %c0_163, %c0_164] : memref<12x8x192xf32, #tpu.memory_space<vmem>>, vector<1x8x96xf32>
    %735 = vector.shape_cast %734 : vector<1x8x96xf32> to vector<8x96xf32>
    %736 = arith.index_cast %724 : i32 to index
    %c0_165 = arith.constant 0 : index
    %c96_166 = arith.constant 96 : index
    %737 = vector.load %arg8[%736, %c0_165, %c96_166] : memref<12x8x192xf32, #tpu.memory_space<vmem>>, vector<1x8x96xf32>
    %738 = vector.shape_cast %737 : vector<1x8x96xf32> to vector<8x96xf32>
    %739 = tpu.concatenate %716, %723 in 1 : vector<8x32xf32>, vector<8x32xf32> -> vector<8x64xf32>
    %740 = arith.truncf %739 : vector<8x64xf32> to vector<8x64xbf16>
    %cst_167 = arith.constant dense<0.000000e+00> : vector<8x192xf32>
    %741 = tpu.matmul %740, %15, %cst_167 {dimension_numbers = #tpu.dot_dimension_numbers<[1], [0], [0], [1], [0, 0, 1, 1], [], []>} : vector<8x64xbf16>, vector<64x192xbf16>, vector<8x192xf32> -> vector<8x192xf32>
    %742 = vector.extract_strided_slice %735 {offsets = [0, 0], sizes = [8, 64], strides = [1, 1]} : vector<8x96xf32> to vector<8x64xf32>
    %743 = vector.extract_strided_slice %741 {offsets = [0, 0], sizes = [8, 64], strides = [1, 1]} : vector<8x192xf32> to vector<8x64xf32>
    %744 = arith.addf %742, %743 : vector<8x64xf32>
    %745 = arith.negf %744 : vector<8x64xf32>
    %746 = math.exp %745 : vector<8x64xf32>
    %cst_168 = arith.constant 1.000000e+00 : f32
    %747 = vector.broadcast %cst_168 : f32 to vector<8x64xf32>
    %748 = arith.addf %747, %746 : vector<8x64xf32>
    %749 = arith.divf %747, %748 : vector<8x64xf32>
    %750 = vector.extract_strided_slice %738 {offsets = [0, 0], sizes = [8, 64], strides = [1, 1]} : vector<8x96xf32> to vector<8x64xf32>
    %751 = vector.extract_strided_slice %741 {offsets = [0, 96], sizes = [8, 64], strides = [1, 1]} : vector<8x192xf32> to vector<8x64xf32>
    %752 = arith.addf %750, %751 : vector<8x64xf32>
    %753 = arith.negf %752 : vector<8x64xf32>
    %754 = math.exp %753 : vector<8x64xf32>
    %cst_169 = arith.constant 1.000000e+00 : f32
    %755 = vector.broadcast %cst_169 : f32 to vector<8x64xf32>
    %756 = arith.addf %755, %754 : vector<8x64xf32>
    %757 = arith.divf %755, %756 : vector<8x64xf32>
    %758 = vector.extract_strided_slice %749 {offsets = [0, 0], sizes = [8, 32], strides = [1, 1]} : vector<8x64xf32> to vector<8x32xf32>
    %759 = vector.extract_strided_slice %749 {offsets = [0, 32], sizes = [8, 32], strides = [1, 1]} : vector<8x64xf32> to vector<8x32xf32>
    %760 = vector.extract_strided_slice %757 {offsets = [0, 0], sizes = [8, 32], strides = [1, 1]} : vector<8x64xf32> to vector<8x32xf32>
    %761 = vector.extract_strided_slice %757 {offsets = [0, 32], sizes = [8, 32], strides = [1, 1]} : vector<8x64xf32> to vector<8x32xf32>
    %762 = vector.extract_strided_slice %735 {offsets = [0, 64], sizes = [8, 32], strides = [1, 1]} : vector<8x96xf32> to vector<8x32xf32>
    %763 = vector.extract_strided_slice %741 {offsets = [0, 64], sizes = [8, 32], strides = [1, 1]} : vector<8x192xf32> to vector<8x32xf32>
    %764 = vector.broadcast %17 : vector<1x32xf32> to vector<8x32xf32>
    %765 = arith.addf %763, %764 : vector<8x32xf32>
    %766 = arith.mulf %758, %765 : vector<8x32xf32>
    %767 = arith.addf %762, %766 : vector<8x32xf32>
    %768 = math.tanh %767 : vector<8x32xf32>
    %769 = vector.extract_strided_slice %738 {offsets = [0, 64], sizes = [8, 32], strides = [1, 1]} : vector<8x96xf32> to vector<8x32xf32>
    %770 = vector.extract_strided_slice %741 {offsets = [0, 160], sizes = [8, 32], strides = [1, 1]} : vector<8x192xf32> to vector<8x32xf32>
    %771 = vector.broadcast %18 : vector<1x32xf32> to vector<8x32xf32>
    %772 = arith.addf %770, %771 : vector<8x32xf32>
    %773 = arith.mulf %760, %772 : vector<8x32xf32>
    %774 = arith.addf %769, %773 : vector<8x32xf32>
    %775 = math.tanh %774 : vector<8x32xf32>
    %cst_170 = arith.constant 1.000000e+00 : f32
    %776 = vector.broadcast %cst_170 : f32 to vector<8x32xf32>
    %777 = arith.subf %776, %759 : vector<8x32xf32>
    %778 = arith.mulf %777, %768 : vector<8x32xf32>
    %779 = arith.mulf %759, %716 : vector<8x32xf32>
    %780 = arith.addf %778, %779 : vector<8x32xf32>
    %cst_171 = arith.constant 1.000000e+00 : f32
    %781 = vector.broadcast %cst_171 : f32 to vector<8x32xf32>
    %782 = arith.subf %781, %761 : vector<8x32xf32>
    %783 = arith.mulf %782, %775 : vector<8x32xf32>
    %784 = arith.mulf %761, %723 : vector<8x32xf32>
    %785 = arith.addf %783, %784 : vector<8x32xf32>
    %786 = vector.broadcast %728 : vector<8x1xf32> to vector<8x32xf32>
    %787 = arith.mulf %780, %786 : vector<8x32xf32>
    %788 = arith.index_cast %c8_i32 : i32 to index
    %c0_172 = arith.constant 0 : index
    %c0_173 = arith.constant 0 : index
    %789 = vector.load %arg6[%788, %c0_172, %c0_173] : memref<12x8x64xf32, #tpu.memory_space<vmem>>, vector<1x8x32xf32>
    %790 = vector.shape_cast %789 : vector<1x8x32xf32> to vector<8x32xf32>
    %791 = vector.shape_cast %787 : vector<8x32xf32> to vector<1x8x32xf32>
    tpu.vector_store %arg6[%788, %c0_172, %c0_173], %791 {strides = array<i32>} : memref<12x8x64xf32, #tpu.memory_space<vmem>>, vector<1x8x32xf32>,
    %792 = vector.broadcast %732 : vector<8x1xf32> to vector<8x32xf32>
    %793 = arith.mulf %785, %792 : vector<8x32xf32>
    %794 = arith.index_cast %724 : i32 to index
    %c0_174 = arith.constant 0 : index
    %c32_175 = arith.constant 32 : index
    %795 = vector.load %arg6[%794, %c0_174, %c32_175] : memref<12x8x64xf32, #tpu.memory_space<vmem>>, vector<1x8x32xf32>
    %796 = vector.shape_cast %795 : vector<1x8x32xf32> to vector<8x32xf32>
    %797 = vector.shape_cast %793 : vector<8x32xf32> to vector<1x8x32xf32>
    tpu.vector_store %arg6[%794, %c0_174, %c32_175], %797 {strides = array<i32>} : memref<12x8x64xf32, #tpu.memory_space<vmem>>, vector<1x8x32xf32>,
    %798 = vector.broadcast %728 : vector<8x1xf32> to vector<8x32xf32>
    %799 = arith.mulf %798, %780 : vector<8x32xf32>
    %cst_176 = arith.constant 1.000000e+00 : f32
    %800 = vector.broadcast %cst_176 : f32 to vector<8x1xf32>
    %801 = arith.subf %800, %728 : vector<8x1xf32>
    %802 = vector.broadcast %801 : vector<8x1xf32> to vector<8x32xf32>
    %803 = arith.mulf %802, %716 : vector<8x32xf32>
    %804 = arith.addf %799, %803 : vector<8x32xf32>
    %805 = vector.broadcast %732 : vector<8x1xf32> to vector<8x32xf32>
    %806 = arith.mulf %805, %785 : vector<8x32xf32>
    %cst_177 = arith.constant 1.000000e+00 : f32
    %807 = vector.broadcast %cst_177 : f32 to vector<8x1xf32>
    %808 = arith.subf %807, %732 : vector<8x1xf32>
    %809 = vector.broadcast %808 : vector<8x1xf32> to vector<8x32xf32>
    %810 = arith.mulf %809, %723 : vector<8x32xf32>
    %811 = arith.addf %806, %810 : vector<8x32xf32>
    %c9_i32 = arith.constant 9 : i32
    %c11_i32_178 = arith.constant 11 : i32
    %812 = arith.subi %c11_i32_178, %c9_i32 : i32
    %813 = arith.index_cast %c9_i32 : i32 to index
    %c0_179 = arith.constant 0 : index
    %814 = vector.load %arg7[%813, %c0_179] : memref<12x8xf32, #tpu.memory_space<vmem>>, vector<1x8xf32>
    %815 = vector.shape_cast %814 : vector<1x8xf32> to vector<8xf32>
    %816 = vector.shape_cast %815 : vector<8xf32> to vector<8x1xf32>
    %817 = arith.index_cast %812 : i32 to index
    %c0_180 = arith.constant 0 : index
    %818 = vector.load %arg7[%817, %c0_180] : memref<12x8xf32, #tpu.memory_space<vmem>>, vector<1x8xf32>
    %819 = vector.shape_cast %818 : vector<1x8xf32> to vector<8xf32>
    %820 = vector.shape_cast %819 : vector<8xf32> to vector<8x1xf32>
    %821 = arith.index_cast %c9_i32 : i32 to index
    %c0_181 = arith.constant 0 : index
    %c0_182 = arith.constant 0 : index
    %822 = vector.load %arg8[%821, %c0_181, %c0_182] : memref<12x8x192xf32, #tpu.memory_space<vmem>>, vector<1x8x96xf32>
    %823 = vector.shape_cast %822 : vector<1x8x96xf32> to vector<8x96xf32>
    %824 = arith.index_cast %812 : i32 to index
    %c0_183 = arith.constant 0 : index
    %c96_184 = arith.constant 96 : index
    %825 = vector.load %arg8[%824, %c0_183, %c96_184] : memref<12x8x192xf32, #tpu.memory_space<vmem>>, vector<1x8x96xf32>
    %826 = vector.shape_cast %825 : vector<1x8x96xf32> to vector<8x96xf32>
    %827 = tpu.concatenate %804, %811 in 1 : vector<8x32xf32>, vector<8x32xf32> -> vector<8x64xf32>
    %828 = arith.truncf %827 : vector<8x64xf32> to vector<8x64xbf16>
    %cst_185 = arith.constant dense<0.000000e+00> : vector<8x192xf32>
    %829 = tpu.matmul %828, %15, %cst_185 {dimension_numbers = #tpu.dot_dimension_numbers<[1], [0], [0], [1], [0, 0, 1, 1], [], []>} : vector<8x64xbf16>, vector<64x192xbf16>, vector<8x192xf32> -> vector<8x192xf32>
    %830 = vector.extract_strided_slice %823 {offsets = [0, 0], sizes = [8, 64], strides = [1, 1]} : vector<8x96xf32> to vector<8x64xf32>
    %831 = vector.extract_strided_slice %829 {offsets = [0, 0], sizes = [8, 64], strides = [1, 1]} : vector<8x192xf32> to vector<8x64xf32>
    %832 = arith.addf %830, %831 : vector<8x64xf32>
    %833 = arith.negf %832 : vector<8x64xf32>
    %834 = math.exp %833 : vector<8x64xf32>
    %cst_186 = arith.constant 1.000000e+00 : f32
    %835 = vector.broadcast %cst_186 : f32 to vector<8x64xf32>
    %836 = arith.addf %835, %834 : vector<8x64xf32>
    %837 = arith.divf %835, %836 : vector<8x64xf32>
    %838 = vector.extract_strided_slice %826 {offsets = [0, 0], sizes = [8, 64], strides = [1, 1]} : vector<8x96xf32> to vector<8x64xf32>
    %839 = vector.extract_strided_slice %829 {offsets = [0, 96], sizes = [8, 64], strides = [1, 1]} : vector<8x192xf32> to vector<8x64xf32>
    %840 = arith.addf %838, %839 : vector<8x64xf32>
    %841 = arith.negf %840 : vector<8x64xf32>
    %842 = math.exp %841 : vector<8x64xf32>
    %cst_187 = arith.constant 1.000000e+00 : f32
    %843 = vector.broadcast %cst_187 : f32 to vector<8x64xf32>
    %844 = arith.addf %843, %842 : vector<8x64xf32>
    %845 = arith.divf %843, %844 : vector<8x64xf32>
    %846 = vector.extract_strided_slice %837 {offsets = [0, 0], sizes = [8, 32], strides = [1, 1]} : vector<8x64xf32> to vector<8x32xf32>
    %847 = vector.extract_strided_slice %837 {offsets = [0, 32], sizes = [8, 32], strides = [1, 1]} : vector<8x64xf32> to vector<8x32xf32>
    %848 = vector.extract_strided_slice %845 {offsets = [0, 0], sizes = [8, 32], strides = [1, 1]} : vector<8x64xf32> to vector<8x32xf32>
    %849 = vector.extract_strided_slice %845 {offsets = [0, 32], sizes = [8, 32], strides = [1, 1]} : vector<8x64xf32> to vector<8x32xf32>
    %850 = vector.extract_strided_slice %823 {offsets = [0, 64], sizes = [8, 32], strides = [1, 1]} : vector<8x96xf32> to vector<8x32xf32>
    %851 = vector.extract_strided_slice %829 {offsets = [0, 64], sizes = [8, 32], strides = [1, 1]} : vector<8x192xf32> to vector<8x32xf32>
    %852 = vector.broadcast %17 : vector<1x32xf32> to vector<8x32xf32>
    %853 = arith.addf %851, %852 : vector<8x32xf32>
    %854 = arith.mulf %846, %853 : vector<8x32xf32>
    %855 = arith.addf %850, %854 : vector<8x32xf32>
    %856 = math.tanh %855 : vector<8x32xf32>
    %857 = vector.extract_strided_slice %826 {offsets = [0, 64], sizes = [8, 32], strides = [1, 1]} : vector<8x96xf32> to vector<8x32xf32>
    %858 = vector.extract_strided_slice %829 {offsets = [0, 160], sizes = [8, 32], strides = [1, 1]} : vector<8x192xf32> to vector<8x32xf32>
    %859 = vector.broadcast %18 : vector<1x32xf32> to vector<8x32xf32>
    %860 = arith.addf %858, %859 : vector<8x32xf32>
    %861 = arith.mulf %848, %860 : vector<8x32xf32>
    %862 = arith.addf %857, %861 : vector<8x32xf32>
    %863 = math.tanh %862 : vector<8x32xf32>
    %cst_188 = arith.constant 1.000000e+00 : f32
    %864 = vector.broadcast %cst_188 : f32 to vector<8x32xf32>
    %865 = arith.subf %864, %847 : vector<8x32xf32>
    %866 = arith.mulf %865, %856 : vector<8x32xf32>
    %867 = arith.mulf %847, %804 : vector<8x32xf32>
    %868 = arith.addf %866, %867 : vector<8x32xf32>
    %cst_189 = arith.constant 1.000000e+00 : f32
    %869 = vector.broadcast %cst_189 : f32 to vector<8x32xf32>
    %870 = arith.subf %869, %849 : vector<8x32xf32>
    %871 = arith.mulf %870, %863 : vector<8x32xf32>
    %872 = arith.mulf %849, %811 : vector<8x32xf32>
    %873 = arith.addf %871, %872 : vector<8x32xf32>
    %874 = vector.broadcast %816 : vector<8x1xf32> to vector<8x32xf32>
    %875 = arith.mulf %868, %874 : vector<8x32xf32>
    %876 = arith.index_cast %c9_i32 : i32 to index
    %c0_190 = arith.constant 0 : index
    %c0_191 = arith.constant 0 : index
    %877 = vector.load %arg6[%876, %c0_190, %c0_191] : memref<12x8x64xf32, #tpu.memory_space<vmem>>, vector<1x8x32xf32>
    %878 = vector.shape_cast %877 : vector<1x8x32xf32> to vector<8x32xf32>
    %879 = vector.shape_cast %875 : vector<8x32xf32> to vector<1x8x32xf32>
    tpu.vector_store %arg6[%876, %c0_190, %c0_191], %879 {strides = array<i32>} : memref<12x8x64xf32, #tpu.memory_space<vmem>>, vector<1x8x32xf32>,
    %880 = vector.broadcast %820 : vector<8x1xf32> to vector<8x32xf32>
    %881 = arith.mulf %873, %880 : vector<8x32xf32>
    %882 = arith.index_cast %812 : i32 to index
    %c0_192 = arith.constant 0 : index
    %c32_193 = arith.constant 32 : index
    %883 = vector.load %arg6[%882, %c0_192, %c32_193] : memref<12x8x64xf32, #tpu.memory_space<vmem>>, vector<1x8x32xf32>
    %884 = vector.shape_cast %883 : vector<1x8x32xf32> to vector<8x32xf32>
    %885 = vector.shape_cast %881 : vector<8x32xf32> to vector<1x8x32xf32>
    tpu.vector_store %arg6[%882, %c0_192, %c32_193], %885 {strides = array<i32>} : memref<12x8x64xf32, #tpu.memory_space<vmem>>, vector<1x8x32xf32>,
    %886 = vector.broadcast %816 : vector<8x1xf32> to vector<8x32xf32>
    %887 = arith.mulf %886, %868 : vector<8x32xf32>
    %cst_194 = arith.constant 1.000000e+00 : f32
    %888 = vector.broadcast %cst_194 : f32 to vector<8x1xf32>
    %889 = arith.subf %888, %816 : vector<8x1xf32>
    %890 = vector.broadcast %889 : vector<8x1xf32> to vector<8x32xf32>
    %891 = arith.mulf %890, %804 : vector<8x32xf32>
    %892 = arith.addf %887, %891 : vector<8x32xf32>
    %893 = vector.broadcast %820 : vector<8x1xf32> to vector<8x32xf32>
    %894 = arith.mulf %893, %873 : vector<8x32xf32>
    %cst_195 = arith.constant 1.000000e+00 : f32
    %895 = vector.broadcast %cst_195 : f32 to vector<8x1xf32>
    %896 = arith.subf %895, %820 : vector<8x1xf32>
    %897 = vector.broadcast %896 : vector<8x1xf32> to vector<8x32xf32>
    %898 = arith.mulf %897, %811 : vector<8x32xf32>
    %899 = arith.addf %894, %898 : vector<8x32xf32>
    %c10_i32 = arith.constant 10 : i32
    %c11_i32_196 = arith.constant 11 : i32
    %900 = arith.subi %c11_i32_196, %c10_i32 : i32
    %901 = arith.index_cast %c10_i32 : i32 to index
    %c0_197 = arith.constant 0 : index
    %902 = vector.load %arg7[%901, %c0_197] : memref<12x8xf32, #tpu.memory_space<vmem>>, vector<1x8xf32>
    %903 = vector.shape_cast %902 : vector<1x8xf32> to vector<8xf32>
    %904 = vector.shape_cast %903 : vector<8xf32> to vector<8x1xf32>
    %905 = arith.index_cast %900 : i32 to index
    %c0_198 = arith.constant 0 : index
    %906 = vector.load %arg7[%905, %c0_198] : memref<12x8xf32, #tpu.memory_space<vmem>>, vector<1x8xf32>
    %907 = vector.shape_cast %906 : vector<1x8xf32> to vector<8xf32>
    %908 = vector.shape_cast %907 : vector<8xf32> to vector<8x1xf32>
    %909 = arith.index_cast %c10_i32 : i32 to index
    %c0_199 = arith.constant 0 : index
    %c0_200 = arith.constant 0 : index
    %910 = vector.load %arg8[%909, %c0_199, %c0_200] : memref<12x8x192xf32, #tpu.memory_space<vmem>>, vector<1x8x96xf32>
    %911 = vector.shape_cast %910 : vector<1x8x96xf32> to vector<8x96xf32>
    %912 = arith.index_cast %900 : i32 to index
    %c0_201 = arith.constant 0 : index
    %c96_202 = arith.constant 96 : index
    %913 = vector.load %arg8[%912, %c0_201, %c96_202] : memref<12x8x192xf32, #tpu.memory_space<vmem>>, vector<1x8x96xf32>
    %914 = vector.shape_cast %913 : vector<1x8x96xf32> to vector<8x96xf32>
    %915 = tpu.concatenate %892, %899 in 1 : vector<8x32xf32>, vector<8x32xf32> -> vector<8x64xf32>
    %916 = arith.truncf %915 : vector<8x64xf32> to vector<8x64xbf16>
    %cst_203 = arith.constant dense<0.000000e+00> : vector<8x192xf32>
    %917 = tpu.matmul %916, %15, %cst_203 {dimension_numbers = #tpu.dot_dimension_numbers<[1], [0], [0], [1], [0, 0, 1, 1], [], []>} : vector<8x64xbf16>, vector<64x192xbf16>, vector<8x192xf32> -> vector<8x192xf32>
    %918 = vector.extract_strided_slice %911 {offsets = [0, 0], sizes = [8, 64], strides = [1, 1]} : vector<8x96xf32> to vector<8x64xf32>
    %919 = vector.extract_strided_slice %917 {offsets = [0, 0], sizes = [8, 64], strides = [1, 1]} : vector<8x192xf32> to vector<8x64xf32>
    %920 = arith.addf %918, %919 : vector<8x64xf32>
    %921 = arith.negf %920 : vector<8x64xf32>
    %922 = math.exp %921 : vector<8x64xf32>
    %cst_204 = arith.constant 1.000000e+00 : f32
    %923 = vector.broadcast %cst_204 : f32 to vector<8x64xf32>
    %924 = arith.addf %923, %922 : vector<8x64xf32>
    %925 = arith.divf %923, %924 : vector<8x64xf32>
    %926 = vector.extract_strided_slice %914 {offsets = [0, 0], sizes = [8, 64], strides = [1, 1]} : vector<8x96xf32> to vector<8x64xf32>
    %927 = vector.extract_strided_slice %917 {offsets = [0, 96], sizes = [8, 64], strides = [1, 1]} : vector<8x192xf32> to vector<8x64xf32>
    %928 = arith.addf %926, %927 : vector<8x64xf32>
    %929 = arith.negf %928 : vector<8x64xf32>
    %930 = math.exp %929 : vector<8x64xf32>
    %cst_205 = arith.constant 1.000000e+00 : f32
    %931 = vector.broadcast %cst_205 : f32 to vector<8x64xf32>
    %932 = arith.addf %931, %930 : vector<8x64xf32>
    %933 = arith.divf %931, %932 : vector<8x64xf32>
    %934 = vector.extract_strided_slice %925 {offsets = [0, 0], sizes = [8, 32], strides = [1, 1]} : vector<8x64xf32> to vector<8x32xf32>
    %935 = vector.extract_strided_slice %925 {offsets = [0, 32], sizes = [8, 32], strides = [1, 1]} : vector<8x64xf32> to vector<8x32xf32>
    %936 = vector.extract_strided_slice %933 {offsets = [0, 0], sizes = [8, 32], strides = [1, 1]} : vector<8x64xf32> to vector<8x32xf32>
    %937 = vector.extract_strided_slice %933 {offsets = [0, 32], sizes = [8, 32], strides = [1, 1]} : vector<8x64xf32> to vector<8x32xf32>
    %938 = vector.extract_strided_slice %911 {offsets = [0, 64], sizes = [8, 32], strides = [1, 1]} : vector<8x96xf32> to vector<8x32xf32>
    %939 = vector.extract_strided_slice %917 {offsets = [0, 64], sizes = [8, 32], strides = [1, 1]} : vector<8x192xf32> to vector<8x32xf32>
    %940 = vector.broadcast %17 : vector<1x32xf32> to vector<8x32xf32>
    %941 = arith.addf %939, %940 : vector<8x32xf32>
    %942 = arith.mulf %934, %941 : vector<8x32xf32>
    %943 = arith.addf %938, %942 : vector<8x32xf32>
    %944 = math.tanh %943 : vector<8x32xf32>
    %945 = vector.extract_strided_slice %914 {offsets = [0, 64], sizes = [8, 32], strides = [1, 1]} : vector<8x96xf32> to vector<8x32xf32>
    %946 = vector.extract_strided_slice %917 {offsets = [0, 160], sizes = [8, 32], strides = [1, 1]} : vector<8x192xf32> to vector<8x32xf32>
    %947 = vector.broadcast %18 : vector<1x32xf32> to vector<8x32xf32>
    %948 = arith.addf %946, %947 : vector<8x32xf32>
    %949 = arith.mulf %936, %948 : vector<8x32xf32>
    %950 = arith.addf %945, %949 : vector<8x32xf32>
    %951 = math.tanh %950 : vector<8x32xf32>
    %cst_206 = arith.constant 1.000000e+00 : f32
    %952 = vector.broadcast %cst_206 : f32 to vector<8x32xf32>
    %953 = arith.subf %952, %935 : vector<8x32xf32>
    %954 = arith.mulf %953, %944 : vector<8x32xf32>
    %955 = arith.mulf %935, %892 : vector<8x32xf32>
    %956 = arith.addf %954, %955 : vector<8x32xf32>
    %cst_207 = arith.constant 1.000000e+00 : f32
    %957 = vector.broadcast %cst_207 : f32 to vector<8x32xf32>
    %958 = arith.subf %957, %937 : vector<8x32xf32>
    %959 = arith.mulf %958, %951 : vector<8x32xf32>
    %960 = arith.mulf %937, %899 : vector<8x32xf32>
    %961 = arith.addf %959, %960 : vector<8x32xf32>
    %962 = vector.broadcast %904 : vector<8x1xf32> to vector<8x32xf32>
    %963 = arith.mulf %956, %962 : vector<8x32xf32>
    %964 = arith.index_cast %c10_i32 : i32 to index
    %c0_208 = arith.constant 0 : index
    %c0_209 = arith.constant 0 : index
    %965 = vector.load %arg6[%964, %c0_208, %c0_209] : memref<12x8x64xf32, #tpu.memory_space<vmem>>, vector<1x8x32xf32>
    %966 = vector.shape_cast %965 : vector<1x8x32xf32> to vector<8x32xf32>
    %967 = vector.shape_cast %963 : vector<8x32xf32> to vector<1x8x32xf32>
    tpu.vector_store %arg6[%964, %c0_208, %c0_209], %967 {strides = array<i32>} : memref<12x8x64xf32, #tpu.memory_space<vmem>>, vector<1x8x32xf32>,
    %968 = vector.broadcast %908 : vector<8x1xf32> to vector<8x32xf32>
    %969 = arith.mulf %961, %968 : vector<8x32xf32>
    %970 = arith.index_cast %900 : i32 to index
    %c0_210 = arith.constant 0 : index
    %c32_211 = arith.constant 32 : index
    %971 = vector.load %arg6[%970, %c0_210, %c32_211] : memref<12x8x64xf32, #tpu.memory_space<vmem>>, vector<1x8x32xf32>
    %972 = vector.shape_cast %971 : vector<1x8x32xf32> to vector<8x32xf32>
    %973 = vector.shape_cast %969 : vector<8x32xf32> to vector<1x8x32xf32>
    tpu.vector_store %arg6[%970, %c0_210, %c32_211], %973 {strides = array<i32>} : memref<12x8x64xf32, #tpu.memory_space<vmem>>, vector<1x8x32xf32>,
    %974 = vector.broadcast %904 : vector<8x1xf32> to vector<8x32xf32>
    %975 = arith.mulf %974, %956 : vector<8x32xf32>
    %cst_212 = arith.constant 1.000000e+00 : f32
    %976 = vector.broadcast %cst_212 : f32 to vector<8x1xf32>
    %977 = arith.subf %976, %904 : vector<8x1xf32>
    %978 = vector.broadcast %977 : vector<8x1xf32> to vector<8x32xf32>
    %979 = arith.mulf %978, %892 : vector<8x32xf32>
    %980 = arith.addf %975, %979 : vector<8x32xf32>
    %981 = vector.broadcast %908 : vector<8x1xf32> to vector<8x32xf32>
    %982 = arith.mulf %981, %961 : vector<8x32xf32>
    %cst_213 = arith.constant 1.000000e+00 : f32
    %983 = vector.broadcast %cst_213 : f32 to vector<8x1xf32>
    %984 = arith.subf %983, %908 : vector<8x1xf32>
    %985 = vector.broadcast %984 : vector<8x1xf32> to vector<8x32xf32>
    %986 = arith.mulf %985, %899 : vector<8x32xf32>
    %987 = arith.addf %982, %986 : vector<8x32xf32>
    %c11_i32_214 = arith.constant 11 : i32
    %c11_i32_215 = arith.constant 11 : i32
    %988 = arith.subi %c11_i32_215, %c11_i32_214 : i32
    %989 = arith.index_cast %c11_i32_214 : i32 to index
    %c0_216 = arith.constant 0 : index
    %990 = vector.load %arg7[%989, %c0_216] : memref<12x8xf32, #tpu.memory_space<vmem>>, vector<1x8xf32>
    %991 = vector.shape_cast %990 : vector<1x8xf32> to vector<8xf32>
    %992 = vector.shape_cast %991 : vector<8xf32> to vector<8x1xf32>
    %993 = arith.index_cast %988 : i32 to index
    %c0_217 = arith.constant 0 : index
    %994 = vector.load %arg7[%993, %c0_217] : memref<12x8xf32, #tpu.memory_space<vmem>>, vector<1x8xf32>
    %995 = vector.shape_cast %994 : vector<1x8xf32> to vector<8xf32>
    %996 = vector.shape_cast %995 : vector<8xf32> to vector<8x1xf32>
    %997 = arith.index_cast %c11_i32_214 : i32 to index
    %c0_218 = arith.constant 0 : index
    %c0_219 = arith.constant 0 : index
    %998 = vector.load %arg8[%997, %c0_218, %c0_219] : memref<12x8x192xf32, #tpu.memory_space<vmem>>, vector<1x8x96xf32>
    %999 = vector.shape_cast %998 : vector<1x8x96xf32> to vector<8x96xf32>
    %1000 = arith.index_cast %988 : i32 to index
    %c0_220 = arith.constant 0 : index
    %c96_221 = arith.constant 96 : index
    %1001 = vector.load %arg8[%1000, %c0_220, %c96_221] : memref<12x8x192xf32, #tpu.memory_space<vmem>>, vector<1x8x96xf32>
    %1002 = vector.shape_cast %1001 : vector<1x8x96xf32> to vector<8x96xf32>
    %1003 = tpu.concatenate %980, %987 in 1 : vector<8x32xf32>, vector<8x32xf32> -> vector<8x64xf32>
    %1004 = arith.truncf %1003 : vector<8x64xf32> to vector<8x64xbf16>
    %cst_222 = arith.constant dense<0.000000e+00> : vector<8x192xf32>
    %1005 = tpu.matmul %1004, %15, %cst_222 {dimension_numbers = #tpu.dot_dimension_numbers<[1], [0], [0], [1], [0, 0, 1, 1], [], []>} : vector<8x64xbf16>, vector<64x192xbf16>, vector<8x192xf32> -> vector<8x192xf32>
    %1006 = vector.extract_strided_slice %999 {offsets = [0, 0], sizes = [8, 64], strides = [1, 1]} : vector<8x96xf32> to vector<8x64xf32>
    %1007 = vector.extract_strided_slice %1005 {offsets = [0, 0], sizes = [8, 64], strides = [1, 1]} : vector<8x192xf32> to vector<8x64xf32>
    %1008 = arith.addf %1006, %1007 : vector<8x64xf32>
    %1009 = arith.negf %1008 : vector<8x64xf32>
    %1010 = math.exp %1009 : vector<8x64xf32>
    %cst_223 = arith.constant 1.000000e+00 : f32
    %1011 = vector.broadcast %cst_223 : f32 to vector<8x64xf32>
    %1012 = arith.addf %1011, %1010 : vector<8x64xf32>
    %1013 = arith.divf %1011, %1012 : vector<8x64xf32>
    %1014 = vector.extract_strided_slice %1002 {offsets = [0, 0], sizes = [8, 64], strides = [1, 1]} : vector<8x96xf32> to vector<8x64xf32>
    %1015 = vector.extract_strided_slice %1005 {offsets = [0, 96], sizes = [8, 64], strides = [1, 1]} : vector<8x192xf32> to vector<8x64xf32>
    %1016 = arith.addf %1014, %1015 : vector<8x64xf32>
    %1017 = arith.negf %1016 : vector<8x64xf32>
    %1018 = math.exp %1017 : vector<8x64xf32>
    %cst_224 = arith.constant 1.000000e+00 : f32
    %1019 = vector.broadcast %cst_224 : f32 to vector<8x64xf32>
    %1020 = arith.addf %1019, %1018 : vector<8x64xf32>
    %1021 = arith.divf %1019, %1020 : vector<8x64xf32>
    %1022 = vector.extract_strided_slice %1013 {offsets = [0, 0], sizes = [8, 32], strides = [1, 1]} : vector<8x64xf32> to vector<8x32xf32>
    %1023 = vector.extract_strided_slice %1013 {offsets = [0, 32], sizes = [8, 32], strides = [1, 1]} : vector<8x64xf32> to vector<8x32xf32>
    %1024 = vector.extract_strided_slice %1021 {offsets = [0, 0], sizes = [8, 32], strides = [1, 1]} : vector<8x64xf32> to vector<8x32xf32>
    %1025 = vector.extract_strided_slice %1021 {offsets = [0, 32], sizes = [8, 32], strides = [1, 1]} : vector<8x64xf32> to vector<8x32xf32>
    %1026 = vector.extract_strided_slice %999 {offsets = [0, 64], sizes = [8, 32], strides = [1, 1]} : vector<8x96xf32> to vector<8x32xf32>
    %1027 = vector.extract_strided_slice %1005 {offsets = [0, 64], sizes = [8, 32], strides = [1, 1]} : vector<8x192xf32> to vector<8x32xf32>
    %1028 = vector.broadcast %17 : vector<1x32xf32> to vector<8x32xf32>
    %1029 = arith.addf %1027, %1028 : vector<8x32xf32>
    %1030 = arith.mulf %1022, %1029 : vector<8x32xf32>
    %1031 = arith.addf %1026, %1030 : vector<8x32xf32>
    %1032 = math.tanh %1031 : vector<8x32xf32>
    %1033 = vector.extract_strided_slice %1002 {offsets = [0, 64], sizes = [8, 32], strides = [1, 1]} : vector<8x96xf32> to vector<8x32xf32>
    %1034 = vector.extract_strided_slice %1005 {offsets = [0, 160], sizes = [8, 32], strides = [1, 1]} : vector<8x192xf32> to vector<8x32xf32>
    %1035 = vector.broadcast %18 : vector<1x32xf32> to vector<8x32xf32>
    %1036 = arith.addf %1034, %1035 : vector<8x32xf32>
    %1037 = arith.mulf %1024, %1036 : vector<8x32xf32>
    %1038 = arith.addf %1033, %1037 : vector<8x32xf32>
    %1039 = math.tanh %1038 : vector<8x32xf32>
    %cst_225 = arith.constant 1.000000e+00 : f32
    %1040 = vector.broadcast %cst_225 : f32 to vector<8x32xf32>
    %1041 = arith.subf %1040, %1023 : vector<8x32xf32>
    %1042 = arith.mulf %1041, %1032 : vector<8x32xf32>
    %1043 = arith.mulf %1023, %980 : vector<8x32xf32>
    %1044 = arith.addf %1042, %1043 : vector<8x32xf32>
    %cst_226 = arith.constant 1.000000e+00 : f32
    %1045 = vector.broadcast %cst_226 : f32 to vector<8x32xf32>
    %1046 = arith.subf %1045, %1025 : vector<8x32xf32>
    %1047 = arith.mulf %1046, %1039 : vector<8x32xf32>
    %1048 = arith.mulf %1025, %987 : vector<8x32xf32>
    %1049 = arith.addf %1047, %1048 : vector<8x32xf32>
    %1050 = vector.broadcast %992 : vector<8x1xf32> to vector<8x32xf32>
    %1051 = arith.mulf %1044, %1050 : vector<8x32xf32>
    %1052 = arith.index_cast %c11_i32_214 : i32 to index
    %c0_227 = arith.constant 0 : index
    %c0_228 = arith.constant 0 : index
    %1053 = vector.load %arg6[%1052, %c0_227, %c0_228] : memref<12x8x64xf32, #tpu.memory_space<vmem>>, vector<1x8x32xf32>
    %1054 = vector.shape_cast %1053 : vector<1x8x32xf32> to vector<8x32xf32>
    %1055 = vector.shape_cast %1051 : vector<8x32xf32> to vector<1x8x32xf32>
    tpu.vector_store %arg6[%1052, %c0_227, %c0_228], %1055 {strides = array<i32>} : memref<12x8x64xf32, #tpu.memory_space<vmem>>, vector<1x8x32xf32>,
    %1056 = vector.broadcast %996 : vector<8x1xf32> to vector<8x32xf32>
    %1057 = arith.mulf %1049, %1056 : vector<8x32xf32>
    %1058 = arith.index_cast %988 : i32 to index
    %c0_229 = arith.constant 0 : index
    %c32_230 = arith.constant 32 : index
    %1059 = vector.load %arg6[%1058, %c0_229, %c32_230] : memref<12x8x64xf32, #tpu.memory_space<vmem>>, vector<1x8x32xf32>
    %1060 = vector.shape_cast %1059 : vector<1x8x32xf32> to vector<8x32xf32>
    %1061 = vector.shape_cast %1057 : vector<8x32xf32> to vector<1x8x32xf32>
    tpu.vector_store %arg6[%1058, %c0_229, %c32_230], %1061 {strides = array<i32>} : memref<12x8x64xf32, #tpu.memory_space<vmem>>, vector<1x8x32xf32>,
    %1062 = vector.broadcast %992 : vector<8x1xf32> to vector<8x32xf32>
    %1063 = arith.mulf %1062, %1044 : vector<8x32xf32>
    %cst_231 = arith.constant 1.000000e+00 : f32
    %1064 = vector.broadcast %cst_231 : f32 to vector<8x1xf32>
    %1065 = arith.subf %1064, %992 : vector<8x1xf32>
    %1066 = vector.broadcast %1065 : vector<8x1xf32> to vector<8x32xf32>
    %1067 = arith.mulf %1066, %980 : vector<8x32xf32>
    %1068 = arith.addf %1063, %1067 : vector<8x32xf32>
    %1069 = vector.broadcast %996 : vector<8x1xf32> to vector<8x32xf32>
    %1070 = arith.mulf %1069, %1049 : vector<8x32xf32>
    %cst_232 = arith.constant 1.000000e+00 : f32
    %1071 = vector.broadcast %cst_232 : f32 to vector<8x1xf32>
    %1072 = arith.subf %1071, %996 : vector<8x1xf32>
    %1073 = vector.broadcast %1072 : vector<8x1xf32> to vector<8x32xf32>
    %1074 = arith.mulf %1073, %987 : vector<8x32xf32>
    %1075 = arith.addf %1070, %1074 : vector<8x32xf32>
    %c12_i32 = arith.constant 12 : i32
    return
  }
}

</mosaic_0001>

<llo_original>
// kernel: text_encoder_forward.1
$region0: #{text_encoder_forward.1}
  #allocation0 [shape = 'u32[]', space=smem, size = 0x4, offset = 0x4, fixed_abs, tag = 'smem constant byte address 0x4 - core index']
  #allocation1 [shape = 'u32[72,128]{1,0:T(1,128)}', space=vmem, size = 0x9000, scoped, tag = 'internal scratch']
  #allocation2 [shape = 'f32[12,8,192]{2,1,0:T(8,128)}', space=vmem, size = 0x18000, scoped, tag = 'scratch operand']
  %s0 = inlined_call_operand.vmem [shape: s32[12,8], index: 0, kind: input, shape index: {}]
  %s1 = inlined_call_operand.vmem [shape: bf16[12,8,32], index: 1, kind: input, shape index: {}]
  %s2 = inlined_call_operand.vmem [shape: bf16[32,192], index: 2, kind: input, shape index: {}]
  %s3 = inlined_call_operand.vmem [shape: f32[1,192], index: 3, kind: input, shape index: {}]
  %s4 = inlined_call_operand.vmem [shape: bf16[64,192], index: 4, kind: input, shape index: {}]
  %s5 = inlined_call_operand.vmem [shape: f32[1,64], index: 5, kind: input, shape index: {}]
  %s6 = inlined_call_operand.hbm [shape: f32[12,8,64], index: 6, kind: output, shape index: {0}]
  %s7 = inlined_call_operand.vmem [shape: f32[12,8], index: 7, kind: output, shape index: {1}]
  %8 = xla_tuple %s6, %s7
  %s9 = sld [smem:[#allocation0]]
  $region42: #{text_encoder_forward.1} parent=0
    _
  %s11 = ssub.s32 1, %s9
  %s12 = scalar_select 0, %s11, %s9
  $region1: #{text_encoder_forward.1} parent=0
    #allocation3 [shape = 'u8[49152]{0}', space=vmem, size = 0xc000, scoped, tag = 'output window, operand 0, single buffered']
    #allocation4 [shape = 's32[1]{0}', space=sflag, size = 0x4, scoped, tag = 'scoped memory for text_encoder_forward.1']
    %13 = vsyncpa [#allocation4], 0
    // Predicated region
    $region2: #{text_encoder_forward.1} parent=1 // pred_check
      _
    $region3: #{text_encoder_forward.1} parent=1 // pred_check_branch
      %15 = sbr.rel (0) target = $region5
    $region4: #{text_encoder_forward.1} parent=1 // pred_region
      _
    $region5: #{text_encoder_forward.1} parent=1 // pred_fallthru
      _
    // Predicated region
    $region6: #{text_encoder_forward.1} parent=1 // pred_check
      _
    $region7: #{text_encoder_forward.1} parent=1 // pred_check_branch
      %17 = sbr.rel (0) target = $region9
    $region8: #{text_encoder_forward.1} parent=1 // pred_region
      _
    $region9: #{text_encoder_forward.1} parent=1 // pred_fallthru
      _
    // Predicated region
    $region10: #{text_encoder_forward.1} parent=1 // pred_check
      _
    $region11: #{text_encoder_forward.1} parent=1 // pred_check_branch
      %19 = sbr.rel (0) target = $region13
    $region12: #{text_encoder_forward.1} parent=1 // pred_region
      _
    $region13: #{text_encoder_forward.1} parent=1 // pred_fallthru
      _
    // Predicated region
    $region14: #{text_encoder_forward.1} parent=1 // pred_check
      _
    $region15: #{text_encoder_forward.1} parent=1 // pred_check_branch
      %21 = sbr.rel (0) target = $region17
    $region16: #{text_encoder_forward.1} parent=1 // pred_region
      _
    $region17: #{text_encoder_forward.1} parent=1 // pred_fallthru
      _
    // Predicated region
    $region18: #{text_encoder_forward.1} parent=1 // pred_check
      _
    $region19: #{text_encoder_forward.1} parent=1 // pred_check_branch
      %23 = sbr.rel (0) target = $region21
    $region20: #{text_encoder_forward.1} parent=1 // pred_region
      _
    $region21: #{text_encoder_forward.1} parent=1 // pred_fallthru
      _
    // Predicated region
    $region22: #{text_encoder_forward.1} parent=1 // pred_check
      _
    $region23: #{text_encoder_forward.1} parent=1 // pred_check_branch
      %25 = sbr.rel (0) target = $region25
    $region24: #{text_encoder_forward.1} parent=1 // pred_region
      _
    $region25: #{text_encoder_forward.1} parent=1 // pred_fallthru
      _
    %v27 = vld [vmem:[%s0] sm:$0xff]
    %v28 = vld [vmem:[%s0 + $0x8] sm:$0xf]
    %vm29 = vcmp.ne.s32.totalorder %v27, 0
    %vm30 = vcmp.ne.s32.totalorder %v28, 0
    %v31 = vsel %vm29, 1, 0
    %v32 = vsel %vm30, 1, 0
    %v33 = vcvt.s32.f32 %v31
    %v34 = vcvt.s32.f32 %v32
    %vm35 = vcmask 64512
    %36 = vst.msk [vmem:[%s7] sm:$0xff] %vm35, %v33
    %vm37 = vcmask 60416
    %38 = vst.msk [vmem:[%s7 + $0x8] sm:$0xf] %vm37, %v34
    %v39 = vld [vmem:[%s1] sm:$0xf]
    %v40 = vld [vmem:[%s1 + $0x4] sm:$0xf]
    %v41 = vld [vmem:[%s1 + $0x8] sm:$0xf]
    %v42 = vld [vmem:[%s1 + $0xc] sm:$0xf]
    %v43 = vld [vmem:[%s1 + $0x10] sm:$0xf]
    %v44 = vld [vmem:[%s1 + $0x14] sm:$0xf]
    %v45 = vld [vmem:[%s1 + $0x18] sm:$0xf]
    %v46 = vld [vmem:[%s1 + $0x1c] sm:$0xf]
    %v47 = vld [vmem:[%s1 + $0x20] sm:$0xf]
    %v48 = vld [vmem:[%s1 + $0x24] sm:$0xf]
    %v49 = vld [vmem:[%s1 + $0x28] sm:$0xf]
    %v50 = vld [vmem:[%s1 + $0x2c] sm:$0xf]
    %v51 = vld [vmem:[%s2] sm:$0xff]
    %v52 = vld [vmem:[%s2 + $0x8] sm:$0xff]
    %v53 = vld [vmem:[%s2 + $0x10] sm:$0xff]
    %v54 = vld [vmem:[%s2 + $0x18] sm:$0xff]
    %v55 = vld [vmem:[%s3] sm:$0x3]
    %v57 = vperm.slane %v55, 0
    %v58 = vperm.slane %v55, 1
    %v73 = vunpack.c.l.b16 %v39
    %v74 = vunpack.c.l.b16 %v40
    %v75 = vunpack.c.l.b16 %v41
    %v76 = vunpack.c.l.b16 %v42
    %v77 = vunpack.c.l.b16 %v43
    %v78 = vunpack.c.l.b16 %v44
    %v79 = vunpack.c.l.b16 %v45
    %v80 = vunpack.c.l.b16 %v46
    %v81 = vunpack.c.l.b16 %v47
    %v82 = vunpack.c.l.b16 %v48
    %v83 = vunpack.c.l.b16 %v49
    %v84 = vunpack.c.l.b16 %v50
    %v85 = vpack.c.b16 %v74, %v73
    %v86 = vpack.c.b16 %v76, %v75
    %v87 = vpack.c.b16 %v78, %v77
    %v88 = vpack.c.b16 %v80, %v79
    %v89 = vpack.c.b16 %v82, %v81
    %v90 = vpack.c.b16 %v84, %v83
    %v95 = vunpack.c.l.b16 %v51
    %v96 = vunpack.c.h.b16 %v51
    %v97 = vunpack.c.l.b16 %v52
    %v98 = vunpack.c.h.b16 %v52
    %v99 = vunpack.c.l.b16 %v53
    %v100 = vunpack.c.h.b16 %v53
    %v101 = vunpack.c.l.b16 %v54
    %v102 = vunpack.c.h.b16 %v54
    %v103 = vpack.c.b16 %v97, %v95
    %v104 = vpack.c.b16 %v98, %v96
    %v105 = vpack.c.b16 %v101, %v99
    %v106 = vpack.c.b16 %v102, %v100
    %vm111 = vcmask 261120
    %v113 = vsel %vm111, %v85, 0
    %v116 = vsel %vm111, %v86, 0
    %v119 = vsel %vm111, %v87, 0
    %v122 = vsel %vm111, %v88, 0
    %v125 = vsel %vm111, %v89, 0
    %v128 = vsel %vm111, %v90, 0
    %130 = vmatpush.bf16.msra.mxu0 0
    %131 = vmatpush.bf16.msra.mxu0 0
    %132 = vmatpush.bf16.msra.mxu0 0
    %133 = vmatpush.bf16.msra.mxu0 0
    %134 = vmatpush.bf16.msra.mxu0 0
    %135 = vmatpush.bf16.msra.mxu0 0
    %136 = vmatpush.bf16.msra.mxu0 %v105
    %137 = vmatpush.bf16.msra.mxu0 %v103
    %138 = vmatmul.bf16.gmra.mxu0 %v113
    %v139 = vpop.f32.mrf.mxu0
    %v140 = vadd.f32 %v57, %v139
    %v141 = vpop.f32.mrf.mxu0
    %v142 = vadd.f32 %v57, %v141
    %143 = vmatmul.bf16.gmra.mxu0 %v116
    %v144 = vpop.f32.mrf.mxu0
    %v145 = vadd.f32 %v57, %v144
    %v146 = vpop.f32.mrf.mxu0
    %v147 = vadd.f32 %v57, %v146
    %148 = vmatmul.bf16.gmra.mxu0 %v119
    %v149 = vpop.f32.mrf.mxu0
    %v150 = vadd.f32 %v57, %v149
    %v151 = vpop.f32.mrf.mxu0
    %v152 = vadd.f32 %v57, %v151
    %153 = vmatmul.bf16.gmra.mxu0 %v122
    %v154 = vpop.f32.mrf.mxu0
    %v155 = vadd.f32 %v57, %v154
    %v156 = vpop.f32.mrf.mxu0
    %v157 = vadd.f32 %v57, %v156
    %158 = vmatmul.bf16.gmra.mxu0 %v125
    %v159 = vpop.f32.mrf.mxu0
    %v160 = vadd.f32 %v57, %v159
    %v161 = vpop.f32.mrf.mxu0
    %v162 = vadd.f32 %v57, %v161
    %163 = vmatmul.bf16.gmra.mxu0 %v128
    %v164 = vpop.f32.mrf.mxu0
    %v165 = vadd.f32 %v57, %v164
    %v166 = vpop.f32.mrf.mxu0
    %v167 = vadd.f32 %v57, %v166
    %168 = vdwg.mxu0
    %169 = vmatpush.bf16.msra.mxu0 0
    %170 = vmatpush.bf16.msra.mxu0 0
    %171 = vmatpush.bf16.msra.mxu0 0
    %172 = vmatpush.bf16.msra.mxu0 0
    %173 = vmatpush.bf16.msra.mxu0 0
    %174 = vmatpush.bf16.msra.mxu0 0
    %175 = vmatpush.bf16.msra.mxu0 %v106
    %176 = vmatpush.bf16.msra.mxu0 %v104
    %177 = vmatmul.bf16.gmra.mxu0 %v113
    %v178 = vpop.f32.mrf.mxu0
    %v179 = vadd.f32 %v58, %v178
    %v180 = vpop.f32.mrf.mxu0
    %v181 = vadd.f32 %v58, %v180
    %182 = vmatmul.bf16.gmra.mxu0 %v116
    %v183 = vpop.f32.mrf.mxu0
    %v184 = vadd.f32 %v58, %v183
    %v185 = vpop.f32.mrf.mxu0
    %v186 = vadd.f32 %v58, %v185
    %187 = vmatmul.bf16.gmra.mxu0 %v119
    %v188 = vpop.f32.mrf.mxu0
    %v189 = vadd.f32 %v58, %v188
    %v190 = vpop.f32.mrf.mxu0
    %v191 = vadd.f32 %v58, %v190
    %192 = vmatmul.bf16.gmra.mxu0 %v122
    %v193 = vpop.f32.mrf.mxu0
    %v194 = vadd.f32 %v58, %v193
    %v195 = vpop.f32.mrf.mxu0
    %v196 = vadd.f32 %v58, %v195
    %197 = vmatmul.bf16.gmra.mxu0 %v125
    %v198 = vpop.f32.mrf.mxu0
    %v199 = vadd.f32 %v58, %v198
    %v200 = vpop.f32.mrf.mxu0
    %v201 = vadd.f32 %v58, %v200
    %202 = vmatmul.bf16.gmra.mxu0 %v128
    %v203 = vpop.f32.mrf.mxu0
    %v204 = vadd.f32 %v58, %v203
    %v205 = vpop.f32.mrf.mxu0
    %v206 = vadd.f32 %v58, %v205
    %207 = vdwg.mxu0
    %208 = vst [vmem:[#allocation2] sm:$0xff] %v140
    %vm209 = vcmask 523264
    %210 = vst.msk [vmem:[#allocation2 + $0x8] sm:$0xff] %vm209, %v179
    %211 = vst [vmem:[#allocation2 + $0x10] sm:$0xff] %v142
    %212 = vst.msk [vmem:[#allocation2 + $0x18] sm:$0xff] %vm209, %v181
    %213 = vst [vmem:[#allocation2 + $0x20] sm:$0xff] %v145
    %214 = vst.msk [vmem:[#allocation2 + $0x28] sm:$0xff] %vm209, %v184
    %215 = vst [vmem:[#allocation2 + $0x30] sm:$0xff] %v147
    %216 = vst.msk [vmem:[#allocation2 + $0x38] sm:$0xff] %vm209, %v186
    %217 = vst [vmem:[#allocation2 + $0x40] sm:$0xff] %v150
    %218 = vst.msk [vmem:[#allocation2 + $0x48] sm:$0xff] %vm209, %v189
    %219 = vst [vmem:[#allocation2 + $0x50] sm:$0xff] %v152
    %220 = vst.msk [vmem:[#allocation2 + $0x58] sm:$0xff] %vm209, %v191
    %221 = vst [vmem:[#allocation2 + $0x60] sm:$0xff] %v155
    %222 = vst.msk [vmem:[#allocation2 + $0x68] sm:$0xff] %vm209, %v194
    %223 = vst [vmem:[#allocation2 + $0x70] sm:$0xff] %v157
    %224 = vst.msk [vmem:[#allocation2 + $0x78] sm:$0xff] %vm209, %v196
    %225 = vst [vmem:[#allocation2 + $0x80] sm:$0xff] %v160
    %226 = vst.msk [vmem:[#allocation2 + $0x88] sm:$0xff] %vm209, %v199
    %227 = vst [vmem:[#allocation2 + $0x90] sm:$0xff] %v162
    %228 = vst.msk [vmem:[#allocation2 + $0x98] sm:$0xff] %vm209, %v201
    %229 = vst [vmem:[#allocation2 + $0xa0] sm:$0xff] %v165
    %230 = vst.msk [vmem:[#allocation2 + $0xa8] sm:$0xff] %vm209, %v204
    %231 = vst [vmem:[#allocation2 + $0xb0] sm:$0xff] %v167
    %232 = vst.msk [vmem:[#allocation2 + $0xb8] sm:$0xff] %vm209, %v206
    %v233 = vld [vmem:[%s4] sm:$0xff]
    %v234 = vld [vmem:[%s4 + $0x8] sm:$0xff]
    %v235 = vld [vmem:[%s4 + $0x10] sm:$0xff]
    %v236 = vld [vmem:[%s4 + $0x18] sm:$0xff]
    %v237 = vld [vmem:[%s4 + $0x20] sm:$0xff]
    %v238 = vld [vmem:[%s4 + $0x28] sm:$0xff]
    %v239 = vld [vmem:[%s4 + $0x30] sm:$0xff]
    %v240 = vld [vmem:[%s4 + $0x38] sm:$0xff]
    %v241 = vld [vmem:[%s5] sm:$0x1]
    %v242 = vld [vmem:[%s7] sm:$0x1]
    %v243 = vperm.slane %v242, 0
    %v244 = vlaneseq
    %v245 = vshrl.u32 %v244, 7
    %247 = vset.pattern.permute.xlu0 %v245
    %248 = vperm.xlu0 %247, %v243
    %v249 = vpop.permute.xlu0 %248
    %v250 = vld [vmem:[%s7 + $0xb] sm:$0x1]
    %v251 = vperm.slane %v250, 0
    %v252 = vlaneseq
    %v253 = vshrl.u32 %v252, 7
    %255 = vset.pattern.permute.xlu0 %v253
    %256 = vperm.xlu0 %255, %v251
    %v257 = vpop.permute.xlu0 %256
    %v258 = vld [vmem:[#allocation2] sm:$0xff]
    %s259 = scalar_lea.vmem [#allocation2], 176
    %v260 = vld [vmem:[%s259] sm:$0xff]
    %v261 = vld [vmem:[%s259 + $0x8] sm:$0xff]
    %v262 = vpack.c.bf16 0.0, 0.0
    %v271 = vunpack.c.l.b16 %v233
    %v272 = vunpack.c.h.b16 %v233
    %v273 = vunpack.c.l.b16 %v234
    %v274 = vunpack.c.h.b16 %v234
    %v275 = vunpack.c.l.b16 %v235
    %v276 = vunpack.c.h.b16 %v235
    %v277 = vunpack.c.l.b16 %v236
    %v278 = vunpack.c.h.b16 %v236
    %v279 = vunpack.c.l.b16 %v237
    %v280 = vunpack.c.h.b16 %v237
    %v281 = vunpack.c.l.b16 %v238
    %v282 = vunpack.c.h.b16 %v238
    %v283 = vunpack.c.l.b16 %v239
    %v284 = vunpack.c.h.b16 %v239
    %v285 = vunpack.c.l.b16 %v240
    %v286 = vunpack.c.h.b16 %v240
    %v287 = vpack.c.b16 %v273, %v271
    %v288 = vpack.c.b16 %v274, %v272
    %v289 = vpack.c.b16 %v277, %v275
    %v290 = vpack.c.b16 %v278, %v276
    %v291 = vpack.c.b16 %v281, %v279
    %v292 = vpack.c.b16 %v282, %v280
    %v293 = vpack.c.b16 %v285, %v283
    %v294 = vpack.c.b16 %v286, %v284
    %v304 = vsel %vm209, %v262, 0
    %306 = vmatpush.bf16.msra.mxu0 0
    %307 = vmatpush.bf16.msra.mxu0 0
    %308 = vmatpush.bf16.msra.mxu0 0
    %309 = vmatpush.bf16.msra.mxu0 0
    %310 = vmatpush.bf16.msra.mxu0 %v293
    %311 = vmatpush.bf16.msra.mxu0 %v291
    %312 = vmatpush.bf16.msra.mxu0 %v289
    %313 = vmatpush.bf16.msra.mxu0 %v287
    %314 = vmatmul.bf16.gmra.mxu0 %v304
    %v315 = vpop.f32.mrf.mxu0
    %v316 = vadd.f32 0.0, %v315
    %v317 = vpop.f32.mrf.mxu0
    %318 = vdwg.mxu0
    %319 = vmatpush.bf16.msra.mxu0 0
    %320 = vmatpush.bf16.msra.mxu0 0
    %321 = vmatpush.bf16.msra.mxu0 0
    %322 = vmatpush.bf16.msra.mxu0 0
    %323 = vmatpush.bf16.msra.mxu0 %v294
    %324 = vmatpush.bf16.msra.mxu0 %v292
    %325 = vmatpush.bf16.msra.mxu0 %v290
    %326 = vmatpush.bf16.msra.mxu0 %v288
    %327 = vmatmul.bf16.gmra.mxu0 %v304
    %v328 = vpop.f32.mrf.mxu0
    %v329 = vadd.f32 0.0, %v328
    %v330 = vpop.f32.mrf.mxu0
    %331 = vdwg.mxu0
    %v332 = vadd.f32 %v258, %v316
    %v333 = vxor.u32 %v332, 2147483648
    %v334 = vmul.f32 %v333, 1.442695
    %v335 = vpow.pop %v334
    %v336 = vadd.f32 %v335, 1.0
    %v337 = vrcp.pop %v336
    %v338 = vmul.f32 %v336, %v337
    %v339 = vsub.f32 1.0, %v338
    %v340 = vmul.f32 %v337, %v339
    %v341 = vadd.f32 %v337, %v340
    %vm342 = vweird.f32 %v336
    %vm343 = vweird.f32 %v337
    %vm344 = vmor %vm342, %vm343
    %v345 = vsel %vm344, %v337, %v341
    %v346 = vand.u32 2147483647, %v336
    %vm347 = vcmp.eq.f32.partialorder %v346, 8.507059e+37
    %v348 = vand.u32 %v336, 2147483648
    %v349 = vor.u32 1.1754944e-38, %v348
    %v350 = vsel %vm347, %v349, %v345
    %v351 = vmul.f32 1.0, %v350
    %v352 = vadd.f32 %v260, %v316
    %v353 = vadd.f32 %v261, %v329
    %v354 = vxor.u32 %v352, 2147483648
    %v355 = vxor.u32 %v353, 2147483648
    %v356 = vmul.f32 %v354, 1.442695
    %v357 = vpow.pop %v356
    %v358 = vmul.f32 %v355, 1.442695
    %v359 = vpow.pop %v358
    %v360 = vadd.f32 %v357, 1.0
    %v361 = vadd.f32 %v359, 1.0
    %v362 = vrcp.pop %v360
    %v363 = vmul.f32 %v360, %v362
    %v364 = vsub.f32 1.0, %v363
    %v365 = vmul.f32 %v362, %v364
    %v366 = vadd.f32 %v362, %v365
    %vm367 = vweird.f32 %v360
    %vm368 = vweird.f32 %v362
    %vm369 = vmor %vm367, %vm368
    %v370 = vsel %vm369, %v362, %v366
    %v371 = vand.u32 2147483647, %v360
    %vm372 = vcmp.eq.f32.partialorder %v371, 8.507059e+37
    %v373 = vand.u32 %v360, 2147483648
    %v374 = vor.u32 1.1754944e-38, %v373
    %v375 = vsel %vm372, %v374, %v370
    %v376 = vmul.f32 1.0, %v375
    %v377 = vrcp.pop %v361
    %v378 = vmul.f32 %v361, %v377
    %v379 = vsub.f32 1.0, %v378
    %v380 = vmul.f32 %v377, %v379
    %v381 = vadd.f32 %v377, %v380
    %vm382 = vweird.f32 %v361
    %vm383 = vweird.f32 %v377
    %vm384 = vmor %vm382, %vm383
    %v385 = vsel %vm384, %v377, %v381
    %v386 = vand.u32 2147483647, %v361
    %vm387 = vcmp.eq.f32.partialorder %v386, 8.507059e+37
    %v388 = vand.u32 %v361, 2147483648
    %v389 = vor.u32 1.1754944e-38, %v388
    %v390 = vsel %vm387, %v389, %v385
    %v391 = vmul.f32 1.0, %v390
    %v393 = vperm.slane %v241, 0
    %394 = vrot.lane.b32.xlu0 %v393, 64
    %v395 = vpop.permute.xlu0 %394
    %v397 = vadd.f32 %v316, %v395
    %399 = vrot.lane.b32.xlu0 %v397, 64
    %v400 = vpop.permute.xlu0 %399
    %v402 = vmul.f32 %v351, %v400
    %404 = vrot.lane.b32.xlu0 %v402, 64
    %v405 = vpop.permute.xlu0 %404
    %v407 = vadd.f32 %v258, %v405
    %v408 = vtanh.pop %v407
    %v410 = vadd.f32 %v329, %v393
    %412 = vrot.lane.b32.xlu0 %v410, 64
    %v413 = vpop.permute.xlu0 %412
    %v415 = vmul.f32 %v376, %v413
    %417 = vrot.lane.b32.xlu0 %v415, 64
    %v418 = vpop.permute.xlu0 %417
    %v420 = vadd.f32 %v261, %v418
    %v421 = vtanh.pop %v420
    %v422 = vsub.f32 1.0, %v351
    %424 = vrot.lane.b32.xlu0 %v408, 96
    %v425 = vpop.permute.xlu0 %424
    %v427 = vmul.f32 %v422, %v425
    %v428 = vmul.f32 %v351, 0.0
    %v429 = vadd.f32 %v427, %v428
    %v430 = vsub.f32 1.0, %v391
    %432 = vrot.lane.b32.xlu0 %v421, 96
    %v433 = vpop.permute.xlu0 %432
    %v435 = vmul.f32 %v430, %v433
    %v436 = vmul.f32 %v391, 0.0
    %v437 = vadd.f32 %v435, %v436
    %v438 = vmul.f32 %v429, %v249
    %440 = vrot.lane.b32.xlu0 %v438, 96
    %v441 = vpop.permute.xlu0 %440
    %443 = vst.msk [vmem:[#allocation3] sm:$0xff] %vm111, %v441
    %v444 = vmul.f32 %v437, %v257
    %446 = vrot.lane.b32.xlu0 %v444, 32
    %v447 = vpop.permute.xlu0 %446
    %s449 = scalar_lea.vmem [#allocation3], 88
    %vm450 = vcmask 523520
    %451 = vst.msk [vmem:[%s449] sm:$0xff] %vm450, %v447
    %v452 = vsub.f32 1.0, %v249
    %v453 = vmul.f32 %v452, 0.0
    %v454 = vadd.f32 %v438, %v453
    %v455 = vsub.f32 1.0, %v257
    %v456 = vmul.f32 %v455, 0.0
    %v457 = vadd.f32 %v444, %v456
    %v458 = vld [vmem:[%s7 + $0x1] sm:$0x1]
    %v459 = vperm.slane %v458, 0
    %v460 = vlaneseq
    %v461 = vshrl.u32 %v460, 7
    %463 = vset.pattern.permute.xlu0 %v461
    %464 = vperm.xlu0 %463, %v459
    %v465 = vpop.permute.xlu0 %464
    %v466 = vld [vmem:[%s7 + $0xa] sm:$0x1]
    %v467 = vperm.slane %v466, 0
    %v468 = vlaneseq
    %v469 = vshrl.u32 %v468, 7
    %471 = vset.pattern.permute.xlu0 %v469
    %472 = vperm.xlu0 %471, %v467
    %v473 = vpop.permute.xlu0 %472
    %s474 = scalar_lea.vmem [#allocation2], 16
    %v475 = vld [vmem:[%s474] sm:$0xff]
    %s476 = scalar_lea.vmem [#allocation2], 160
    %v477 = vld [vmem:[%s476] sm:$0xff]
    %v478 = vld [vmem:[%s476 + $0x8] sm:$0xff]
    %480 = vrot.lane.b32.xlu0 %v454, 96
    %v481 = vpop.permute.xlu0 %480
    %484 = vrot.lane.b32.xlu0 %v457, 32
    %v485 = vpop.permute.xlu0 %484
    %v487 = vsel %vm111, %v481, %v485
    %v488 = vpack.c.bf16 %v487, %v487
    %v490 = vsel %vm209, %v488, 0
    %492 = vmatpush.bf16.msra.mxu0 0
    %493 = vmatpush.bf16.msra.mxu0 0
    %494 = vmatpush.bf16.msra.mxu0 0
    %495 = vmatpush.bf16.msra.mxu0 0
    %496 = vmatpush.bf16.msra.mxu0 %v293
    %497 = vmatpush.bf16.msra.mxu0 %v291
    %498 = vmatpush.bf16.msra.mxu0 %v289
    %499 = vmatpush.bf16.msra.mxu0 %v287
    %500 = vmatmul.bf16.gmra.mxu0 %v490
    %v501 = vpop.f32.mrf.mxu0
    %v502 = vadd.f32 0.0, %v501
    %v503 = vpop.f32.mrf.mxu0
    %504 = vdwg.mxu0
    %505 = vmatpush.bf16.msra.mxu0 0
    %506 = vmatpush.bf16.msra.mxu0 0
    %507 = vmatpush.bf16.msra.mxu0 0
    %508 = vmatpush.bf16.msra.mxu0 0
    %509 = vmatpush.bf16.msra.mxu0 %v294
    %510 = vmatpush.bf16.msra.mxu0 %v292
    %511 = vmatpush.bf16.msra.mxu0 %v290
    %512 = vmatpush.bf16.msra.mxu0 %v288
    %513 = vmatmul.bf16.gmra.mxu0 %v490
    %v514 = vpop.f32.mrf.mxu0
    %v515 = vadd.f32 0.0, %v514
    %v516 = vpop.f32.mrf.mxu0
    %517 = vdwg.mxu0
    %v518 = vadd.f32 %v475, %v502
    %v519 = vxor.u32 %v518, 2147483648
    %v520 = vmul.f32 %v519, 1.442695
    %v521 = vpow.pop %v520
    %v522 = vadd.f32 %v521, 1.0
    %v523 = vrcp.pop %v522
    %v524 = vmul.f32 %v522, %v523
    %v525 = vsub.f32 1.0, %v524
    %v526 = vmul.f32 %v523, %v525
    %v527 = vadd.f32 %v523, %v526
    %vm528 = vweird.f32 %v522
    %vm529 = vweird.f32 %v523
    %vm530 = vmor %vm528, %vm529
    %v531 = vsel %vm530, %v523, %v527
    %v532 = vand.u32 2147483647, %v522
    %vm533 = vcmp.eq.f32.partialorder %v532, 8.507059e+37
    %v534 = vand.u32 %v522, 2147483648
    %v535 = vor.u32 1.1754944e-38, %v534
    %v536 = vsel %vm533, %v535, %v531
    %v537 = vmul.f32 1.0, %v536
    %v538 = vadd.f32 %v477, %v502
    %v539 = vadd.f32 %v478, %v515
    %v540 = vxor.u32 %v538, 2147483648
    %v541 = vxor.u32 %v539, 2147483648
    %v542 = vmul.f32 %v540, 1.442695
    %v543 = vpow.pop %v542
    %v544 = vmul.f32 %v541, 1.442695
    %v545 = vpow.pop %v544
    %v546 = vadd.f32 %v543, 1.0
    %v547 = vadd.f32 %v545, 1.0
    %v548 = vrcp.pop %v546
    %v549 = vmul.f32 %v546, %v548
    %v550 = vsub.f32 1.0, %v549
    %v551 = vmul.f32 %v548, %v550
    %v552 = vadd.f32 %v548, %v551
    %vm553 = vweird.f32 %v546
    %vm554 = vweird.f32 %v548
    %vm555 = vmor %vm553, %vm554
    %v556 = vsel %vm555, %v548, %v552
    %v557 = vand.u32 2147483647, %v546
    %vm558 = vcmp.eq.f32.partialorder %v557, 8.507059e+37
    %v559 = vand.u32 %v546, 2147483648
    %v560 = vor.u32 1.1754944e-38, %v559
    %v561 = vsel %vm558, %v560, %v556
    %v562 = vmul.f32 1.0, %v561
    %v563 = vrcp.pop %v547
    %v564 = vmul.f32 %v547, %v563
    %v565 = vsub.f32 1.0, %v564
    %v566 = vmul.f32 %v563, %v565
    %v567 = vadd.f32 %v563, %v566
    %vm568 = vweird.f32 %v547
    %vm569 = vweird.f32 %v563
    %vm570 = vmor %vm568, %vm569
    %v571 = vsel %vm570, %v563, %v567
    %v572 = vand.u32 2147483647, %v547
    %vm573 = vcmp.eq.f32.partialorder %v572, 8.507059e+37
    %v574 = vand.u32 %v547, 2147483648
    %v575 = vor.u32 1.1754944e-38, %v574
    %v576 = vsel %vm573, %v575, %v571
    %v577 = vmul.f32 1.0, %v576
    %v578 = vadd.f32 %v502, %v395
    %580 = vrot.lane.b32.xlu0 %v578, 64
    %v581 = vpop.permute.xlu0 %580
    %v583 = vmul.f32 %v537, %v581
    %585 = vrot.lane.b32.xlu0 %v583, 64
    %v586 = vpop.permute.xlu0 %585
    %v588 = vadd.f32 %v475, %v586
    %v589 = vtanh.pop %v588
    %v590 = vadd.f32 %v515, %v393
    %592 = vrot.lane.b32.xlu0 %v590, 64
    %v593 = vpop.permute.xlu0 %592
    %v595 = vmul.f32 %v562, %v593
    %597 = vrot.lane.b32.xlu0 %v595, 64
    %v598 = vpop.permute.xlu0 %597
    %v600 = vadd.f32 %v478, %v598
    %v601 = vtanh.pop %v600
    %v602 = vsub.f32 1.0, %v537
    %604 = vrot.lane.b32.xlu0 %v589, 96
    %v605 = vpop.permute.xlu0 %604
    %v607 = vmul.f32 %v602, %v605
    %v608 = vmul.f32 %v537, %v454
    %v609 = vadd.f32 %v607, %v608
    %v610 = vsub.f32 1.0, %v577
    %612 = vrot.lane.b32.xlu0 %v601, 96
    %v613 = vpop.permute.xlu0 %612
    %v615 = vmul.f32 %v610, %v613
    %v616 = vmul.f32 %v577, %v457
    %v617 = vadd.f32 %v615, %v616
    %v618 = vmul.f32 %v609, %v465
    %620 = vrot.lane.b32.xlu0 %v618, 96
    %v621 = vpop.permute.xlu0 %620
    %s623 = scalar_lea.vmem [#allocation3], 8
    %624 = vst.msk [vmem:[%s623] sm:$0xff] %vm111, %v621
    %v625 = vmul.f32 %v617, %v473
    %627 = vrot.lane.b32.xlu0 %v625, 32
    %v628 = vpop.permute.xlu0 %627
    %s630 = scalar_lea.vmem [#allocation3], 80
    %631 = vst.msk [vmem:[%s630] sm:$0xff] %vm450, %v628
    %v632 = vsub.f32 1.0, %v465
    %v633 = vmul.f32 %v632, %v454
    %v634 = vadd.f32 %v618, %v633
    %v635 = vsub.f32 1.0, %v473
    %v636 = vmul.f32 %v635, %v457
    %v637 = vadd.f32 %v625, %v636
    %v638 = vld [vmem:[%s7 + $0x2] sm:$0x1]
    %v639 = vperm.slane %v638, 0
    %v640 = vlaneseq
    %v641 = vshrl.u32 %v640, 7
    %643 = vset.pattern.permute.xlu0 %v641
    %644 = vperm.xlu0 %643, %v639
    %v645 = vpop.permute.xlu0 %644
    %v646 = vld [vmem:[%s7 + $0x9] sm:$0x1]
    %v647 = vperm.slane %v646, 0
    %v648 = vlaneseq
    %v649 = vshrl.u32 %v648, 7
    %651 = vset.pattern.permute.xlu0 %v649
    %652 = vperm.xlu0 %651, %v647
    %v653 = vpop.permute.xlu0 %652
    %s654 = scalar_lea.vmem [#allocation2], 32
    %v655 = vld [vmem:[%s654] sm:$0xff]
    %s656 = scalar_lea.vmem [#allocation2], 144
    %v657 = vld [vmem:[%s656] sm:$0xff]
    %v658 = vld [vmem:[%s656 + $0x8] sm:$0xff]
    %660 = vrot.lane.b32.xlu0 %v634, 96
    %v661 = vpop.permute.xlu0 %660
    %664 = vrot.lane.b32.xlu0 %v637, 32
    %v665 = vpop.permute.xlu0 %664
    %v667 = vsel %vm111, %v661, %v665
    %v668 = vpack.c.bf16 %v667, %v667
    %v670 = vsel %vm209, %v668, 0
    %672 = vmatpush.bf16.msra.mxu0 0
    %673 = vmatpush.bf16.msra.mxu0 0
    %674 = vmatpush.bf16.msra.mxu0 0
    %675 = vmatpush.bf16.msra.mxu0 0
    %676 = vmatpush.bf16.msra.mxu0 %v293
    %677 = vmatpush.bf16.msra.mxu0 %v291
    %678 = vmatpush.bf16.msra.mxu0 %v289
    %679 = vmatpush.bf16.msra.mxu0 %v287
    %680 = vmatmul.bf16.gmra.mxu0 %v670
    %v681 = vpop.f32.mrf.mxu0
    %v682 = vadd.f32 0.0, %v681
    %v683 = vpop.f32.mrf.mxu0
    %684 = vdwg.mxu0
    %685 = vmatpush.bf16.msra.mxu0 0
    %686 = vmatpush.bf16.msra.mxu0 0
    %687 = vmatpush.bf16.msra.mxu0 0
    %688 = vmatpush.bf16.msra.mxu0 0
    %689 = vmatpush.bf16.msra.mxu0 %v294
    %690 = vmatpush.bf16.msra.mxu0 %v292
    %691 = vmatpush.bf16.msra.mxu0 %v290
    %692 = vmatpush.bf16.msra.mxu0 %v288
    %693 = vmatmul.bf16.gmra.mxu0 %v670
    %v694 = vpop.f32.mrf.mxu0
    %v695 = vadd.f32 0.0, %v694
    %v696 = vpop.f32.mrf.mxu0
    %697 = vdwg.mxu0
    %v698 = vadd.f32 %v655, %v682
    %v699 = vxor.u32 %v698, 2147483648
    %v700 = vmul.f32 %v699, 1.442695
    %v701 = vpow.pop %v700
    %v702 = vadd.f32 %v701, 1.0
    %v703 = vrcp.pop %v702
    %v704 = vmul.f32 %v702, %v703
    %v705 = vsub.f32 1.0, %v704
    %v706 = vmul.f32 %v703, %v705
    %v707 = vadd.f32 %v703, %v706
    %vm708 = vweird.f32 %v702
    %vm709 = vweird.f32 %v703
    %vm710 = vmor %vm708, %vm709
    %v711 = vsel %vm710, %v703, %v707
    %v712 = vand.u32 2147483647, %v702
    %vm713 = vcmp.eq.f32.partialorder %v712, 8.507059e+37
    %v714 = vand.u32 %v702, 2147483648
    %v715 = vor.u32 1.1754944e-38, %v714
    %v716 = vsel %vm713, %v715, %v711
    %v717 = vmul.f32 1.0, %v716
    %v718 = vadd.f32 %v657, %v682
    %v719 = vadd.f32 %v658, %v695
    %v720 = vxor.u32 %v718, 2147483648
    %v721 = vxor.u32 %v719, 2147483648
    %v722 = vmul.f32 %v720, 1.442695
    %v723 = vpow.pop %v722
    %v724 = vmul.f32 %v721, 1.442695
    %v725 = vpow.pop %v724
    %v726 = vadd.f32 %v723, 1.0
    %v727 = vadd.f32 %v725, 1.0
    %v728 = vrcp.pop %v726
    %v729 = vmul.f32 %v726, %v728
    %v730 = vsub.f32 1.0, %v729
    %v731 = vmul.f32 %v728, %v730
    %v732 = vadd.f32 %v728, %v731
    %vm733 = vweird.f32 %v726
    %vm734 = vweird.f32 %v728
    %vm735 = vmor %vm733, %vm734
    %v736 = vsel %vm735, %v728, %v732
    %v737 = vand.u32 2147483647, %v726
    %vm738 = vcmp.eq.f32.partialorder %v737, 8.507059e+37
    %v739 = vand.u32 %v726, 2147483648
    %v740 = vor.u32 1.1754944e-38, %v739
    %v741 = vsel %vm738, %v740, %v736
    %v742 = vmul.f32 1.0, %v741
    %v743 = vrcp.pop %v727
    %v744 = vmul.f32 %v727, %v743
    %v745 = vsub.f32 1.0, %v744
    %v746 = vmul.f32 %v743, %v745
    %v747 = vadd.f32 %v743, %v746
    %vm748 = vweird.f32 %v727
    %vm749 = vweird.f32 %v743
    %vm750 = vmor %vm748, %vm749
    %v751 = vsel %vm750, %v743, %v747
    %v752 = vand.u32 2147483647, %v727
    %vm753 = vcmp.eq.f32.partialorder %v752, 8.507059e+37
    %v754 = vand.u32 %v727, 2147483648
    %v755 = vor.u32 1.1754944e-38, %v754
    %v756 = vsel %vm753, %v755, %v751
    %v757 = vmul.f32 1.0, %v756
    %v758 = vadd.f32 %v682, %v395
    %760 = vrot.lane.b32.xlu0 %v758, 64
    %v761 = vpop.permute.xlu0 %760
    %v763 = vmul.f32 %v717, %v761
    %765 = vrot.lane.b32.xlu0 %v763, 64
    %v766 = vpop.permute.xlu0 %765
    %v768 = vadd.f32 %v655, %v766
    %v769 = vtanh.pop %v768
    %v770 = vadd.f32 %v695, %v393
    %772 = vrot.lane.b32.xlu0 %v770, 64
    %v773 = vpop.permute.xlu0 %772
    %v775 = vmul.f32 %v742, %v773
    %777 = vrot.lane.b32.xlu0 %v775, 64
    %v778 = vpop.permute.xlu0 %777
    %v780 = vadd.f32 %v658, %v778
    %v781 = vtanh.pop %v780
    %v782 = vsub.f32 1.0, %v717
    %784 = vrot.lane.b32.xlu0 %v769, 96
    %v785 = vpop.permute.xlu0 %784
    %v787 = vmul.f32 %v782, %v785
    %v788 = vmul.f32 %v717, %v634
    %v789 = vadd.f32 %v787, %v788
    %v790 = vsub.f32 1.0, %v757
    %792 = vrot.lane.b32.xlu0 %v781, 96
    %v793 = vpop.permute.xlu0 %792
    %v795 = vmul.f32 %v790, %v793
    %v796 = vmul.f32 %v757, %v637
    %v797 = vadd.f32 %v795, %v796
    %v798 = vmul.f32 %v789, %v645
    %800 = vrot.lane.b32.xlu0 %v798, 96
    %v801 = vpop.permute.xlu0 %800
    %s803 = scalar_lea.vmem [#allocation3], 16
    %804 = vst.msk [vmem:[%s803] sm:$0xff] %vm111, %v801
    %v805 = vmul.f32 %v797, %v653
    %807 = vrot.lane.b32.xlu0 %v805, 32
    %v808 = vpop.permute.xlu0 %807
    %s810 = scalar_lea.vmem [#allocation3], 72
    %811 = vst.msk [vmem:[%s810] sm:$0xff] %vm450, %v808
    %v812 = vsub.f32 1.0, %v645
    %v813 = vmul.f32 %v812, %v634
    %v814 = vadd.f32 %v798, %v813
    %v815 = vsub.f32 1.0, %v653
    %v816 = vmul.f32 %v815, %v637
    %v817 = vadd.f32 %v805, %v816
    %v818 = vld [vmem:[%s7 + $0x3] sm:$0x1]
    %v819 = vperm.slane %v818, 0
    %v820 = vlaneseq
    %v821 = vshrl.u32 %v820, 7
    %823 = vset.pattern.permute.xlu0 %v821
    %824 = vperm.xlu0 %823, %v819
    %v825 = vpop.permute.xlu0 %824
    %v826 = vld [vmem:[%s7 + $0x8] sm:$0x1]
    %v827 = vperm.slane %v826, 0
    %v828 = vlaneseq
    %v829 = vshrl.u32 %v828, 7
    %831 = vset.pattern.permute.xlu0 %v829
    %832 = vperm.xlu0 %831, %v827
    %v833 = vpop.permute.xlu0 %832
    %s834 = scalar_lea.vmem [#allocation2], 48
    %v835 = vld [vmem:[%s834] sm:$0xff]
    %s836 = scalar_lea.vmem [#allocation2], 128
    %v837 = vld [vmem:[%s836] sm:$0xff]
    %v838 = vld [vmem:[%s836 + $0x8] sm:$0xff]
    %840 = vrot.lane.b32.xlu0 %v814, 96
    %v841 = vpop.permute.xlu0 %840
    %844 = vrot.lane.b32.xlu0 %v817, 32
    %v845 = vpop.permute.xlu0 %844
    %v847 = vsel %vm111, %v841, %v845
    %v848 = vpack.c.bf16 %v847, %v847
    %v850 = vsel %vm209, %v848, 0
    %852 = vmatpush.bf16.msra.mxu0 0
    %853 = vmatpush.bf16.msra.mxu0 0
    %854 = vmatpush.bf16.msra.mxu0 0
    %855 = vmatpush.bf16.msra.mxu0 0
    %856 = vmatpush.bf16.msra.mxu0 %v293
    %857 = vmatpush.bf16.msra.mxu0 %v291
    %858 = vmatpush.bf16.msra.mxu0 %v289
    %859 = vmatpush.bf16.msra.mxu0 %v287
    %860 = vmatmul.bf16.gmra.mxu0 %v850
    %v861 = vpop.f32.mrf.mxu0
    %v862 = vadd.f32 0.0, %v861
    %v863 = vpop.f32.mrf.mxu0
    %864 = vdwg.mxu0
    %865 = vmatpush.bf16.msra.mxu0 0
    %866 = vmatpush.bf16.msra.mxu0 0
    %867 = vmatpush.bf16.msra.mxu0 0
    %868 = vmatpush.bf16.msra.mxu0 0
    %869 = vmatpush.bf16.msra.mxu0 %v294
    %870 = vmatpush.bf16.msra.mxu0 %v292
    %871 = vmatpush.bf16.msra.mxu0 %v290
    %872 = vmatpush.bf16.msra.mxu0 %v288
    %873 = vmatmul.bf16.gmra.mxu0 %v850
    %v874 = vpop.f32.mrf.mxu0
    %v875 = vadd.f32 0.0, %v874
    %v876 = vpop.f32.mrf.mxu0
    %877 = vdwg.mxu0
    %v878 = vadd.f32 %v835, %v862
    %v879 = vxor.u32 %v878, 2147483648
    %v880 = vmul.f32 %v879, 1.442695
    %v881 = vpow.pop %v880
    %v882 = vadd.f32 %v881, 1.0
    %v883 = vrcp.pop %v882
    %v884 = vmul.f32 %v882, %v883
    %v885 = vsub.f32 1.0, %v884
    %v886 = vmul.f32 %v883, %v885
    %v887 = vadd.f32 %v883, %v886
    %vm888 = vweird.f32 %v882
    %vm889 = vweird.f32 %v883
    %vm890 = vmor %vm888, %vm889
    %v891 = vsel %vm890, %v883, %v887
    %v892 = vand.u32 2147483647, %v882
    %vm893 = vcmp.eq.f32.partialorder %v892, 8.507059e+37
    %v894 = vand.u32 %v882, 2147483648
    %v895 = vor.u32 1.1754944e-38, %v894
    %v896 = vsel %vm893, %v895, %v891
    %v897 = vmul.f32 1.0, %v896
    %v898 = vadd.f32 %v837, %v862
    %v899 = vadd.f32 %v838, %v875
    %v900 = vxor.u32 %v898, 2147483648
    %v901 = vxor.u32 %v899, 2147483648
    %v902 = vmul.f32 %v900, 1.442695
    %v903 = vpow.pop %v902
    %v904 = vmul.f32 %v901, 1.442695
    %v905 = vpow.pop %v904
    %v906 = vadd.f32 %v903, 1.0
    %v907 = vadd.f32 %v905, 1.0
    %v908 = vrcp.pop %v906
    %v909 = vmul.f32 %v906, %v908
    %v910 = vsub.f32 1.0, %v909
    %v911 = vmul.f32 %v908, %v910
    %v912 = vadd.f32 %v908, %v911
    %vm913 = vweird.f32 %v906
    %vm914 = vweird.f32 %v908
    %vm915 = vmor %vm913, %vm914
    %v916 = vsel %vm915, %v908, %v912
    %v917 = vand.u32 2147483647, %v906
    %vm918 = vcmp.eq.f32.partialorder %v917, 8.507059e+37
    %v919 = vand.u32 %v906, 2147483648
    %v920 = vor.u32 1.1754944e-38, %v919
    %v921 = vsel %vm918, %v920, %v916
    %v922 = vmul.f32 1.0, %v921
    %v923 = vrcp.pop %v907
    %v924 = vmul.f32 %v907, %v923
    %v925 = vsub.f32 1.0, %v924
    %v926 = vmul.f32 %v923, %v925
    %v927 = vadd.f32 %v923, %v926
    %vm928 = vweird.f32 %v907
    %vm929 = vweird.f32 %v923
    %vm930 = vmor %vm928, %vm929
    %v931 = vsel %vm930, %v923, %v927
    %v932 = vand.u32 2147483647, %v907
    %vm933 = vcmp.eq.f32.partialorder %v932, 8.507059e+37
    %v934 = vand.u32 %v907, 2147483648
    %v935 = vor.u32 1.1754944e-38, %v934
    %v936 = vsel %vm933, %v935, %v931
    %v937 = vmul.f32 1.0, %v936
    %v938 = vadd.f32 %v862, %v395
    %940 = vrot.lane.b32.xlu0 %v938, 64
    %v941 = vpop.permute.xlu0 %940
    %v943 = vmul.f32 %v897, %v941
    %945 = vrot.lane.b32.xlu0 %v943, 64
    %v946 = vpop.permute.xlu0 %945
    %v948 = vadd.f32 %v835, %v946
    %v949 = vtanh.pop %v948
    %v950 = vadd.f32 %v875, %v393
    %952 = vrot.lane.b32.xlu0 %v950, 64
    %v953 = vpop.permute.xlu0 %952
    %v955 = vmul.f32 %v922, %v953
    %957 = vrot.lane.b32.xlu0 %v955, 64
    %v958 = vpop.permute.xlu0 %957
    %v960 = vadd.f32 %v838, %v958
    %v961 = vtanh.pop %v960
    %v962 = vsub.f32 1.0, %v897
    %964 = vrot.lane.b32.xlu0 %v949, 96
    %v965 = vpop.permute.xlu0 %964
    %v967 = vmul.f32 %v962, %v965
    %v968 = vmul.f32 %v897, %v814
    %v969 = vadd.f32 %v967, %v968
    %v970 = vsub.f32 1.0, %v937
    %972 = vrot.lane.b32.xlu0 %v961, 96
    %v973 = vpop.permute.xlu0 %972
    %v975 = vmul.f32 %v970, %v973
    %v976 = vmul.f32 %v937, %v817
    %v977 = vadd.f32 %v975, %v976
    %v978 = vmul.f32 %v969, %v825
    %980 = vrot.lane.b32.xlu0 %v978, 96
    %v981 = vpop.permute.xlu0 %980
    %s983 = scalar_lea.vmem [#allocation3], 24
    %984 = vst.msk [vmem:[%s983] sm:$0xff] %vm111, %v981
    %v985 = vmul.f32 %v977, %v833
    %987 = vrot.lane.b32.xlu0 %v985, 32
    %v988 = vpop.permute.xlu0 %987
    %s990 = scalar_lea.vmem [#allocation3], 64
    %991 = vst.msk [vmem:[%s990] sm:$0xff] %vm450, %v988
    %v992 = vsub.f32 1.0, %v825
    %v993 = vmul.f32 %v992, %v814
    %v994 = vadd.f32 %v978, %v993
    %v995 = vsub.f32 1.0, %v833
    %v996 = vmul.f32 %v995, %v817
    %v997 = vadd.f32 %v985, %v996
    %v998 = vld [vmem:[%s7 + $0x4] sm:$0x1]
    %v999 = vperm.slane %v998, 0
    %v1000 = vlaneseq
    %v1001 = vshrl.u32 %v1000, 7
    %1003 = vset.pattern.permute.xlu0 %v1001
    %1004 = vperm.xlu0 %1003, %v999
    %v1005 = vpop.permute.xlu0 %1004
    %v1006 = vld [vmem:[%s7 + $0x7] sm:$0x1]
    %v1007 = vperm.slane %v1006, 0
    %v1008 = vlaneseq
    %v1009 = vshrl.u32 %v1008, 7
    %1011 = vset.pattern.permute.xlu0 %v1009
    %1012 = vperm.xlu0 %1011, %v1007
    %v1013 = vpop.permute.xlu0 %1012
    %s1014 = scalar_lea.vmem [#allocation2], 64
    %v1015 = vld [vmem:[%s1014] sm:$0xff]
    %s1016 = scalar_lea.vmem [#allocation2], 112
    %v1017 = vld [vmem:[%s1016] sm:$0xff]
    %v1018 = vld [vmem:[%s1016 + $0x8] sm:$0xff]
    %1020 = vrot.lane.b32.xlu0 %v994, 96
    %v1021 = vpop.permute.xlu0 %1020
    %1024 = vrot.lane.b32.xlu0 %v997, 32
    %v1025 = vpop.permute.xlu0 %1024
    %v1027 = vsel %vm111, %v1021, %v1025
    %v1028 = vpack.c.bf16 %v1027, %v1027
    %v1030 = vsel %vm209, %v1028, 0
    %1032 = vmatpush.bf16.msra.mxu0 0
    %1033 = vmatpush.bf16.msra.mxu0 0
    %1034 = vmatpush.bf16.msra.mxu0 0
    %1035 = vmatpush.bf16.msra.mxu0 0
    %1036 = vmatpush.bf16.msra.mxu0 %v293
    %1037 = vmatpush.bf16.msra.mxu0 %v291
    %1038 = vmatpush.bf16.msra.mxu0 %v289
    %1039 = vmatpush.bf16.msra.mxu0 %v287
    %1040 = vmatmul.bf16.gmra.mxu0 %v1030
    %v1041 = vpop.f32.mrf.mxu0
    %v1042 = vadd.f32 0.0, %v1041
    %v1043 = vpop.f32.mrf.mxu0
    %1044 = vdwg.mxu0
    %1045 = vmatpush.bf16.msra.mxu0 0
    %1046 = vmatpush.bf16.msra.mxu0 0
    %1047 = vmatpush.bf16.msra.mxu0 0
    %1048 = vmatpush.bf16.msra.mxu0 0
    %1049 = vmatpush.bf16.msra.mxu0 %v294
    %1050 = vmatpush.bf16.msra.mxu0 %v292
    %1051 = vmatpush.bf16.msra.mxu0 %v290
    %1052 = vmatpush.bf16.msra.mxu0 %v288
    %1053 = vmatmul.bf16.gmra.mxu0 %v1030
    %v1054 = vpop.f32.mrf.mxu0
    %v1055 = vadd.f32 0.0, %v1054
    %v1056 = vpop.f32.mrf.mxu0
    %1057 = vdwg.mxu0
    %v1058 = vadd.f32 %v1015, %v1042
    %v1059 = vxor.u32 %v1058, 2147483648
    %v1060 = vmul.f32 %v1059, 1.442695
    %v1061 = vpow.pop %v1060
    %v1062 = vadd.f32 %v1061, 1.0
    %v1063 = vrcp.pop %v1062
    %v1064 = vmul.f32 %v1062, %v1063
    %v1065 = vsub.f32 1.0, %v1064
    %v1066 = vmul.f32 %v1063, %v1065
    %v1067 = vadd.f32 %v1063, %v1066
    %vm1068 = vweird.f32 %v1062
    %vm1069 = vweird.f32 %v1063
    %vm1070 = vmor %vm1068, %vm1069
    %v1071 = vsel %vm1070, %v1063, %v1067
    %v1072 = vand.u32 2147483647, %v1062
    %vm1073 = vcmp.eq.f32.partialorder %v1072, 8.507059e+37
    %v1074 = vand.u32 %v1062, 2147483648
    %v1075 = vor.u32 1.1754944e-38, %v1074
    %v1076 = vsel %vm1073, %v1075, %v1071
    %v1077 = vmul.f32 1.0, %v1076
    %v1078 = vadd.f32 %v1017, %v1042
    %v1079 = vadd.f32 %v1018, %v1055
    %v1080 = vxor.u32 %v1078, 2147483648
    %v1081 = vxor.u32 %v1079, 2147483648
    %v1082 = vmul.f32 %v1080, 1.442695
    %v1083 = vpow.pop %v1082
    %v1084 = vmul.f32 %v1081, 1.442695
    %v1085 = vpow.pop %v1084
    %v1086 = vadd.f32 %v1083, 1.0
    %v1087 = vadd.f32 %v1085, 1.0
    %v1088 = vrcp.pop %v1086
    %v1089 = vmul.f32 %v1086, %v1088
    %v1090 = vsub.f32 1.0, %v1089
    %v1091 = vmul.f32 %v1088, %v1090
    %v1092 = vadd.f32 %v1088, %v1091
    %vm1093 = vweird.f32 %v1086
    %vm1094 = vweird.f32 %v1088
    %vm1095 = vmor %vm1093, %vm1094
    %v1096 = vsel %vm1095, %v1088, %v1092
    %v1097 = vand.u32 2147483647, %v1086
    %vm1098 = vcmp.eq.f32.partialorder %v1097, 8.507059e+37
    %v1099 = vand.u32 %v1086, 2147483648
    %v1100 = vor.u32 1.1754944e-38, %v1099
    %v1101 = vsel %vm1098, %v1100, %v1096
    %v1102 = vmul.f32 1.0, %v1101
    %v1103 = vrcp.pop %v1087
    %v1104 = vmul.f32 %v1087, %v1103
    %v1105 = vsub.f32 1.0, %v1104
    %v1106 = vmul.f32 %v1103, %v1105
    %v1107 = vadd.f32 %v1103, %v1106
    %vm1108 = vweird.f32 %v1087
    %vm1109 = vweird.f32 %v1103
    %vm1110 = vmor %vm1108, %vm1109
    %v1111 = vsel %vm1110, %v1103, %v1107
    %v1112 = vand.u32 2147483647, %v1087
    %vm1113 = vcmp.eq.f32.partialorder %v1112, 8.507059e+37
    %v1114 = vand.u32 %v1087, 2147483648
    %v1115 = vor.u32 1.1754944e-38, %v1114
    %v1116 = vsel %vm1113, %v1115, %v1111
    %v1117 = vmul.f32 1.0, %v1116
    %v1118 = vadd.f32 %v1042, %v395
    %1120 = vrot.lane.b32.xlu0 %v1118, 64
    %v1121 = vpop.permute.xlu0 %1120
    %v1123 = vmul.f32 %v1077, %v1121
    %1125 = vrot.lane.b32.xlu0 %v1123, 64
    %v1126 = vpop.permute.xlu0 %1125
    %v1128 = vadd.f32 %v1015, %v1126
    %v1129 = vtanh.pop %v1128
    %v1130 = vadd.f32 %v1055, %v393
    %1132 = vrot.lane.b32.xlu0 %v1130, 64
    %v1133 = vpop.permute.xlu0 %1132
    %v1135 = vmul.f32 %v1102, %v1133
    %1137 = vrot.lane.b32.xlu0 %v1135, 64
    %v1138 = vpop.permute.xlu0 %1137
    %v1140 = vadd.f32 %v1018, %v1138
    %v1141 = vtanh.pop %v1140
    %v1142 = vsub.f32 1.0, %v1077
    %1144 = vrot.lane.b32.xlu0 %v1129, 96
    %v1145 = vpop.permute.xlu0 %1144
    %v1147 = vmul.f32 %v1142, %v1145
    %v1148 = vmul.f32 %v1077, %v994
    %v1149 = vadd.f32 %v1147, %v1148
    %v1150 = vsub.f32 1.0, %v1117
    %1152 = vrot.lane.b32.xlu0 %v1141, 96
    %v1153 = vpop.permute.xlu0 %1152
    %v1155 = vmul.f32 %v1150, %v1153
    %v1156 = vmul.f32 %v1117, %v997
    %v1157 = vadd.f32 %v1155, %v1156
    %v1158 = vmul.f32 %v1149, %v1005
    %1160 = vrot.lane.b32.xlu0 %v1158, 96
    %v1161 = vpop.permute.xlu0 %1160
    %s1163 = scalar_lea.vmem [#allocation3], 32
    %1164 = vst.msk [vmem:[%s1163] sm:$0xff] %vm111, %v1161
    %v1165 = vmul.f32 %v1157, %v1013
    %1167 = vrot.lane.b32.xlu0 %v1165, 32
    %v1168 = vpop.permute.xlu0 %1167
    %s1170 = scalar_lea.vmem [#allocation3], 56
    %1171 = vst.msk [vmem:[%s1170] sm:$0xff] %vm450, %v1168
    %v1172 = vsub.f32 1.0, %v1005
    %v1173 = vmul.f32 %v1172, %v994
    %v1174 = vadd.f32 %v1158, %v1173
    %v1175 = vsub.f32 1.0, %v1013
    %v1176 = vmul.f32 %v1175, %v997
    %v1177 = vadd.f32 %v1165, %v1176
    %v1178 = vld [vmem:[%s7 + $0x5] sm:$0x1]
    %v1179 = vperm.slane %v1178, 0
    %v1180 = vlaneseq
    %v1181 = vshrl.u32 %v1180, 7
    %1183 = vset.pattern.permute.xlu0 %v1181
    %1184 = vperm.xlu0 %1183, %v1179
    %v1185 = vpop.permute.xlu0 %1184
    %v1186 = vld [vmem:[%s7 + $0x6] sm:$0x1]
    %v1187 = vperm.slane %v1186, 0
    %v1188 = vlaneseq
    %v1189 = vshrl.u32 %v1188, 7
    %1191 = vset.pattern.permute.xlu0 %v1189
    %1192 = vperm.xlu0 %1191, %v1187
    %v1193 = vpop.permute.xlu0 %1192
    %s1194 = scalar_lea.vmem [#allocation2], 80
    %v1195 = vld [vmem:[%s1194] sm:$0xff]
    %s1196 = scalar_lea.vmem [#allocation2], 96
    %v1197 = vld [vmem:[%s1196] sm:$0xff]
    %v1198 = vld [vmem:[%s1196 + $0x8] sm:$0xff]
    %1200 = vrot.lane.b32.xlu0 %v1174, 96
    %v1201 = vpop.permute.xlu0 %1200
    %1204 = vrot.lane.b32.xlu0 %v1177, 32
    %v1205 = vpop.permute.xlu0 %1204
    %v1207 = vsel %vm111, %v1201, %v1205
    %v1208 = vpack.c.bf16 %v1207, %v1207
    %v1210 = vsel %vm209, %v1208, 0
    %1212 = vmatpush.bf16.msra.mxu0 0
    %1213 = vmatpush.bf16.msra.mxu0 0
    %1214 = vmatpush.bf16.msra.mxu0 0
    %1215 = vmatpush.bf16.msra.mxu0 0
    %1216 = vmatpush.bf16.msra.mxu0 %v293
    %1217 = vmatpush.bf16.msra.mxu0 %v291
    %1218 = vmatpush.bf16.msra.mxu0 %v289
    %1219 = vmatpush.bf16.msra.mxu0 %v287
    %1220 = vmatmul.bf16.gmra.mxu0 %v1210
    %v1221 = vpop.f32.mrf.mxu0
    %v1222 = vadd.f32 0.0, %v1221
    %v1223 = vpop.f32.mrf.mxu0
    %1224 = vdwg.mxu0
    %1225 = vmatpush.bf16.msra.mxu0 0
    %1226 = vmatpush.bf16.msra.mxu0 0
    %1227 = vmatpush.bf16.msra.mxu0 0
    %1228 = vmatpush.bf16.msra.mxu0 0
    %1229 = vmatpush.bf16.msra.mxu0 %v294
    %1230 = vmatpush.bf16.msra.mxu0 %v292
    %1231 = vmatpush.bf16.msra.mxu0 %v290
    %1232 = vmatpush.bf16.msra.mxu0 %v288
    %1233 = vmatmul.bf16.gmra.mxu0 %v1210
    %v1234 = vpop.f32.mrf.mxu0
    %v1235 = vadd.f32 0.0, %v1234
    %v1236 = vpop.f32.mrf.mxu0
    %1237 = vdwg.mxu0
    %v1238 = vadd.f32 %v1195, %v1222
    %v1239 = vxor.u32 %v1238, 2147483648
    %v1240 = vmul.f32 %v1239, 1.442695
    %v1241 = vpow.pop %v1240
    %v1242 = vadd.f32 %v1241, 1.0
    %v1243 = vrcp.pop %v1242
    %v1244 = vmul.f32 %v1242, %v1243
    %v1245 = vsub.f32 1.0, %v1244
    %v1246 = vmul.f32 %v1243, %v1245
    %v1247 = vadd.f32 %v1243, %v1246
    %vm1248 = vweird.f32 %v1242
    %vm1249 = vweird.f32 %v1243
    %vm1250 = vmor %vm1248, %vm1249
    %v1251 = vsel %vm1250, %v1243, %v1247
    %v1252 = vand.u32 2147483647, %v1242
    %vm1253 = vcmp.eq.f32.partialorder %v1252, 8.507059e+37
    %v1254 = vand.u32 %v1242, 2147483648
    %v1255 = vor.u32 1.1754944e-38, %v1254
    %v1256 = vsel %vm1253, %v1255, %v1251
    %v1257 = vmul.f32 1.0, %v1256
    %v1258 = vadd.f32 %v1197, %v1222
    %v1259 = vadd.f32 %v1198, %v1235
    %v1260 = vxor.u32 %v1258, 2147483648
    %v1261 = vxor.u32 %v1259, 2147483648
    %v1262 = vmul.f32 %v1260, 1.442695
    %v1263 = vpow.pop %v1262
    %v1264 = vmul.f32 %v1261, 1.442695
    %v1265 = vpow.pop %v1264
    %v1266 = vadd.f32 %v1263, 1.0
    %v1267 = vadd.f32 %v1265, 1.0
    %v1268 = vrcp.pop %v1266
    %v1269 = vmul.f32 %v1266, %v1268
    %v1270 = vsub.f32 1.0, %v1269
    %v1271 = vmul.f32 %v1268, %v1270
    %v1272 = vadd.f32 %v1268, %v1271
    %vm1273 = vweird.f32 %v1266
    %vm1274 = vweird.f32 %v1268
    %vm1275 = vmor %vm1273, %vm1274
    %v1276 = vsel %vm1275, %v1268, %v1272
    %v1277 = vand.u32 2147483647, %v1266
    %vm1278 = vcmp.eq.f32.partialorder %v1277, 8.507059e+37
    %v1279 = vand.u32 %v1266, 2147483648
    %v1280 = vor.u32 1.1754944e-38, %v1279
    %v1281 = vsel %vm1278, %v1280, %v1276
    %v1282 = vmul.f32 1.0, %v1281
    %v1283 = vrcp.pop %v1267
    %v1284 = vmul.f32 %v1267, %v1283
    %v1285 = vsub.f32 1.0, %v1284
    %v1286 = vmul.f32 %v1283, %v1285
    %v1287 = vadd.f32 %v1283, %v1286
    %vm1288 = vweird.f32 %v1267
    %vm1289 = vweird.f32 %v1283
    %vm1290 = vmor %vm1288, %vm1289
    %v1291 = vsel %vm1290, %v1283, %v1287
    %v1292 = vand.u32 2147483647, %v1267
    %vm1293 = vcmp.eq.f32.partialorder %v1292, 8.507059e+37
    %v1294 = vand.u32 %v1267, 2147483648
    %v1295 = vor.u32 1.1754944e-38, %v1294
    %v1296 = vsel %vm1293, %v1295, %v1291
    %v1297 = vmul.f32 1.0, %v1296
    %v1298 = vadd.f32 %v1222, %v395
    %1300 = vrot.lane.b32.xlu0 %v1298, 64
    %v1301 = vpop.permute.xlu0 %1300
    %v1303 = vmul.f32 %v1257, %v1301
    %1305 = vrot.lane.b32.xlu0 %v1303, 64
    %v1306 = vpop.permute.xlu0 %1305
    %v1308 = vadd.f32 %v1195, %v1306
    %v1309 = vtanh.pop %v1308
    %v1310 = vadd.f32 %v1235, %v393
    %1312 = vrot.lane.b32.xlu0 %v1310, 64
    %v1313 = vpop.permute.xlu0 %1312
    %v1315 = vmul.f32 %v1282, %v1313
    %1317 = vrot.lane.b32.xlu0 %v1315, 64
    %v1318 = vpop.permute.xlu0 %1317
    %v1320 = vadd.f32 %v1198, %v1318
    %v1321 = vtanh.pop %v1320
    %v1322 = vsub.f32 1.0, %v1257
    %1324 = vrot.lane.b32.xlu0 %v1309, 96
    %v1325 = vpop.permute.xlu0 %1324
    %v1327 = vmul.f32 %v1322, %v1325
    %v1328 = vmul.f32 %v1257, %v1174
    %v1329 = vadd.f32 %v1327, %v1328
    %v1330 = vsub.f32 1.0, %v1297
    %1332 = vrot.lane.b32.xlu0 %v1321, 96
    %v1333 = vpop.permute.xlu0 %1332
    %v1335 = vmul.f32 %v1330, %v1333
    %v1336 = vmul.f32 %v1297, %v1177
    %v1337 = vadd.f32 %v1335, %v1336
    %v1338 = vmul.f32 %v1329, %v1185
    %1340 = vrot.lane.b32.xlu0 %v1338, 96
    %v1341 = vpop.permute.xlu0 %1340
    %s1343 = scalar_lea.vmem [#allocation3], 40
    %1344 = vst.msk [vmem:[%s1343] sm:$0xff] %vm111, %v1341
    %v1345 = vmul.f32 %v1337, %v1193
    %1347 = vrot.lane.b32.xlu0 %v1345, 32
    %v1348 = vpop.permute.xlu0 %1347
    %s1350 = scalar_lea.vmem [#allocation3], 48
    %1351 = vst.msk [vmem:[%s1350] sm:$0xff] %vm450, %v1348
    %v1352 = vsub.f32 1.0, %v1185
    %v1353 = vmul.f32 %v1352, %v1174
    %v1354 = vadd.f32 %v1338, %v1353
    %v1355 = vsub.f32 1.0, %v1193
    %v1356 = vmul.f32 %v1355, %v1177
    %v1357 = vadd.f32 %v1345, %v1356
    %v1358 = vld [vmem:[%s7 + $0x6] sm:$0x1]
    %v1359 = vperm.slane %v1358, 0
    %v1360 = vlaneseq
    %v1361 = vshrl.u32 %v1360, 7
    %1363 = vset.pattern.permute.xlu0 %v1361
    %1364 = vperm.xlu0 %1363, %v1359
    %v1365 = vpop.permute.xlu0 %1364
    %v1366 = vld [vmem:[%s7 + $0x5] sm:$0x1]
    %v1367 = vperm.slane %v1366, 0
    %v1368 = vlaneseq
    %v1369 = vshrl.u32 %v1368, 7
    %1371 = vset.pattern.permute.xlu0 %v1369
    %1372 = vperm.xlu0 %1371, %v1367
    %v1373 = vpop.permute.xlu0 %1372
    %v1374 = vld [vmem:[%s1196] sm:$0xff]
    %v1375 = vld [vmem:[%s1194] sm:$0xff]
    %v1376 = vld [vmem:[%s1194 + $0x8] sm:$0xff]
    %1378 = vrot.lane.b32.xlu0 %v1354, 96
    %v1379 = vpop.permute.xlu0 %1378
    %1382 = vrot.lane.b32.xlu0 %v1357, 32
    %v1383 = vpop.permute.xlu0 %1382
    %v1385 = vsel %vm111, %v1379, %v1383
    %v1386 = vpack.c.bf16 %v1385, %v1385
    %v1388 = vsel %vm209, %v1386, 0
    %1390 = vmatpush.bf16.msra.mxu0 0
    %1391 = vmatpush.bf16.msra.mxu0 0
    %1392 = vmatpush.bf16.msra.mxu0 0
    %1393 = vmatpush.bf16.msra.mxu0 0
    %1394 = vmatpush.bf16.msra.mxu0 %v293
    %1395 = vmatpush.bf16.msra.mxu0 %v291
    %1396 = vmatpush.bf16.msra.mxu0 %v289
    %1397 = vmatpush.bf16.msra.mxu0 %v287
    %1398 = vmatmul.bf16.gmra.mxu0 %v1388
    %v1399 = vpop.f32.mrf.mxu0
    %v1400 = vadd.f32 0.0, %v1399
    %v1401 = vpop.f32.mrf.mxu0
    %1402 = vdwg.mxu0
    %1403 = vmatpush.bf16.msra.mxu0 0
    %1404 = vmatpush.bf16.msra.mxu0 0
    %1405 = vmatpush.bf16.msra.mxu0 0
    %1406 = vmatpush.bf16.msra.mxu0 0
    %1407 = vmatpush.bf16.msra.mxu0 %v294
    %1408 = vmatpush.bf16.msra.mxu0 %v292
    %1409 = vmatpush.bf16.msra.mxu0 %v290
    %1410 = vmatpush.bf16.msra.mxu0 %v288
    %1411 = vmatmul.bf16.gmra.mxu0 %v1388
    %v1412 = vpop.f32.mrf.mxu0
    %v1413 = vadd.f32 0.0, %v1412
    %v1414 = vpop.f32.mrf.mxu0
    %1415 = vdwg.mxu0
    %v1416 = vadd.f32 %v1374, %v1400
    %v1417 = vxor.u32 %v1416, 2147483648
    %v1418 = vmul.f32 %v1417, 1.442695
    %v1419 = vpow.pop %v1418
    %v1420 = vadd.f32 %v1419, 1.0
    %v1421 = vrcp.pop %v1420
    %v1422 = vmul.f32 %v1420, %v1421
    %v1423 = vsub.f32 1.0, %v1422
    %v1424 = vmul.f32 %v1421, %v1423
    %v1425 = vadd.f32 %v1421, %v1424
    %vm1426 = vweird.f32 %v1420
    %vm1427 = vweird.f32 %v1421
    %vm1428 = vmor %vm1426, %vm1427
    %v1429 = vsel %vm1428, %v1421, %v1425
    %v1430 = vand.u32 2147483647, %v1420
    %vm1431 = vcmp.eq.f32.partialorder %v1430, 8.507059e+37
    %v1432 = vand.u32 %v1420, 2147483648
    %v1433 = vor.u32 1.1754944e-38, %v1432
    %v1434 = vsel %vm1431, %v1433, %v1429
    %v1435 = vmul.f32 1.0, %v1434
    %v1436 = vadd.f32 %v1375, %v1400
    %v1437 = vadd.f32 %v1376, %v1413
    %v1438 = vxor.u32 %v1436, 2147483648
    %v1439 = vxor.u32 %v1437, 2147483648
    %v1440 = vmul.f32 %v1438, 1.442695
    %v1441 = vpow.pop %v1440
    %v1442 = vmul.f32 %v1439, 1.442695
    %v1443 = vpow.pop %v1442
    %v1444 = vadd.f32 %v1441, 1.0
    %v1445 = vadd.f32 %v1443, 1.0
    %v1446 = vrcp.pop %v1444
    %v1447 = vmul.f32 %v1444, %v1446
    %v1448 = vsub.f32 1.0, %v1447
    %v1449 = vmul.f32 %v1446, %v1448
    %v1450 = vadd.f32 %v1446, %v1449
    %vm1451 = vweird.f32 %v1444
    %vm1452 = vweird.f32 %v1446
    %vm1453 = vmor %vm1451, %vm1452
    %v1454 = vsel %vm1453, %v1446, %v1450
    %v1455 = vand.u32 2147483647, %v1444
    %vm1456 = vcmp.eq.f32.partialorder %v1455, 8.507059e+37
    %v1457 = vand.u32 %v1444, 2147483648
    %v1458 = vor.u32 1.1754944e-38, %v1457
    %v1459 = vsel %vm1456, %v1458, %v1454
    %v1460 = vmul.f32 1.0, %v1459
    %v1461 = vrcp.pop %v1445
    %v1462 = vmul.f32 %v1445, %v1461
    %v1463 = vsub.f32 1.0, %v1462
    %v1464 = vmul.f32 %v1461, %v1463
    %v1465 = vadd.f32 %v1461, %v1464
    %vm1466 = vweird.f32 %v1445
    %vm1467 = vweird.f32 %v1461
    %vm1468 = vmor %vm1466, %vm1467
    %v1469 = vsel %vm1468, %v1461, %v1465
    %v1470 = vand.u32 2147483647, %v1445
    %vm1471 = vcmp.eq.f32.partialorder %v1470, 8.507059e+37
    %v1472 = vand.u32 %v1445, 2147483648
    %v1473 = vor.u32 1.1754944e-38, %v1472
    %v1474 = vsel %vm1471, %v1473, %v1469
    %v1475 = vmul.f32 1.0, %v1474
    %v1476 = vadd.f32 %v1400, %v395
    %1478 = vrot.lane.b32.xlu0 %v1476, 64
    %v1479 = vpop.permute.xlu0 %1478
    %v1481 = vmul.f32 %v1435, %v1479
    %1483 = vrot.lane.b32.xlu0 %v1481, 64
    %v1484 = vpop.permute.xlu0 %1483
    %v1486 = vadd.f32 %v1374, %v1484
    %v1487 = vtanh.pop %v1486
    %v1488 = vadd.f32 %v1413, %v393
    %1490 = vrot.lane.b32.xlu0 %v1488, 64
    %v1491 = vpop.permute.xlu0 %1490
    %v1493 = vmul.f32 %v1460, %v1491
    %1495 = vrot.lane.b32.xlu0 %v1493, 64
    %v1496 = vpop.permute.xlu0 %1495
    %v1498 = vadd.f32 %v1376, %v1496
    %v1499 = vtanh.pop %v1498
    %v1500 = vsub.f32 1.0, %v1435
    %1502 = vrot.lane.b32.xlu0 %v1487, 96
    %v1503 = vpop.permute.xlu0 %1502
    %v1505 = vmul.f32 %v1500, %v1503
    %v1506 = vmul.f32 %v1435, %v1354
    %v1507 = vadd.f32 %v1505, %v1506
    %v1508 = vsub.f32 1.0, %v1475
    %1510 = vrot.lane.b32.xlu0 %v1499, 96
    %v1511 = vpop.permute.xlu0 %1510
    %v1513 = vmul.f32 %v1508, %v1511
    %v1514 = vmul.f32 %v1475, %v1357
    %v1515 = vadd.f32 %v1513, %v1514
    %v1516 = vmul.f32 %v1507, %v1365
    %1518 = vrot.lane.b32.xlu0 %v1516, 96
    %v1519 = vpop.permute.xlu0 %1518
    %1521 = vst.msk [vmem:[%s1350] sm:$0xff] %vm111, %v1519
    %v1522 = vmul.f32 %v1515, %v1373
    %1524 = vrot.lane.b32.xlu0 %v1522, 32
    %v1525 = vpop.permute.xlu0 %1524
    %1527 = vst.msk [vmem:[%s1343] sm:$0xff] %vm450, %v1525
    %v1528 = vsub.f32 1.0, %v1365
    %v1529 = vmul.f32 %v1528, %v1354
    %v1530 = vadd.f32 %v1516, %v1529
    %v1531 = vsub.f32 1.0, %v1373
    %v1532 = vmul.f32 %v1531, %v1357
    %v1533 = vadd.f32 %v1522, %v1532
    %v1534 = vld [vmem:[%s7 + $0x7] sm:$0x1]
    %v1535 = vperm.slane %v1534, 0
    %v1536 = vlaneseq
    %v1537 = vshrl.u32 %v1536, 7
    %1539 = vset.pattern.permute.xlu0 %v1537
    %1540 = vperm.xlu0 %1539, %v1535
    %v1541 = vpop.permute.xlu0 %1540
    %v1542 = vld [vmem:[%s7 + $0x4] sm:$0x1]
    %v1543 = vperm.slane %v1542, 0
    %v1544 = vlaneseq
    %v1545 = vshrl.u32 %v1544, 7
    %1547 = vset.pattern.permute.xlu0 %v1545
    %1548 = vperm.xlu0 %1547, %v1543
    %v1549 = vpop.permute.xlu0 %1548
    %v1550 = vld [vmem:[%s1016] sm:$0xff]
    %v1551 = vld [vmem:[%s1014] sm:$0xff]
    %v1552 = vld [vmem:[%s1014 + $0x8] sm:$0xff]
    %1554 = vrot.lane.b32.xlu0 %v1530, 96
    %v1555 = vpop.permute.xlu0 %1554
    %1558 = vrot.lane.b32.xlu0 %v1533, 32
    %v1559 = vpop.permute.xlu0 %1558
    %v1561 = vsel %vm111, %v1555, %v1559
    %v1562 = vpack.c.bf16 %v1561, %v1561
    %v1564 = vsel %vm209, %v1562, 0
    %1566 = vmatpush.bf16.msra.mxu0 0
    %1567 = vmatpush.bf16.msra.mxu0 0
    %1568 = vmatpush.bf16.msra.mxu0 0
    %1569 = vmatpush.bf16.msra.mxu0 0
    %1570 = vmatpush.bf16.msra.mxu0 %v293
    %1571 = vmatpush.bf16.msra.mxu0 %v291
    %1572 = vmatpush.bf16.msra.mxu0 %v289
    %1573 = vmatpush.bf16.msra.mxu0 %v287
    %1574 = vmatmul.bf16.gmra.mxu0 %v1564
    %v1575 = vpop.f32.mrf.mxu0
    %v1576 = vadd.f32 0.0, %v1575
    %v1577 = vpop.f32.mrf.mxu0
    %1578 = vdwg.mxu0
    %1579 = vmatpush.bf16.msra.mxu0 0
    %1580 = vmatpush.bf16.msra.mxu0 0
    %1581 = vmatpush.bf16.msra.mxu0 0
    %1582 = vmatpush.bf16.msra.mxu0 0
    %1583 = vmatpush.bf16.msra.mxu0 %v294
    %1584 = vmatpush.bf16.msra.mxu0 %v292
    %1585 = vmatpush.bf16.msra.mxu0 %v290
    %1586 = vmatpush.bf16.msra.mxu0 %v288
    %1587 = vmatmul.bf16.gmra.mxu0 %v1564
    %v1588 = vpop.f32.mrf.mxu0
    %v1589 = vadd.f32 0.0, %v1588
    %v1590 = vpop.f32.mrf.mxu0
    %1591 = vdwg.mxu0
    %v1592 = vadd.f32 %v1550, %v1576
    %v1593 = vxor.u32 %v1592, 2147483648
    %v1594 = vmul.f32 %v1593, 1.442695
    %v1595 = vpow.pop %v1594
    %v1596 = vadd.f32 %v1595, 1.0
    %v1597 = vrcp.pop %v1596
    %v1598 = vmul.f32 %v1596, %v1597
    %v1599 = vsub.f32 1.0, %v1598
    %v1600 = vmul.f32 %v1597, %v1599
    %v1601 = vadd.f32 %v1597, %v1600
    %vm1602 = vweird.f32 %v1596
    %vm1603 = vweird.f32 %v1597
    %vm1604 = vmor %vm1602, %vm1603
    %v1605 = vsel %vm1604, %v1597, %v1601
    %v1606 = vand.u32 2147483647, %v1596
    %vm1607 = vcmp.eq.f32.partialorder %v1606, 8.507059e+37
    %v1608 = vand.u32 %v1596, 2147483648
    %v1609 = vor.u32 1.1754944e-38, %v1608
    %v1610 = vsel %vm1607, %v1609, %v1605
    %v1611 = vmul.f32 1.0, %v1610
    %v1612 = vadd.f32 %v1551, %v1576
    %v1613 = vadd.f32 %v1552, %v1589
    %v1614 = vxor.u32 %v1612, 2147483648
    %v1615 = vxor.u32 %v1613, 2147483648
    %v1616 = vmul.f32 %v1614, 1.442695
    %v1617 = vpow.pop %v1616
    %v1618 = vmul.f32 %v1615, 1.442695
    %v1619 = vpow.pop %v1618
    %v1620 = vadd.f32 %v1617, 1.0
    %v1621 = vadd.f32 %v1619, 1.0
    %v1622 = vrcp.pop %v1620
    %v1623 = vmul.f32 %v1620, %v1622
    %v1624 = vsub.f32 1.0, %v1623
    %v1625 = vmul.f32 %v1622, %v1624
    %v1626 = vadd.f32 %v1622, %v1625
    %vm1627 = vweird.f32 %v1620
    %vm1628 = vweird.f32 %v1622
    %vm1629 = vmor %vm1627, %vm1628
    %v1630 = vsel %vm1629, %v1622, %v1626
    %v1631 = vand.u32 2147483647, %v1620
    %vm1632 = vcmp.eq.f32.partialorder %v1631, 8.507059e+37
    %v1633 = vand.u32 %v1620, 2147483648
    %v1634 = vor.u32 1.1754944e-38, %v1633
    %v1635 = vsel %vm1632, %v1634, %v1630
    %v1636 = vmul.f32 1.0, %v1635
    %v1637 = vrcp.pop %v1621
    %v1638 = vmul.f32 %v1621, %v1637
    %v1639 = vsub.f32 1.0, %v1638
    %v1640 = vmul.f32 %v1637, %v1639
    %v1641 = vadd.f32 %v1637, %v1640
    %vm1642 = vweird.f32 %v1621
    %vm1643 = vweird.f32 %v1637
    %vm1644 = vmor %vm1642, %vm1643
    %v1645 = vsel %vm1644, %v1637, %v1641
    %v1646 = vand.u32 2147483647, %v1621
    %vm1647 = vcmp.eq.f32.partialorder %v1646, 8.507059e+37
    %v1648 = vand.u32 %v1621, 2147483648
    %v1649 = vor.u32 1.1754944e-38, %v1648
    %v1650 = vsel %vm1647, %v1649, %v1645
    %v1651 = vmul.f32 1.0, %v1650
    %v1652 = vadd.f32 %v1576, %v395
    %1654 = vrot.lane.b32.xlu0 %v1652, 64
    %v1655 = vpop.permute.xlu0 %1654
    %v1657 = vmul.f32 %v1611, %v1655
    %1659 = vrot.lane.b32.xlu0 %v1657, 64
    %v1660 = vpop.permute.xlu0 %1659
    %v1662 = vadd.f32 %v1550, %v1660
    %v1663 = vtanh.pop %v1662
    %v1664 = vadd.f32 %v1589, %v393
    %1666 = vrot.lane.b32.xlu0 %v1664, 64
    %v1667 = vpop.permute.xlu0 %1666
    %v1669 = vmul.f32 %v1636, %v1667
    %1671 = vrot.lane.b32.xlu0 %v1669, 64
    %v1672 = vpop.permute.xlu0 %1671
    %v1674 = vadd.f32 %v1552, %v1672
    %v1675 = vtanh.pop %v1674
    %v1676 = vsub.f32 1.0, %v1611
    %1678 = vrot.lane.b32.xlu0 %v1663, 96
    %v1679 = vpop.permute.xlu0 %1678
    %v1681 = vmul.f32 %v1676, %v1679
    %v1682 = vmul.f32 %v1611, %v1530
    %v1683 = vadd.f32 %v1681, %v1682
    %v1684 = vsub.f32 1.0, %v1651
    %1686 = vrot.lane.b32.xlu0 %v1675, 96
    %v1687 = vpop.permute.xlu0 %1686
    %v1689 = vmul.f32 %v1684, %v1687
    %v1690 = vmul.f32 %v1651, %v1533
    %v1691 = vadd.f32 %v1689, %v1690
    %v1692 = vmul.f32 %v1683, %v1541
    %1694 = vrot.lane.b32.xlu0 %v1692, 96
    %v1695 = vpop.permute.xlu0 %1694
    %1697 = vst.msk [vmem:[%s1170] sm:$0xff] %vm111, %v1695
    %v1698 = vmul.f32 %v1691, %v1549
    %1700 = vrot.lane.b32.xlu0 %v1698, 32
    %v1701 = vpop.permute.xlu0 %1700
    %1703 = vst.msk [vmem:[%s1163] sm:$0xff] %vm450, %v1701
    %v1704 = vsub.f32 1.0, %v1541
    %v1705 = vmul.f32 %v1704, %v1530
    %v1706 = vadd.f32 %v1692, %v1705
    %v1707 = vsub.f32 1.0, %v1549
    %v1708 = vmul.f32 %v1707, %v1533
    %v1709 = vadd.f32 %v1698, %v1708
    %v1710 = vld [vmem:[%s7 + $0x8] sm:$0x1]
    %v1711 = vperm.slane %v1710, 0
    %v1712 = vlaneseq
    %v1713 = vshrl.u32 %v1712, 7
    %1715 = vset.pattern.permute.xlu0 %v1713
    %1716 = vperm.xlu0 %1715, %v1711
    %v1717 = vpop.permute.xlu0 %1716
    %v1718 = vld [vmem:[%s7 + $0x3] sm:$0x1]
    %v1719 = vperm.slane %v1718, 0
    %v1720 = vlaneseq
    %v1721 = vshrl.u32 %v1720, 7
    %1723 = vset.pattern.permute.xlu0 %v1721
    %1724 = vperm.xlu0 %1723, %v1719
    %v1725 = vpop.permute.xlu0 %1724
    %v1726 = vld [vmem:[%s836] sm:$0xff]
    %v1727 = vld [vmem:[%s834] sm:$0xff]
    %v1728 = vld [vmem:[%s834 + $0x8] sm:$0xff]
    %1730 = vrot.lane.b32.xlu0 %v1706, 96
    %v1731 = vpop.permute.xlu0 %1730
    %1734 = vrot.lane.b32.xlu0 %v1709, 32
    %v1735 = vpop.permute.xlu0 %1734
    %v1737 = vsel %vm111, %v1731, %v1735
    %v1738 = vpack.c.bf16 %v1737, %v1737
    %v1740 = vsel %vm209, %v1738, 0
    %1742 = vmatpush.bf16.msra.mxu0 0
    %1743 = vmatpush.bf16.msra.mxu0 0
    %1744 = vmatpush.bf16.msra.mxu0 0
    %1745 = vmatpush.bf16.msra.mxu0 0
    %1746 = vmatpush.bf16.msra.mxu0 %v293
    %1747 = vmatpush.bf16.msra.mxu0 %v291
    %1748 = vmatpush.bf16.msra.mxu0 %v289
    %1749 = vmatpush.bf16.msra.mxu0 %v287
    %1750 = vmatmul.bf16.gmra.mxu0 %v1740
    %v1751 = vpop.f32.mrf.mxu0
    %v1752 = vadd.f32 0.0, %v1751
    %v1753 = vpop.f32.mrf.mxu0
    %1754 = vdwg.mxu0
    %1755 = vmatpush.bf16.msra.mxu0 0
    %1756 = vmatpush.bf16.msra.mxu0 0
    %1757 = vmatpush.bf16.msra.mxu0 0
    %1758 = vmatpush.bf16.msra.mxu0 0
    %1759 = vmatpush.bf16.msra.mxu0 %v294
    %1760 = vmatpush.bf16.msra.mxu0 %v292
    %1761 = vmatpush.bf16.msra.mxu0 %v290
    %1762 = vmatpush.bf16.msra.mxu0 %v288
    %1763 = vmatmul.bf16.gmra.mxu0 %v1740
    %v1764 = vpop.f32.mrf.mxu0
    %v1765 = vadd.f32 0.0, %v1764
    %v1766 = vpop.f32.mrf.mxu0
    %1767 = vdwg.mxu0
    %v1768 = vadd.f32 %v1726, %v1752
    %v1769 = vxor.u32 %v1768, 2147483648
    %v1770 = vmul.f32 %v1769, 1.442695
    %v1771 = vpow.pop %v1770
    %v1772 = vadd.f32 %v1771, 1.0
    %v1773 = vrcp.pop %v1772
    %v1774 = vmul.f32 %v1772, %v1773
    %v1775 = vsub.f32 1.0, %v1774
    %v1776 = vmul.f32 %v1773, %v1775
    %v1777 = vadd.f32 %v1773, %v1776
    %vm1778 = vweird.f32 %v1772
    %vm1779 = vweird.f32 %v1773
    %vm1780 = vmor %vm1778, %vm1779
    %v1781 = vsel %vm1780, %v1773, %v1777
    %v1782 = vand.u32 2147483647, %v1772
    %vm1783 = vcmp.eq.f32.partialorder %v1782, 8.507059e+37
    %v1784 = vand.u32 %v1772, 2147483648
    %v1785 = vor.u32 1.1754944e-38, %v1784
    %v1786 = vsel %vm1783, %v1785, %v1781
    %v1787 = vmul.f32 1.0, %v1786
    %v1788 = vadd.f32 %v1727, %v1752
    %v1789 = vadd.f32 %v1728, %v1765
    %v1790 = vxor.u32 %v1788, 2147483648
    %v1791 = vxor.u32 %v1789, 2147483648
    %v1792 = vmul.f32 %v1790, 1.442695
    %v1793 = vpow.pop %v1792
    %v1794 = vmul.f32 %v1791, 1.442695
    %v1795 = vpow.pop %v1794
    %v1796 = vadd.f32 %v1793, 1.0
    %v1797 = vadd.f32 %v1795, 1.0
    %v1798 = vrcp.pop %v1796
    %v1799 = vmul.f32 %v1796, %v1798
    %v1800 = vsub.f32 1.0, %v1799
    %v1801 = vmul.f32 %v1798, %v1800
    %v1802 = vadd.f32 %v1798, %v1801
    %vm1803 = vweird.f32 %v1796
    %vm1804 = vweird.f32 %v1798
    %vm1805 = vmor %vm1803, %vm1804
    %v1806 = vsel %vm1805, %v1798, %v1802
    %v1807 = vand.u32 2147483647, %v1796
    %vm1808 = vcmp.eq.f32.partialorder %v1807, 8.507059e+37
    %v1809 = vand.u32 %v1796, 2147483648
    %v1810 = vor.u32 1.1754944e-38, %v1809
    %v1811 = vsel %vm1808, %v1810, %v1806
    %v1812 = vmul.f32 1.0, %v1811
    %v1813 = vrcp.pop %v1797
    %v1814 = vmul.f32 %v1797, %v1813
    %v1815 = vsub.f32 1.0, %v1814
    %v1816 = vmul.f32 %v1813, %v1815
    %v1817 = vadd.f32 %v1813, %v1816
    %vm1818 = vweird.f32 %v1797
    %vm1819 = vweird.f32 %v1813
    %vm1820 = vmor %vm1818, %vm1819
    %v1821 = vsel %vm1820, %v1813, %v1817
    %v1822 = vand.u32 2147483647, %v1797
    %vm1823 = vcmp.eq.f32.partialorder %v1822, 8.507059e+37
    %v1824 = vand.u32 %v1797, 2147483648
    %v1825 = vor.u32 1.1754944e-38, %v1824
    %v1826 = vsel %vm1823, %v1825, %v1821
    %v1827 = vmul.f32 1.0, %v1826
    %v1828 = vadd.f32 %v1752, %v395
    %1830 = vrot.lane.b32.xlu0 %v1828, 64
    %v1831 = vpop.permute.xlu0 %1830
    %v1833 = vmul.f32 %v1787, %v1831
    %1835 = vrot.lane.b32.xlu0 %v1833, 64
    %v1836 = vpop.permute.xlu0 %1835
    %v1838 = vadd.f32 %v1726, %v1836
    %v1839 = vtanh.pop %v1838
    %v1840 = vadd.f32 %v1765, %v393
    %1842 = vrot.lane.b32.xlu0 %v1840, 64
    %v1843 = vpop.permute.xlu0 %1842
    %v1845 = vmul.f32 %v1812, %v1843
    %1847 = vrot.lane.b32.xlu0 %v1845, 64
    %v1848 = vpop.permute.xlu0 %1847
    %v1850 = vadd.f32 %v1728, %v1848
    %v1851 = vtanh.pop %v1850
    %v1852 = vsub.f32 1.0, %v1787
    %1854 = vrot.lane.b32.xlu0 %v1839, 96
    %v1855 = vpop.permute.xlu0 %1854
    %v1857 = vmul.f32 %v1852, %v1855
    %v1858 = vmul.f32 %v1787, %v1706
    %v1859 = vadd.f32 %v1857, %v1858
    %v1860 = vsub.f32 1.0, %v1827
    %1862 = vrot.lane.b32.xlu0 %v1851, 96
    %v1863 = vpop.permute.xlu0 %1862
    %v1865 = vmul.f32 %v1860, %v1863
    %v1866 = vmul.f32 %v1827, %v1709
    %v1867 = vadd.f32 %v1865, %v1866
    %v1868 = vmul.f32 %v1859, %v1717
    %1870 = vrot.lane.b32.xlu0 %v1868, 96
    %v1871 = vpop.permute.xlu0 %1870
    %1873 = vst.msk [vmem:[%s990] sm:$0xff] %vm111, %v1871
    %v1874 = vmul.f32 %v1867, %v1725
    %1876 = vrot.lane.b32.xlu0 %v1874, 32
    %v1877 = vpop.permute.xlu0 %1876
    %1879 = vst.msk [vmem:[%s983] sm:$0xff] %vm450, %v1877
    %v1880 = vsub.f32 1.0, %v1717
    %v1881 = vmul.f32 %v1880, %v1706
    %v1882 = vadd.f32 %v1868, %v1881
    %v1883 = vsub.f32 1.0, %v1725
    %v1884 = vmul.f32 %v1883, %v1709
    %v1885 = vadd.f32 %v1874, %v1884
    %v1886 = vld [vmem:[%s7 + $0x9] sm:$0x1]
    %v1887 = vperm.slane %v1886, 0
    %v1888 = vlaneseq
    %v1889 = vshrl.u32 %v1888, 7
    %1891 = vset.pattern.permute.xlu0 %v1889
    %1892 = vperm.xlu0 %1891, %v1887
    %v1893 = vpop.permute.xlu0 %1892
    %v1894 = vld [vmem:[%s7 + $0x2] sm:$0x1]
    %v1895 = vperm.slane %v1894, 0
    %v1896 = vlaneseq
    %v1897 = vshrl.u32 %v1896, 7
    %1899 = vset.pattern.permute.xlu0 %v1897
    %1900 = vperm.xlu0 %1899, %v1895
    %v1901 = vpop.permute.xlu0 %1900
    %v1902 = vld [vmem:[%s656] sm:$0xff]
    %v1903 = vld [vmem:[%s654] sm:$0xff]
    %v1904 = vld [vmem:[%s654 + $0x8] sm:$0xff]
    %1906 = vrot.lane.b32.xlu0 %v1882, 96
    %v1907 = vpop.permute.xlu0 %1906
    %1910 = vrot.lane.b32.xlu0 %v1885, 32
    %v1911 = vpop.permute.xlu0 %1910
    %v1913 = vsel %vm111, %v1907, %v1911
    %v1914 = vpack.c.bf16 %v1913, %v1913
    %v1916 = vsel %vm209, %v1914, 0
    %1918 = vmatpush.bf16.msra.mxu0 0
    %1919 = vmatpush.bf16.msra.mxu0 0
    %1920 = vmatpush.bf16.msra.mxu0 0
    %1921 = vmatpush.bf16.msra.mxu0 0
    %1922 = vmatpush.bf16.msra.mxu0 %v293
    %1923 = vmatpush.bf16.msra.mxu0 %v291
    %1924 = vmatpush.bf16.msra.mxu0 %v289
    %1925 = vmatpush.bf16.msra.mxu0 %v287
    %1926 = vmatmul.bf16.gmra.mxu0 %v1916
    %v1927 = vpop.f32.mrf.mxu0
    %v1928 = vadd.f32 0.0, %v1927
    %v1929 = vpop.f32.mrf.mxu0
    %1930 = vdwg.mxu0
    %1931 = vmatpush.bf16.msra.mxu0 0
    %1932 = vmatpush.bf16.msra.mxu0 0
    %1933 = vmatpush.bf16.msra.mxu0 0
    %1934 = vmatpush.bf16.msra.mxu0 0
    %1935 = vmatpush.bf16.msra.mxu0 %v294
    %1936 = vmatpush.bf16.msra.mxu0 %v292
    %1937 = vmatpush.bf16.msra.mxu0 %v290
    %1938 = vmatpush.bf16.msra.mxu0 %v288
    %1939 = vmatmul.bf16.gmra.mxu0 %v1916
    %v1940 = vpop.f32.mrf.mxu0
    %v1941 = vadd.f32 0.0, %v1940
    %v1942 = vpop.f32.mrf.mxu0
    %1943 = vdwg.mxu0
    %v1944 = vadd.f32 %v1902, %v1928
    %v1945 = vxor.u32 %v1944, 2147483648
    %v1946 = vmul.f32 %v1945, 1.442695
    %v1947 = vpow.pop %v1946
    %v1948 = vadd.f32 %v1947, 1.0
    %v1949 = vrcp.pop %v1948
    %v1950 = vmul.f32 %v1948, %v1949
    %v1951 = vsub.f32 1.0, %v1950
    %v1952 = vmul.f32 %v1949, %v1951
    %v1953 = vadd.f32 %v1949, %v1952
    %vm1954 = vweird.f32 %v1948
    %vm1955 = vweird.f32 %v1949
    %vm1956 = vmor %vm1954, %vm1955
    %v1957 = vsel %vm1956, %v1949, %v1953
    %v1958 = vand.u32 2147483647, %v1948
    %vm1959 = vcmp.eq.f32.partialorder %v1958, 8.507059e+37
    %v1960 = vand.u32 %v1948, 2147483648
    %v1961 = vor.u32 1.1754944e-38, %v1960
    %v1962 = vsel %vm1959, %v1961, %v1957
    %v1963 = vmul.f32 1.0, %v1962
    %v1964 = vadd.f32 %v1903, %v1928
    %v1965 = vadd.f32 %v1904, %v1941
    %v1966 = vxor.u32 %v1964, 2147483648
    %v1967 = vxor.u32 %v1965, 2147483648
    %v1968 = vmul.f32 %v1966, 1.442695
    %v1969 = vpow.pop %v1968
    %v1970 = vmul.f32 %v1967, 1.442695
    %v1971 = vpow.pop %v1970
    %v1972 = vadd.f32 %v1969, 1.0
    %v1973 = vadd.f32 %v1971, 1.0
    %v1974 = vrcp.pop %v1972
    %v1975 = vmul.f32 %v1972, %v1974
    %v1976 = vsub.f32 1.0, %v1975
    %v1977 = vmul.f32 %v1974, %v1976
    %v1978 = vadd.f32 %v1974, %v1977
    %vm1979 = vweird.f32 %v1972
    %vm1980 = vweird.f32 %v1974
    %vm1981 = vmor %vm1979, %vm1980
    %v1982 = vsel %vm1981, %v1974, %v1978
    %v1983 = vand.u32 2147483647, %v1972
    %vm1984 = vcmp.eq.f32.partialorder %v1983, 8.507059e+37
    %v1985 = vand.u32 %v1972, 2147483648
    %v1986 = vor.u32 1.1754944e-38, %v1985
    %v1987 = vsel %vm1984, %v1986, %v1982
    %v1988 = vmul.f32 1.0, %v1987
    %v1989 = vrcp.pop %v1973
    %v1990 = vmul.f32 %v1973, %v1989
    %v1991 = vsub.f32 1.0, %v1990
    %v1992 = vmul.f32 %v1989, %v1991
    %v1993 = vadd.f32 %v1989, %v1992
    %vm1994 = vweird.f32 %v1973
    %vm1995 = vweird.f32 %v1989
    %vm1996 = vmor %vm1994, %vm1995
    %v1997 = vsel %vm1996, %v1989, %v1993
    %v1998 = vand.u32 2147483647, %v1973
    %vm1999 = vcmp.eq.f32.partialorder %v1998, 8.507059e+37
    %v2000 = vand.u32 %v1973, 2147483648
    %v2001 = vor.u32 1.1754944e-38, %v2000
    %v2002 = vsel %vm1999, %v2001, %v1997
    %v2003 = vmul.f32 1.0, %v2002
    %v2004 = vadd.f32 %v1928, %v395
    %2006 = vrot.lane.b32.xlu0 %v2004, 64
    %v2007 = vpop.permute.xlu0 %2006
    %v2009 = vmul.f32 %v1963, %v2007
    %2011 = vrot.lane.b32.xlu0 %v2009, 64
    %v2012 = vpop.permute.xlu0 %2011
    %v2014 = vadd.f32 %v1902, %v2012
    %v2015 = vtanh.pop %v2014
    %v2016 = vadd.f32 %v1941, %v393
    %2018 = vrot.lane.b32.xlu0 %v2016, 64
    %v2019 = vpop.permute.xlu0 %2018
    %v2021 = vmul.f32 %v1988, %v2019
    %2023 = vrot.lane.b32.xlu0 %v2021, 64
    %v2024 = vpop.permute.xlu0 %2023
    %v2026 = vadd.f32 %v1904, %v2024
    %v2027 = vtanh.pop %v2026
    %v2028 = vsub.f32 1.0, %v1963
    %2030 = vrot.lane.b32.xlu0 %v2015, 96
    %v2031 = vpop.permute.xlu0 %2030
    %v2033 = vmul.f32 %v2028, %v2031
    %v2034 = vmul.f32 %v1963, %v1882
    %v2035 = vadd.f32 %v2033, %v2034
    %v2036 = vsub.f32 1.0, %v2003
    %2038 = vrot.lane.b32.xlu0 %v2027, 96
    %v2039 = vpop.permute.xlu0 %2038
    %v2041 = vmul.f32 %v2036, %v2039
    %v2042 = vmul.f32 %v2003, %v1885
    %v2043 = vadd.f32 %v2041, %v2042
    %v2044 = vmul.f32 %v2035, %v1893
    %2046 = vrot.lane.b32.xlu0 %v2044, 96
    %v2047 = vpop.permute.xlu0 %2046
    %2049 = vst.msk [vmem:[%s810] sm:$0xff] %vm111, %v2047
    %v2050 = vmul.f32 %v2043, %v1901
    %2052 = vrot.lane.b32.xlu0 %v2050, 32
    %v2053 = vpop.permute.xlu0 %2052
    %2055 = vst.msk [vmem:[%s803] sm:$0xff] %vm450, %v2053
    %v2056 = vsub.f32 1.0, %v1893
    %v2057 = vmul.f32 %v2056, %v1882
    %v2058 = vadd.f32 %v2044, %v2057
    %v2059 = vsub.f32 1.0, %v1901
    %v2060 = vmul.f32 %v2059, %v1885
    %v2061 = vadd.f32 %v2050, %v2060
    %v2062 = vld [vmem:[%s7 + $0xa] sm:$0x1]
    %v2063 = vperm.slane %v2062, 0
    %v2064 = vlaneseq
    %v2065 = vshrl.u32 %v2064, 7
    %2067 = vset.pattern.permute.xlu0 %v2065
    %2068 = vperm.xlu0 %2067, %v2063
    %v2069 = vpop.permute.xlu0 %2068
    %v2070 = vld [vmem:[%s7 + $0x1] sm:$0x1]
    %v2071 = vperm.slane %v2070, 0
    %v2072 = vlaneseq
    %v2073 = vshrl.u32 %v2072, 7
    %2075 = vset.pattern.permute.xlu0 %v2073
    %2076 = vperm.xlu0 %2075, %v2071
    %v2077 = vpop.permute.xlu0 %2076
    %v2078 = vld [vmem:[%s476] sm:$0xff]
    %v2079 = vld [vmem:[%s474] sm:$0xff]
    %v2080 = vld [vmem:[%s474 + $0x8] sm:$0xff]
    %2082 = vrot.lane.b32.xlu0 %v2058, 96
    %v2083 = vpop.permute.xlu0 %2082
    %2086 = vrot.lane.b32.xlu0 %v2061, 32
    %v2087 = vpop.permute.xlu0 %2086
    %v2089 = vsel %vm111, %v2083, %v2087
    %v2090 = vpack.c.bf16 %v2089, %v2089
    %v2092 = vsel %vm209, %v2090, 0
    %2094 = vmatpush.bf16.msra.mxu0 0
    %2095 = vmatpush.bf16.msra.mxu0 0
    %2096 = vmatpush.bf16.msra.mxu0 0
    %2097 = vmatpush.bf16.msra.mxu0 0
    %2098 = vmatpush.bf16.msra.mxu0 %v293
    %2099 = vmatpush.bf16.msra.mxu0 %v291
    %2100 = vmatpush.bf16.msra.mxu0 %v289
    %2101 = vmatpush.bf16.msra.mxu0 %v287
    %2102 = vmatmul.bf16.gmra.mxu0 %v2092
    %v2103 = vpop.f32.mrf.mxu0
    %v2104 = vadd.f32 0.0, %v2103
    %v2105 = vpop.f32.mrf.mxu0
    %2106 = vdwg.mxu0
    %2107 = vmatpush.bf16.msra.mxu0 0
    %2108 = vmatpush.bf16.msra.mxu0 0
    %2109 = vmatpush.bf16.msra.mxu0 0
    %2110 = vmatpush.bf16.msra.mxu0 0
    %2111 = vmatpush.bf16.msra.mxu0 %v294
    %2112 = vmatpush.bf16.msra.mxu0 %v292
    %2113 = vmatpush.bf16.msra.mxu0 %v290
    %2114 = vmatpush.bf16.msra.mxu0 %v288
    %2115 = vmatmul.bf16.gmra.mxu0 %v2092
    %v2116 = vpop.f32.mrf.mxu0
    %v2117 = vadd.f32 0.0, %v2116
    %v2118 = vpop.f32.mrf.mxu0
    %2119 = vdwg.mxu0
    %v2120 = vadd.f32 %v2078, %v2104
    %v2121 = vxor.u32 %v2120, 2147483648
    %v2122 = vmul.f32 %v2121, 1.442695
    %v2123 = vpow.pop %v2122
    %v2124 = vadd.f32 %v2123, 1.0
    %v2125 = vrcp.pop %v2124
    %v2126 = vmul.f32 %v2124, %v2125
    %v2127 = vsub.f32 1.0, %v2126
    %v2128 = vmul.f32 %v2125, %v2127
    %v2129 = vadd.f32 %v2125, %v2128
    %vm2130 = vweird.f32 %v2124
    %vm2131 = vweird.f32 %v2125
    %vm2132 = vmor %vm2130, %vm2131
    %v2133 = vsel %vm2132, %v2125, %v2129
    %v2134 = vand.u32 2147483647, %v2124
    %vm2135 = vcmp.eq.f32.partialorder %v2134, 8.507059e+37
    %v2136 = vand.u32 %v2124, 2147483648
    %v2137 = vor.u32 1.1754944e-38, %v2136
    %v2138 = vsel %vm2135, %v2137, %v2133
    %v2139 = vmul.f32 1.0, %v2138
    %v2140 = vadd.f32 %v2079, %v2104
    %v2141 = vadd.f32 %v2080, %v2117
    %v2142 = vxor.u32 %v2140, 2147483648
    %v2143 = vxor.u32 %v2141, 2147483648
    %v2144 = vmul.f32 %v2142, 1.442695
    %v2145 = vpow.pop %v2144
    %v2146 = vmul.f32 %v2143, 1.442695
    %v2147 = vpow.pop %v2146
    %v2148 = vadd.f32 %v2145, 1.0
    %v2149 = vadd.f32 %v2147, 1.0
    %v2150 = vrcp.pop %v2148
    %v2151 = vmul.f32 %v2148, %v2150
    %v2152 = vsub.f32 1.0, %v2151
    %v2153 = vmul.f32 %v2150, %v2152
    %v2154 = vadd.f32 %v2150, %v2153
    %vm2155 = vweird.f32 %v2148
    %vm2156 = vweird.f32 %v2150
    %vm2157 = vmor %vm2155, %vm2156
    %v2158 = vsel %vm2157, %v2150, %v2154
    %v2159 = vand.u32 2147483647, %v2148
    %vm2160 = vcmp.eq.f32.partialorder %v2159, 8.507059e+37
    %v2161 = vand.u32 %v2148, 2147483648
    %v2162 = vor.u32 1.1754944e-38, %v2161
    %v2163 = vsel %vm2160, %v2162, %v2158
    %v2164 = vmul.f32 1.0, %v2163
    %v2165 = vrcp.pop %v2149
    %v2166 = vmul.f32 %v2149, %v2165
    %v2167 = vsub.f32 1.0, %v2166
    %v2168 = vmul.f32 %v2165, %v2167
    %v2169 = vadd.f32 %v2165, %v2168
    %vm2170 = vweird.f32 %v2149
    %vm2171 = vweird.f32 %v2165
    %vm2172 = vmor %vm2170, %vm2171
    %v2173 = vsel %vm2172, %v2165, %v2169
    %v2174 = vand.u32 2147483647, %v2149
    %vm2175 = vcmp.eq.f32.partialorder %v2174, 8.507059e+37
    %v2176 = vand.u32 %v2149, 2147483648
    %v2177 = vor.u32 1.1754944e-38, %v2176
    %v2178 = vsel %vm2175, %v2177, %v2173
    %v2179 = vmul.f32 1.0, %v2178
    %v2180 = vadd.f32 %v2104, %v395
    %2182 = vrot.lane.b32.xlu0 %v2180, 64
    %v2183 = vpop.permute.xlu0 %2182
    %v2185 = vmul.f32 %v2139, %v2183
    %2187 = vrot.lane.b32.xlu0 %v2185, 64
    %v2188 = vpop.permute.xlu0 %2187
    %v2190 = vadd.f32 %v2078, %v2188
    %v2191 = vtanh.pop %v2190
    %v2192 = vadd.f32 %v2117, %v393
    %2194 = vrot.lane.b32.xlu0 %v2192, 64
    %v2195 = vpop.permute.xlu0 %2194
    %v2197 = vmul.f32 %v2164, %v2195
    %2199 = vrot.lane.b32.xlu0 %v2197, 64
    %v2200 = vpop.permute.xlu0 %2199
    %v2202 = vadd.f32 %v2080, %v2200
    %v2203 = vtanh.pop %v2202
    %v2204 = vsub.f32 1.0, %v2139
    %2206 = vrot.lane.b32.xlu0 %v2191, 96
    %v2207 = vpop.permute.xlu0 %2206
    %v2209 = vmul.f32 %v2204, %v2207
    %v2210 = vmul.f32 %v2139, %v2058
    %v2211 = vadd.f32 %v2209, %v2210
    %v2212 = vsub.f32 1.0, %v2179
    %2214 = vrot.lane.b32.xlu0 %v2203, 96
    %v2215 = vpop.permute.xlu0 %2214
    %v2217 = vmul.f32 %v2212, %v2215
    %v2218 = vmul.f32 %v2179, %v2061
    %v2219 = vadd.f32 %v2217, %v2218
    %v2220 = vmul.f32 %v2211, %v2069
    %2222 = vrot.lane.b32.xlu0 %v2220, 96
    %v2223 = vpop.permute.xlu0 %2222
    %2225 = vst.msk [vmem:[%s630] sm:$0xff] %vm111, %v2223
    %v2226 = vmul.f32 %v2219, %v2077
    %2228 = vrot.lane.b32.xlu0 %v2226, 32
    %v2229 = vpop.permute.xlu0 %2228
    %2231 = vst.msk [vmem:[%s623] sm:$0xff] %vm450, %v2229
    %v2232 = vsub.f32 1.0, %v2069
    %v2233 = vmul.f32 %v2232, %v2058
    %v2234 = vadd.f32 %v2220, %v2233
    %v2235 = vsub.f32 1.0, %v2077
    %v2236 = vmul.f32 %v2235, %v2061
    %v2237 = vadd.f32 %v2226, %v2236
    %v2238 = vld [vmem:[%s7 + $0xb] sm:$0x1]
    %v2239 = vperm.slane %v2238, 0
    %v2240 = vlaneseq
    %v2241 = vshrl.u32 %v2240, 7
    %2243 = vset.pattern.permute.xlu0 %v2241
    %2244 = vperm.xlu0 %2243, %v2239
    %v2245 = vpop.permute.xlu0 %2244
    %v2246 = vld [vmem:[%s7] sm:$0x1]
    %v2247 = vperm.slane %v2246, 0
    %v2248 = vlaneseq
    %v2249 = vshrl.u32 %v2248, 7
    %2251 = vset.pattern.permute.xlu0 %v2249
    %2252 = vperm.xlu0 %2251, %v2247
    %v2253 = vpop.permute.xlu0 %2252
    %v2254 = vld [vmem:[%s259] sm:$0xff]
    %v2255 = vld [vmem:[#allocation2] sm:$0xff]
    %v2256 = vld [vmem:[#allocation2 + $0x8] sm:$0xff]
    %2258 = vrot.lane.b32.xlu0 %v2234, 96
    %v2259 = vpop.permute.xlu0 %2258
    %2262 = vrot.lane.b32.xlu0 %v2237, 32
    %v2263 = vpop.permute.xlu0 %2262
    %v2265 = vsel %vm111, %v2259, %v2263
    %v2266 = vpack.c.bf16 %v2265, %v2265
    %v2268 = vsel %vm209, %v2266, 0
    %2270 = vmatpush.bf16.msra.mxu0 0
    %2271 = vmatpush.bf16.msra.mxu0 0
    %2272 = vmatpush.bf16.msra.mxu0 0
    %2273 = vmatpush.bf16.msra.mxu0 0
    %2274 = vmatpush.bf16.msra.mxu0 %v293
    %2275 = vmatpush.bf16.msra.mxu0 %v291
    %2276 = vmatpush.bf16.msra.mxu0 %v289
    %2277 = vmatpush.bf16.msra.mxu0 %v287
    %2278 = vmatmul.bf16.gmra.mxu0 %v2268
    %v2279 = vpop.f32.mrf.mxu0
    %v2280 = vadd.f32 0.0, %v2279
    %v2281 = vpop.f32.mrf.mxu0
    %2282 = vdwg.mxu0
    %2283 = vmatpush.bf16.msra.mxu0 0
    %2284 = vmatpush.bf16.msra.mxu0 0
    %2285 = vmatpush.bf16.msra.mxu0 0
    %2286 = vmatpush.bf16.msra.mxu0 0
    %2287 = vmatpush.bf16.msra.mxu0 %v294
    %2288 = vmatpush.bf16.msra.mxu0 %v292
    %2289 = vmatpush.bf16.msra.mxu0 %v290
    %2290 = vmatpush.bf16.msra.mxu0 %v288
    %2291 = vmatmul.bf16.gmra.mxu0 %v2268
    %v2292 = vpop.f32.mrf.mxu0
    %v2293 = vadd.f32 0.0, %v2292
    %v2294 = vpop.f32.mrf.mxu0
    %2295 = vdwg.mxu0
    %v2296 = vadd.f32 %v2254, %v2280
    %v2297 = vxor.u32 %v2296, 2147483648
    %v2298 = vmul.f32 %v2297, 1.442695
    %v2299 = vpow.pop %v2298
    %v2300 = vadd.f32 %v2299, 1.0
    %v2301 = vrcp.pop %v2300
    %v2302 = vmul.f32 %v2300, %v2301
    %v2303 = vsub.f32 1.0, %v2302
    %v2304 = vmul.f32 %v2301, %v2303
    %v2305 = vadd.f32 %v2301, %v2304
    %vm2306 = vweird.f32 %v2300
    %vm2307 = vweird.f32 %v2301
    %vm2308 = vmor %vm2306, %vm2307
    %v2309 = vsel %vm2308, %v2301, %v2305
    %v2310 = vand.u32 2147483647, %v2300
    %vm2311 = vcmp.eq.f32.partialorder %v2310, 8.507059e+37
    %v2312 = vand.u32 %v2300, 2147483648
    %v2313 = vor.u32 1.1754944e-38, %v2312
    %v2314 = vsel %vm2311, %v2313, %v2309
    %v2315 = vmul.f32 1.0, %v2314
    %v2316 = vadd.f32 %v2255, %v2280
    %v2317 = vadd.f32 %v2256, %v2293
    %v2318 = vxor.u32 %v2316, 2147483648
    %v2319 = vxor.u32 %v2317, 2147483648
    %v2320 = vmul.f32 %v2318, 1.442695
    %v2321 = vpow.pop %v2320
    %v2322 = vmul.f32 %v2319, 1.442695
    %v2323 = vpow.pop %v2322
    %v2324 = vadd.f32 %v2321, 1.0
    %v2325 = vadd.f32 %v2323, 1.0
    %v2326 = vrcp.pop %v2324
    %v2327 = vmul.f32 %v2324, %v2326
    %v2328 = vsub.f32 1.0, %v2327
    %v2329 = vmul.f32 %v2326, %v2328
    %v2330 = vadd.f32 %v2326, %v2329
    %vm2331 = vweird.f32 %v2324
    %vm2332 = vweird.f32 %v2326
    %vm2333 = vmor %vm2331, %vm2332
    %v2334 = vsel %vm2333, %v2326, %v2330
    %v2335 = vand.u32 2147483647, %v2324
    %vm2336 = vcmp.eq.f32.partialorder %v2335, 8.507059e+37
    %v2337 = vand.u32 %v2324, 2147483648
    %v2338 = vor.u32 1.1754944e-38, %v2337
    %v2339 = vsel %vm2336, %v2338, %v2334
    %v2340 = vmul.f32 1.0, %v2339
    %v2341 = vrcp.pop %v2325
    %v2342 = vmul.f32 %v2325, %v2341
    %v2343 = vsub.f32 1.0, %v2342
    %v2344 = vmul.f32 %v2341, %v2343
    %v2345 = vadd.f32 %v2341, %v2344
    %vm2346 = vweird.f32 %v2325
    %vm2347 = vweird.f32 %v2341
    %vm2348 = vmor %vm2346, %vm2347
    %v2349 = vsel %vm2348, %v2341, %v2345
    %v2350 = vand.u32 2147483647, %v2325
    %vm2351 = vcmp.eq.f32.partialorder %v2350, 8.507059e+37
    %v2352 = vand.u32 %v2325, 2147483648
    %v2353 = vor.u32 1.1754944e-38, %v2352
    %v2354 = vsel %vm2351, %v2353, %v2349
    %v2355 = vmul.f32 1.0, %v2354
    %v2356 = vadd.f32 %v2280, %v395
    %2358 = vrot.lane.b32.xlu0 %v2356, 64
    %v2359 = vpop.permute.xlu0 %2358
    %v2361 = vmul.f32 %v2315, %v2359
    %2363 = vrot.lane.b32.xlu0 %v2361, 64
    %v2364 = vpop.permute.xlu0 %2363
    %v2366 = vadd.f32 %v2254, %v2364
    %v2367 = vtanh.pop %v2366
    %v2368 = vadd.f32 %v2293, %v393
    %2370 = vrot.lane.b32.xlu0 %v2368, 64
    %v2371 = vpop.permute.xlu0 %2370
    %v2373 = vmul.f32 %v2340, %v2371
    %2375 = vrot.lane.b32.xlu0 %v2373, 64
    %v2376 = vpop.permute.xlu0 %2375
    %v2378 = vadd.f32 %v2256, %v2376
    %v2379 = vtanh.pop %v2378
    %v2380 = vsub.f32 1.0, %v2315
    %2382 = vrot.lane.b32.xlu0 %v2367, 96
    %v2383 = vpop.permute.xlu0 %2382
    %v2385 = vmul.f32 %v2380, %v2383
    %v2386 = vmul.f32 %v2315, %v2234
    %v2387 = vadd.f32 %v2385, %v2386
    %v2388 = vsub.f32 1.0, %v2355
    %2390 = vrot.lane.b32.xlu0 %v2379, 96
    %v2391 = vpop.permute.xlu0 %2390
    %v2393 = vmul.f32 %v2388, %v2391
    %v2394 = vmul.f32 %v2355, %v2237
    %v2395 = vadd.f32 %v2393, %v2394
    %v2396 = vmul.f32 %v2387, %v2245
    %2398 = vrot.lane.b32.xlu0 %v2396, 96
    %v2399 = vpop.permute.xlu0 %2398
    %2401 = vst.msk [vmem:[%s449] sm:$0xff] %vm111, %v2399
    %v2402 = vmul.f32 %v2395, %v2253
    %2404 = vrot.lane.b32.xlu0 %v2402, 32
    %v2405 = vpop.permute.xlu0 %2404
    %2407 = vst.msk [vmem:[#allocation3] sm:$0xff] %vm450, %v2405
    // Predicated region
    $region26: #{text_encoder_forward.1} parent=1 // pred_check
      _
    $region27: #{text_encoder_forward.1} parent=1 // pred_check_branch
      %2409 = sbr.rel (0) target = $region29
    $region28: #{text_encoder_forward.1} parent=1 // pred_region
      %2411 = vsyncadd [#allocation4], 0
      %s2412 = sshll.u32 [#allocation3], 4
      %s2413 = int_to_ptr.vmem [resolvable:$true] %s2412
      %s2414 = sshll.u32 %s6, 4
      %s2415 = int_to_ptr.hbm [resolvable:$true] %s2414
      %2420 = dma.vmem_to_hbm [thread:$0]  %s2413, 1536, %s2415, [#allocation4], 128, 128, 8
    $region29: #{text_encoder_forward.1} parent=1 // pred_fallthru
      _
    // Predicated region
    $region30: #{text_encoder_forward.1} parent=1 // pred_check
      _
    $region31: #{text_encoder_forward.1} parent=1 // pred_check_branch
      %2422 = sbr.rel (0) target = $region33
    $region32: #{text_encoder_forward.1} parent=1 // pred_region
      _
    $region33: #{text_encoder_forward.1} parent=1 // pred_fallthru
      _
    // Predicated region
    $region34: #{text_encoder_forward.1} parent=1 // pred_check
      _
    $region35: #{text_encoder_forward.1} parent=1 // pred_check_branch
      %2424 = sbr.rel (0) target = $region37
    $region36: #{text_encoder_forward.1} parent=1 // pred_region
      %2426 = dma.done [#allocation4], 1536
    $region37: #{text_encoder_forward.1} parent=1 // pred_fallthru
      _
    // Predicated region
    $region38: #{text_encoder_forward.1} parent=1 // pred_check
      _
    $region39: #{text_encoder_forward.1} parent=1 // pred_check_branch
      %2428 = sbr.rel (0) target = $region41
    $region40: #{text_encoder_forward.1} parent=1 // pred_region
      _
    $region41: #{text_encoder_forward.1} parent=1 // pred_fallthru
      _
    %2429 = vsyncpa [#allocation4], 1

</llo_original>
